<compile_context>
chip_gen: v6e
topology: v6e:2x2x1
jax: 0.10.0
libtpu: 0.0.40
codegen_flags: <defaults>
</compile_context>

<pallas_src>
import jax
import jax.numpy as jnp
from jax import lax
from jax.experimental import pallas as pl
from jax.experimental.pallas import tpu as pltpu


# ----------------------------------------------------------------------------
# Pallas kernels
# ----------------------------------------------------------------------------
def _stem_kernel(x_ref, w_ref, b_ref, o_ref):
    """One M-tile of relu(im2col(x) @ (w*bn_scale) + bn_bias); bf16 MXU, f32 acc."""
    acc = jnp.dot(x_ref[...], w_ref[...], preferred_element_type=jnp.float32)
    o_ref[...] = jnp.maximum(acc + b_ref[...], 0.0).astype(o_ref.dtype)


def _layer1_kernel(x_ref, w_ref, b_ref, o_ref, xp_ref):
    """Both BasicBlocks of resnet18.layer1, fully fused, one image per step.

    x_ref : (1, H, W, 64)  f32   pooled stem output (one image)
    w_ref : (4, 9, 64, 64) bf16  [conv, tap(ki*3+kj), Cin, Cout], BN scale folded
    b_ref : (4, 1, 64)     f32   folded BN biases
    o_ref : (1, H, W, 64)  f32
    xp_ref: (H+2, W+2, 64) f32   zero-padded scratch used by every 3x3 conv
    """
    _, H, W, C = x_ref.shape

    # Zero once: only the interior is ever rewritten, so the pad=1 border
    # stays 0 for all four convs.
    xp_ref[...] = jnp.zeros_like(xp_ref)
    feat = x_ref[0].reshape(H * W, C)                       # (HW, C) f32

    def conv3x3(conv_idx):
        # In-kernel (VMEM-only) im2col: 9 tap-matmuls over shifted slices.
        acc = jnp.zeros((H * W, C), jnp.float32)
        for ki in range(3):
            for kj in range(3):
                patch = xp_ref[ki:ki + H, kj:kj + W, :]
                patch = patch.reshape(H * W, C).astype(jnp.bfloat16)
                acc = acc + jnp.dot(patch, w_ref[conv_idx, ki * 3 + kj],
                                    preferred_element_type=jnp.float32)
        return acc + b_ref[conv_idx]

    for blk in range(2):
        identity = feat
        xp_ref[1:1 + H, 1:1 + W, :] = feat.reshape(H, W, C)
        y = jnp.maximum(conv3x3(2 * blk), 0.0)
        xp_ref[1:1 + H, 1:1 + W, :] = y.reshape(H, W, C)
        feat = jnp.maximum(conv3x3(2 * blk + 1) + identity, 0.0)

    o_ref[0] = feat.reshape(H, W, C).astype(o_ref.dtype)


# ----------------------------------------------------------------------------
# Wrappers
# ----------------------------------------------------------------------------
_LANES = 128


def _fold_bn(gamma, beta, mean, var, eps=1e-5):
    scale = gamma / jnp.sqrt(var + eps)
    return scale, beta - mean * scale


def _pick_tile(m, cap=256):
    """Largest tile <= cap dividing m; prefer >= 2 grid steps (v7x has 2 TCs)."""
    tm = m
    for cand in (256, 128, 64, 32, 16, 8):
        if cand <= cap and m % cand == 0:
            tm = cand
            break
    if m == tm and tm >= 16 and m % (tm // 2) == 0:
        tm //= 2
    return tm


def _im2col(x_nhwc, kh, kw, stride, pad):
    """Patch extraction for conv1 only (3-channel input). Returns [M, kh*kw*C]."""
    n, h, w, c = x_nhwc.shape
    ho = (h + 2 * pad - kh) // stride + 1
    wo = (w + 2 * pad - kw) // stride + 1
    xp = jnp.pad(x_nhwc, ((0, 0), (pad, pad), (pad, pad), (0, 0)))
    cols = []
    for ki in range(kh):
        for kj in range(kw):
            cols.append(lax.slice(
                xp, (0, ki, kj, 0),
                (n, ki + (ho - 1) * stride + 1, kj + (wo - 1) * stride + 1, c),
                (1, stride, stride, 1)))
    patches = jnp.stack(cols, axis=3)                       # [N,Ho,Wo,kh*kw,C]
    return patches.reshape(n * ho * wo, kh * kw * c), ho, wo


def stem_conv_bn_relu(x_nhwc, w_oihw, scale, bias):
    """conv1(7x7,s2,p3) + folded BN + ReLU via one fused Pallas matmul."""
    n = x_nhwc.shape[0]
    cout, cin, kh, kw = w_oihw.shape
    xcols, ho, wo = _im2col(x_nhwc, kh, kw, 2, 3)
    m, k = xcols.shape
    kp = ((k + _LANES - 1) // _LANES) * _LANES              # 147 -> 256

    wmat = jnp.transpose(w_oihw, (2, 3, 1, 0)).reshape(k, cout)
    wmat = wmat * scale[None, :]                            # fold BN (f32)
    wmat = jnp.pad(wmat, ((0, kp - k), (0, 0))).astype(jnp.bfloat16)
    xcols = jnp.pad(xcols, ((0, 0), (0, kp - k))).astype(jnp.bfloat16)
    bias = bias.reshape(1, cout).astype(jnp.float32)

    tm = _pick_tile(m)
    out = pl.pallas_call(
        _stem_kernel,
        out_shape=jax.ShapeDtypeStruct((m, cout), jnp.float32),
        grid=(m // tm,),
        in_specs=[
            pl.BlockSpec((tm, kp), lambda i: (i, 0)),
            pl.BlockSpec((kp, cout), lambda i: (0, 0)),
            pl.BlockSpec((1, cout), lambda i: (0, 0)),
        ],
        out_specs=pl.BlockSpec((tm, cout), lambda i: (i, 0)),
        compiler_params=pltpu.CompilerParams(
            dimension_semantics=("parallel",)),
    )(xcols, wmat, bias)
    return out.reshape(n, ho, wo, cout)


def maxpool_3x3_s2_p1(x_nhwc):
    """3x3/s2/p1 max pool as a 9-way max tree; XLA fuses it (no HBM patches)."""
    n, h, w, c = x_nhwc.shape
    ho = (h + 2 - 3) // 2 + 1
    wo = (w + 2 - 3) // 2 + 1
    xp = jnp.pad(x_nhwc, ((0, 0), (1, 1), (1, 1), (0, 0)),
                 constant_values=-jnp.inf)
    out = None
    for ki in range(3):
        for kj in range(3):
            tap = lax.slice(
                xp, (0, ki, kj, 0),
                (n, ki + (ho - 1) * 2 + 1, kj + (wo - 1) * 2 + 1, c),
                (1, 2, 2, 1))
            out = tap if out is None else jnp.maximum(out, tap)
    return out


def layer1_fused(x_nhwc, block_params):
    """Both BasicBlocks in ONE pallas_call; all intermediates stay in VMEM."""
    n, h, w, c = x_nhwc.shape                               # (N, 8, 8, 64)
    wtaps, biases = [], []
    for conv_w, bn in block_params:                         # 4 convs total
        scale, bias = _fold_bn(*bn)
        wt = jnp.transpose(conv_w, (2, 3, 1, 0)).reshape(9, c, c)
        wtaps.append(wt * scale[None, None, :])             # fold BN (f32)
        biases.append(bias.reshape(1, c))
    w_all = jnp.stack(wtaps).astype(jnp.bfloat16)           # (4, 9, 64, 64)
    b_all = jnp.stack(biases).astype(jnp.float32)           # (4, 1, 64)

    return pl.pallas_call(
        _layer1_kernel,
        out_shape=jax.ShapeDtypeStruct((n, h, w, c), jnp.float32),
        grid=(n,),
        in_specs=[
            pl.BlockSpec((1, h, w, c), lambda i: (i, 0, 0, 0)),
            pl.BlockSpec((4, 9, c, c), lambda i: (0, 0, 0, 0)),
            pl.BlockSpec((4, 1, c), lambda i: (0, 0, 0)),
        ],
        out_specs=pl.BlockSpec((1, h, w, c), lambda i: (i, 0, 0, 0)),
        scratch_shapes=[pltpu.VMEM((h + 2, w + 2, c), jnp.float32)],
        compiler_params=pltpu.CompilerParams(
            dimension_semantics=("parallel",)),
    )(x_nhwc, w_all, b_all)


# ----------------------------------------------------------------------------
# Parameters (deterministic synthetic init, shapes match resnet18 children[:5])
# ----------------------------------------------------------------------------
def init_params(key):
    ks = iter(jax.random.split(key, 30))

    def conv_w(shape, fan_in):
        return jax.random.normal(next(ks), shape, jnp.float32) / jnp.sqrt(
            jnp.float32(fan_in))

    def bn_p(c):
        gamma = 1.0 + 0.1 * jax.random.normal(next(ks), (c,), jnp.float32)
        beta = 0.1 * jax.random.normal(next(ks), (c,), jnp.float32)
        mean = 0.1 * jax.random.normal(next(ks), (c,), jnp.float32)
        var = jax.random.uniform(next(ks), (c,), jnp.float32,
                                 minval=0.5, maxval=1.5)
        return (gamma, beta, mean, var)

    params = {"conv1_w": conv_w((64, 3, 7, 7), 3 * 7 * 7), "bn1": bn_p(64)}
    for name in ("block1", "block2"):
        params[name] = {
            "conv1_w": conv_w((64, 64, 3, 3), 64 * 9), "bn1": bn_p(64),
            "conv2_w": conv_w((64, 64, 3, 3), 64 * 9), "bn2": bn_p(64),
        }
    return params


# ----------------------------------------------------------------------------
# Forward pass (Pallas) — accepts/returns NCHW like the PyTorch module
# ----------------------------------------------------------------------------
@jax.jit
def client_model_forward(x_nchw, params):
    x = jnp.transpose(x_nchw, (0, 2, 3, 1))                 # NCHW -> NHWC
    s, b = _fold_bn(*params["bn1"])
    x = stem_conv_bn_relu(x, params["conv1_w"], s, b)
    x = maxpool_3x3_s2_p1(x)
    block_params = []
    for name in ("block1", "block2"):
        p = params[name]
        block_params.append((p["conv1_w"], p["bn1"]))
        block_params.append((p["conv2_w"], p["bn2"]))
    x = layer1_fused(x, block_params)
    return jnp.transpose(x, (0, 3, 1, 2))                   # NHWC -> NCHW


# ----------------------------------------------------------------------------
# Pure-JAX reference.  mxu_dtype=bfloat16 mirrors the kernels' quantization of
# the matmul operands (BN scale folded into weights BEFORE the cast, f32 acc);
# mxu_dtype=float32 is the strict f32 module semantics.
# ----------------------------------------------------------------------------
def _ref_conv(x_nhwc, w_hwio, stride, pad, mxu_dtype):
    return lax.conv_general_dilated(
        x_nhwc.astype(mxu_dtype), w_hwio.astype(mxu_dtype),
        (stride, stride), [(pad, pad), (pad, pad)],
        dimension_numbers=("NHWC", "HWIO", "NHWC"),
        preferred_element_type=jnp.float32)


def _ref_forward(x_nchw, params, mxu_dtype):
    x = jnp.transpose(x_nchw, (0, 2, 3, 1))
    s, b = _fold_bn(*params["bn1"])
    w = jnp.transpose(params["conv1_w"], (2, 3, 1, 0)) * s
    x = jnp.maximum(_ref_conv(x, w, 2, 3, mxu_dtype) + b, 0.0)
    x = lax.reduce_window(x, -jnp.inf, lax.max, (1, 3, 3, 1), (1, 2, 2, 1),
                          [(0, 0), (1, 1), (1, 1), (0, 0)])
    for name in ("block1", "block2"):
        p = params[name]
        s1, b1 = _fold_bn(*p["bn1"])
        s2, b2 = _fold_bn(*p["bn2"])
        w1 = jnp.transpose(p["conv1_w"], (2, 3, 1, 0)) * s1
        w2 = jnp.transpose(p["conv2_w"], (2, 3, 1, 0)) * s2
        identity = x
        y = jnp.maximum(_ref_conv(x, w1, 1, 1, mxu_dtype) + b1, 0.0)
        x = jnp.maximum(_ref_conv(y, w2, 1, 1, mxu_dtype) + b2 + identity, 0.0)
    return jnp.transpose(x, (0, 3, 1, 2))


# ----------------------------------------------------------------------------
if __name__ == "__main__":
    key = jax.random.PRNGKey(0)
    pkey, xkey = jax.random.split(key)
    params = init_params(pkey)

    # input: NCHW [batch=2, channels=3, H=32, W=32] (RGB, as the resnet stem expects)
    x = jax.random.normal(xkey, (2, 3, 32, 32), jnp.float32)

    out = jax.block_until_ready(client_model_forward(x, params))
    assert out.shape == (2, 64, 8, 8), out.shape

    # Tight check vs a reference that quantizes conv operands exactly like the
    # kernels do (bf16 inputs, f32 accumulation).
    ref_q = jax.block_until_ready(_ref_forward(x, params, jnp.bfloat16))
    err_q = float(jnp.max(jnp.abs(out - ref_q)))
    assert bool(jnp.allclose(out, ref_q, atol=5e-3, rtol=5e-3)), err_q

    # Sanity bound vs the strict f32 module (difference is bf16 quantization
    # noise; structural bugs would be O(1)).
    ref_f = jax.block_until_ready(_ref_forward(x, params, jnp.float32))
    err_f = float(jnp.max(jnp.abs(out - ref_f)))
    assert err_f < 0.5, err_f

    print("KERNEL_OK")
</pallas_src>

<mosaic_0001>
module attributes {stable_mosaic.version = 11 : i64} {
  func.func @_stem_kernel(%arg0: i32, %arg1: memref<256x256xbf16, #tpu.memory_space<vmem>>, %arg2: memref<256x64xbf16, #tpu.memory_space<vmem>>, %arg3: memref<1x64xf32, #tpu.memory_space<vmem>>, %arg4: memref<256x64xf32, #tpu.memory_space<vmem>>) attributes {dimension_semantics = [#tpu.dimension_semantics<parallel>], iteration_bounds = array<i64: 2>, scalar_prefetch = 0 : i64, scratch_operands = 0 : i64, tpu.core_type = #tpu.core_type<tc>, window_params = [{transform_indices = @transform_0, window_bounds = array<i64: 256, 256>}, {pipeline_mode = #tpu.pipeline_mode<synchronous>, transform_indices = @transform_1, window_bounds = array<i64: 256, 64>}, {pipeline_mode = #tpu.pipeline_mode<synchronous>, transform_indices = @transform_2, window_bounds = array<i64: 1, 64>}, {transform_indices = @transform_3, window_bounds = array<i64: 256, 64>}]} {
    %c0 = arith.constant 0 : index
    %c0_0 = arith.constant 0 : index
    %0 = vector.load %arg1[%c0, %c0_0] : memref<256x256xbf16, #tpu.memory_space<vmem>>, vector<256x256xbf16>
    %c0_1 = arith.constant 0 : index
    %c0_2 = arith.constant 0 : index
    %1 = vector.load %arg2[%c0_1, %c0_2] : memref<256x64xbf16, #tpu.memory_space<vmem>>, vector<256x64xbf16>
    %cst = arith.constant dense<0.000000e+00> : vector<256x64xf32>
    %2 = tpu.matmul %0, %1, %cst {dimension_numbers = #tpu.dot_dimension_numbers<[1], [0], [0], [1], [0, 0, 1, 1], [], []>} : vector<256x256xbf16>, vector<256x64xbf16>, vector<256x64xf32> -> vector<256x64xf32>
    %c0_3 = arith.constant 0 : index
    %c0_4 = arith.constant 0 : index
    %3 = vector.load %arg3[%c0_3, %c0_4] : memref<1x64xf32, #tpu.memory_space<vmem>>, vector<1x64xf32>
    %4 = vector.broadcast %3 : vector<1x64xf32> to vector<256x64xf32>
    %5 = arith.addf %2, %4 : vector<256x64xf32>
    %cst_5 = arith.constant 0.000000e+00 : f32
    %6 = vector.broadcast %cst_5 : f32 to vector<256x64xf32>
    %7 = arith.maximumf %5, %6 : vector<256x64xf32>
    %c0_6 = arith.constant 0 : index
    %c0_7 = arith.constant 0 : index
    %8 = vector.load %arg4[%c0_6, %c0_7] : memref<256x64xf32, #tpu.memory_space<vmem>>, vector<256x64xf32>
    tpu.vector_store %arg4[%c0_6, %c0_7], %7 {strides = array<i32>} : memref<256x64xf32, #tpu.memory_space<vmem>>, vector<256x64xf32>,
    return
  }
  func.func @transform_0(%arg0: i32) -> (i32, i32) {
    %c0_i32 = arith.constant 0 : i32
    %c0_i32_0 = arith.constant 0 : i32
    return %arg0, %c0_i32 : i32, i32
  }
  func.func @transform_1(%arg0: i32) -> (i32, i32) {
    %c0_i32 = arith.constant 0 : i32
    %c0_i32_0 = arith.constant 0 : i32
    %c0_i32_1 = arith.constant 0 : i32
    return %c0_i32, %c0_i32_0 : i32, i32
  }
  func.func @transform_2(%arg0: i32) -> (i32, i32) {
    %c0_i32 = arith.constant 0 : i32
    %c0_i32_0 = arith.constant 0 : i32
    %c0_i32_1 = arith.constant 0 : i32
    return %c0_i32, %c0_i32_0 : i32, i32
  }
  func.func @transform_3(%arg0: i32) -> (i32, i32) {
    %c0_i32 = arith.constant 0 : i32
    %c0_i32_0 = arith.constant 0 : i32
    return %arg0, %c0_i32 : i32, i32
  }
}

module attributes {stable_mosaic.version = 11 : i64} {
  func.func @_layer1_kernel(%arg0: i32, %arg1: memref<1x8x8x64xf32, #tpu.memory_space<vmem>>, %arg2: memref<4x9x64x64xbf16, #tpu.memory_space<vmem>>, %arg3: memref<4x1x64xf32, #tpu.memory_space<vmem>>, %arg4: memref<1x8x8x64xf32, #tpu.memory_space<vmem>>, %arg5: memref<10x10x64xf32, #tpu.memory_space<vmem>>) attributes {dimension_semantics = [#tpu.dimension_semantics<parallel>], iteration_bounds = array<i64: 2>, scalar_prefetch = 0 : i64, scratch_operands = 1 : i64, tpu.core_type = #tpu.core_type<tc>, window_params = [{transform_indices = @transform_0, window_bounds = array<i64: 1, 8, 8, 64>}, {pipeline_mode = #tpu.pipeline_mode<synchronous>, transform_indices = @transform_1, window_bounds = array<i64: 4, 9, 64, 64>}, {pipeline_mode = #tpu.pipeline_mode<synchronous>, transform_indices = @transform_2, window_bounds = array<i64: 4, 1, 64>}, {transform_indices = @transform_3, window_bounds = array<i64: 1, 8, 8, 64>}]} {
    %cst = arith.constant 0.000000e+00 : f32
    %0 = vector.broadcast %cst : f32 to vector<10x10x64xf32>
    %c0 = arith.constant 0 : index
    %c0_0 = arith.constant 0 : index
    %c0_1 = arith.constant 0 : index
    %1 = vector.load %arg5[%c0, %c0_0, %c0_1] : memref<10x10x64xf32, #tpu.memory_space<vmem>>, vector<10x10x64xf32>
    tpu.vector_store %arg5[%c0, %c0_0, %c0_1], %0 {strides = array<i32>} : memref<10x10x64xf32, #tpu.memory_space<vmem>>, vector<10x10x64xf32>,
    %c0_2 = arith.constant 0 : index
    %c0_3 = arith.constant 0 : index
    %c0_4 = arith.constant 0 : index
    %c0_5 = arith.constant 0 : index
    %2 = vector.load %arg1[%c0_2, %c0_3, %c0_4, %c0_5] : memref<1x8x8x64xf32, #tpu.memory_space<vmem>>, vector<1x8x8x64xf32>
    %3 = vector.shape_cast %2 : vector<1x8x8x64xf32> to vector<8x8x64xf32>
    %4 = vector.shape_cast %3 : vector<8x8x64xf32> to vector<64x64xf32>
    %5 = vector.shape_cast %4 : vector<64x64xf32> to vector<8x8x64xf32>
    %c1 = arith.constant 1 : index
    %c1_6 = arith.constant 1 : index
    %c0_7 = arith.constant 0 : index
    %6 = vector.load %arg5[%c1, %c1_6, %c0_7] : memref<10x10x64xf32, #tpu.memory_space<vmem>>, vector<8x8x64xf32>
    tpu.vector_store %arg5[%c1, %c1_6, %c0_7], %5 {strides = array<i32>} : memref<10x10x64xf32, #tpu.memory_space<vmem>>, vector<8x8x64xf32>,
    %cst_8 = arith.constant 0.000000e+00 : f32
    %7 = vector.broadcast %cst_8 : f32 to vector<64x64xf32>
    %c0_9 = arith.constant 0 : index
    %c0_10 = arith.constant 0 : index
    %c0_11 = arith.constant 0 : index
    %8 = vector.load %arg5[%c0_9, %c0_10, %c0_11] : memref<10x10x64xf32, #tpu.memory_space<vmem>>, vector<8x8x64xf32>
    %9 = vector.shape_cast %8 : vector<8x8x64xf32> to vector<64x64xf32>
    %10 = arith.truncf %9 : vector<64x64xf32> to vector<64x64xbf16>
    %c0_12 = arith.constant 0 : index
    %c0_13 = arith.constant 0 : index
    %c0_14 = arith.constant 0 : index
    %c0_15 = arith.constant 0 : index
    %11 = vector.load %arg2[%c0_12, %c0_13, %c0_14, %c0_15] : memref<4x9x64x64xbf16, #tpu.memory_space<vmem>>, vector<1x1x64x64xbf16>
    %12 = vector.shape_cast %11 : vector<1x1x64x64xbf16> to vector<64x64xbf16>
    %cst_16 = arith.constant dense<0.000000e+00> : vector<64x64xf32>
    %13 = tpu.matmul %10, %12, %cst_16 {dimension_numbers = #tpu.dot_dimension_numbers<[1], [0], [0], [1], [0, 0, 1, 1], [], []>} : vector<64x64xbf16>, vector<64x64xbf16>, vector<64x64xf32> -> vector<64x64xf32>
    %14 = arith.addf %7, %13 : vector<64x64xf32>
    %c0_17 = arith.constant 0 : index
    %c1_18 = arith.constant 1 : index
    %c0_19 = arith.constant 0 : index
    %15 = vector.load %arg5[%c0_17, %c1_18, %c0_19] : memref<10x10x64xf32, #tpu.memory_space<vmem>>, vector<8x8x64xf32>
    %16 = vector.shape_cast %15 : vector<8x8x64xf32> to vector<64x64xf32>
    %17 = arith.truncf %16 : vector<64x64xf32> to vector<64x64xbf16>
    %c0_20 = arith.constant 0 : index
    %c1_21 = arith.constant 1 : index
    %c0_22 = arith.constant 0 : index
    %c0_23 = arith.constant 0 : index
    %18 = vector.load %arg2[%c0_20, %c1_21, %c0_22, %c0_23] : memref<4x9x64x64xbf16, #tpu.memory_space<vmem>>, vector<1x1x64x64xbf16>
    %19 = vector.shape_cast %18 : vector<1x1x64x64xbf16> to vector<64x64xbf16>
    %cst_24 = arith.constant dense<0.000000e+00> : vector<64x64xf32>
    %20 = tpu.matmul %17, %19, %cst_24 {dimension_numbers = #tpu.dot_dimension_numbers<[1], [0], [0], [1], [0, 0, 1, 1], [], []>} : vector<64x64xbf16>, vector<64x64xbf16>, vector<64x64xf32> -> vector<64x64xf32>
    %21 = arith.addf %14, %20 : vector<64x64xf32>
    %c0_25 = arith.constant 0 : index
    %c2 = arith.constant 2 : index
    %c0_26 = arith.constant 0 : index
    %22 = vector.load %arg5[%c0_25, %c2, %c0_26] : memref<10x10x64xf32, #tpu.memory_space<vmem>>, vector<8x8x64xf32>
    %23 = vector.shape_cast %22 : vector<8x8x64xf32> to vector<64x64xf32>
    %24 = arith.truncf %23 : vector<64x64xf32> to vector<64x64xbf16>
    %c0_27 = arith.constant 0 : index
    %c2_28 = arith.constant 2 : index
    %c0_29 = arith.constant 0 : index
    %c0_30 = arith.constant 0 : index
    %25 = vector.load %arg2[%c0_27, %c2_28, %c0_29, %c0_30] : memref<4x9x64x64xbf16, #tpu.memory_space<vmem>>, vector<1x1x64x64xbf16>
    %26 = vector.shape_cast %25 : vector<1x1x64x64xbf16> to vector<64x64xbf16>
    %cst_31 = arith.constant dense<0.000000e+00> : vector<64x64xf32>
    %27 = tpu.matmul %24, %26, %cst_31 {dimension_numbers = #tpu.dot_dimension_numbers<[1], [0], [0], [1], [0, 0, 1, 1], [], []>} : vector<64x64xbf16>, vector<64x64xbf16>, vector<64x64xf32> -> vector<64x64xf32>
    %28 = arith.addf %21, %27 : vector<64x64xf32>
    %c1_32 = arith.constant 1 : index
    %c0_33 = arith.constant 0 : index
    %c0_34 = arith.constant 0 : index
    %29 = vector.load %arg5[%c1_32, %c0_33, %c0_34] : memref<10x10x64xf32, #tpu.memory_space<vmem>>, vector<8x8x64xf32>
    %30 = vector.shape_cast %29 : vector<8x8x64xf32> to vector<64x64xf32>
    %31 = arith.truncf %30 : vector<64x64xf32> to vector<64x64xbf16>
    %c0_35 = arith.constant 0 : index
    %c3 = arith.constant 3 : index
    %c0_36 = arith.constant 0 : index
    %c0_37 = arith.constant 0 : index
    %32 = vector.load %arg2[%c0_35, %c3, %c0_36, %c0_37] : memref<4x9x64x64xbf16, #tpu.memory_space<vmem>>, vector<1x1x64x64xbf16>
    %33 = vector.shape_cast %32 : vector<1x1x64x64xbf16> to vector<64x64xbf16>
    %cst_38 = arith.constant dense<0.000000e+00> : vector<64x64xf32>
    %34 = tpu.matmul %31, %33, %cst_38 {dimension_numbers = #tpu.dot_dimension_numbers<[1], [0], [0], [1], [0, 0, 1, 1], [], []>} : vector<64x64xbf16>, vector<64x64xbf16>, vector<64x64xf32> -> vector<64x64xf32>
    %35 = arith.addf %28, %34 : vector<64x64xf32>
    %c1_39 = arith.constant 1 : index
    %c1_40 = arith.constant 1 : index
    %c0_41 = arith.constant 0 : index
    %36 = vector.load %arg5[%c1_39, %c1_40, %c0_41] : memref<10x10x64xf32, #tpu.memory_space<vmem>>, vector<8x8x64xf32>
    %37 = vector.shape_cast %36 : vector<8x8x64xf32> to vector<64x64xf32>
    %38 = arith.truncf %37 : vector<64x64xf32> to vector<64x64xbf16>
    %c0_42 = arith.constant 0 : index
    %c4 = arith.constant 4 : index
    %c0_43 = arith.constant 0 : index
    %c0_44 = arith.constant 0 : index
    %39 = vector.load %arg2[%c0_42, %c4, %c0_43, %c0_44] : memref<4x9x64x64xbf16, #tpu.memory_space<vmem>>, vector<1x1x64x64xbf16>
    %40 = vector.shape_cast %39 : vector<1x1x64x64xbf16> to vector<64x64xbf16>
    %cst_45 = arith.constant dense<0.000000e+00> : vector<64x64xf32>
    %41 = tpu.matmul %38, %40, %cst_45 {dimension_numbers = #tpu.dot_dimension_numbers<[1], [0], [0], [1], [0, 0, 1, 1], [], []>} : vector<64x64xbf16>, vector<64x64xbf16>, vector<64x64xf32> -> vector<64x64xf32>
    %42 = arith.addf %35, %41 : vector<64x64xf32>
    %c1_46 = arith.constant 1 : index
    %c2_47 = arith.constant 2 : index
    %c0_48 = arith.constant 0 : index
    %43 = vector.load %arg5[%c1_46, %c2_47, %c0_48] : memref<10x10x64xf32, #tpu.memory_space<vmem>>, vector<8x8x64xf32>
    %44 = vector.shape_cast %43 : vector<8x8x64xf32> to vector<64x64xf32>
    %45 = arith.truncf %44 : vector<64x64xf32> to vector<64x64xbf16>
    %c0_49 = arith.constant 0 : index
    %c5 = arith.constant 5 : index
    %c0_50 = arith.constant 0 : index
    %c0_51 = arith.constant 0 : index
    %46 = vector.load %arg2[%c0_49, %c5, %c0_50, %c0_51] : memref<4x9x64x64xbf16, #tpu.memory_space<vmem>>, vector<1x1x64x64xbf16>
    %47 = vector.shape_cast %46 : vector<1x1x64x64xbf16> to vector<64x64xbf16>
    %cst_52 = arith.constant dense<0.000000e+00> : vector<64x64xf32>
    %48 = tpu.matmul %45, %47, %cst_52 {dimension_numbers = #tpu.dot_dimension_numbers<[1], [0], [0], [1], [0, 0, 1, 1], [], []>} : vector<64x64xbf16>, vector<64x64xbf16>, vector<64x64xf32> -> vector<64x64xf32>
    %49 = arith.addf %42, %48 : vector<64x64xf32>
    %c2_53 = arith.constant 2 : index
    %c0_54 = arith.constant 0 : index
    %c0_55 = arith.constant 0 : index
    %50 = vector.load %arg5[%c2_53, %c0_54, %c0_55] : memref<10x10x64xf32, #tpu.memory_space<vmem>>, vector<8x8x64xf32>
    %51 = vector.shape_cast %50 : vector<8x8x64xf32> to vector<64x64xf32>
    %52 = arith.truncf %51 : vector<64x64xf32> to vector<64x64xbf16>
    %c0_56 = arith.constant 0 : index
    %c6 = arith.constant 6 : index
    %c0_57 = arith.constant 0 : index
    %c0_58 = arith.constant 0 : index
    %53 = vector.load %arg2[%c0_56, %c6, %c0_57, %c0_58] : memref<4x9x64x64xbf16, #tpu.memory_space<vmem>>, vector<1x1x64x64xbf16>
    %54 = vector.shape_cast %53 : vector<1x1x64x64xbf16> to vector<64x64xbf16>
    %cst_59 = arith.constant dense<0.000000e+00> : vector<64x64xf32>
    %55 = tpu.matmul %52, %54, %cst_59 {dimension_numbers = #tpu.dot_dimension_numbers<[1], [0], [0], [1], [0, 0, 1, 1], [], []>} : vector<64x64xbf16>, vector<64x64xbf16>, vector<64x64xf32> -> vector<64x64xf32>
    %56 = arith.addf %49, %55 : vector<64x64xf32>
    %c2_60 = arith.constant 2 : index
    %c1_61 = arith.constant 1 : index
    %c0_62 = arith.constant 0 : index
    %57 = vector.load %arg5[%c2_60, %c1_61, %c0_62] : memref<10x10x64xf32, #tpu.memory_space<vmem>>, vector<8x8x64xf32>
    %58 = vector.shape_cast %57 : vector<8x8x64xf32> to vector<64x64xf32>
    %59 = arith.truncf %58 : vector<64x64xf32> to vector<64x64xbf16>
    %c0_63 = arith.constant 0 : index
    %c7 = arith.constant 7 : index
    %c0_64 = arith.constant 0 : index
    %c0_65 = arith.constant 0 : index
    %60 = vector.load %arg2[%c0_63, %c7, %c0_64, %c0_65] : memref<4x9x64x64xbf16, #tpu.memory_space<vmem>>, vector<1x1x64x64xbf16>
    %61 = vector.shape_cast %60 : vector<1x1x64x64xbf16> to vector<64x64xbf16>
    %cst_66 = arith.constant dense<0.000000e+00> : vector<64x64xf32>
    %62 = tpu.matmul %59, %61, %cst_66 {dimension_numbers = #tpu.dot_dimension_numbers<[1], [0], [0], [1], [0, 0, 1, 1], [], []>} : vector<64x64xbf16>, vector<64x64xbf16>, vector<64x64xf32> -> vector<64x64xf32>
    %63 = arith.addf %56, %62 : vector<64x64xf32>
    %c2_67 = arith.constant 2 : index
    %c2_68 = arith.constant 2 : index
    %c0_69 = arith.constant 0 : index
    %64 = vector.load %arg5[%c2_67, %c2_68, %c0_69] : memref<10x10x64xf32, #tpu.memory_space<vmem>>, vector<8x8x64xf32>
    %65 = vector.shape_cast %64 : vector<8x8x64xf32> to vector<64x64xf32>
    %66 = arith.truncf %65 : vector<64x64xf32> to vector<64x64xbf16>
    %c0_70 = arith.constant 0 : index
    %c8 = arith.constant 8 : index
    %c0_71 = arith.constant 0 : index
    %c0_72 = arith.constant 0 : index
    %67 = vector.load %arg2[%c0_70, %c8, %c0_71, %c0_72] : memref<4x9x64x64xbf16, #tpu.memory_space<vmem>>, vector<1x1x64x64xbf16>
    %68 = vector.shape_cast %67 : vector<1x1x64x64xbf16> to vector<64x64xbf16>
    %cst_73 = arith.constant dense<0.000000e+00> : vector<64x64xf32>
    %69 = tpu.matmul %66, %68, %cst_73 {dimension_numbers = #tpu.dot_dimension_numbers<[1], [0], [0], [1], [0, 0, 1, 1], [], []>} : vector<64x64xbf16>, vector<64x64xbf16>, vector<64x64xf32> -> vector<64x64xf32>
    %70 = arith.addf %63, %69 : vector<64x64xf32>
    %c0_74 = arith.constant 0 : index
    %c0_75 = arith.constant 0 : index
    %c0_76 = arith.constant 0 : index
    %71 = vector.load %arg3[%c0_74, %c0_75, %c0_76] : memref<4x1x64xf32, #tpu.memory_space<vmem>>, vector<1x1x64xf32>
    %72 = vector.shape_cast %71 : vector<1x1x64xf32> to vector<1x64xf32>
    %73 = vector.broadcast %72 : vector<1x64xf32> to vector<64x64xf32>
    %74 = arith.addf %70, %73 : vector<64x64xf32>
    %cst_77 = arith.constant 0.000000e+00 : f32
    %75 = vector.broadcast %cst_77 : f32 to vector<64x64xf32>
    %76 = arith.maximumf %74, %75 : vector<64x64xf32>
    %77 = vector.shape_cast %76 : vector<64x64xf32> to vector<8x8x64xf32>
    %c1_78 = arith.constant 1 : index
    %c1_79 = arith.constant 1 : index
    %c0_80 = arith.constant 0 : index
    %78 = vector.load %arg5[%c1_78, %c1_79, %c0_80] : memref<10x10x64xf32, #tpu.memory_space<vmem>>, vector<8x8x64xf32>
    tpu.vector_store %arg5[%c1_78, %c1_79, %c0_80], %77 {strides = array<i32>} : memref<10x10x64xf32, #tpu.memory_space<vmem>>, vector<8x8x64xf32>,
    %cst_81 = arith.constant 0.000000e+00 : f32
    %79 = vector.broadcast %cst_81 : f32 to vector<64x64xf32>
    %c0_82 = arith.constant 0 : index
    %c0_83 = arith.constant 0 : index
    %c0_84 = arith.constant 0 : index
    %80 = vector.load %arg5[%c0_82, %c0_83, %c0_84] : memref<10x10x64xf32, #tpu.memory_space<vmem>>, vector<8x8x64xf32>
    %81 = vector.shape_cast %80 : vector<8x8x64xf32> to vector<64x64xf32>
    %82 = arith.truncf %81 : vector<64x64xf32> to vector<64x64xbf16>
    %c1_85 = arith.constant 1 : index
    %c0_86 = arith.constant 0 : index
    %c0_87 = arith.constant 0 : index
    %c0_88 = arith.constant 0 : index
    %83 = vector.load %arg2[%c1_85, %c0_86, %c0_87, %c0_88] : memref<4x9x64x64xbf16, #tpu.memory_space<vmem>>, vector<1x1x64x64xbf16>
    %84 = vector.shape_cast %83 : vector<1x1x64x64xbf16> to vector<64x64xbf16>
    %cst_89 = arith.constant dense<0.000000e+00> : vector<64x64xf32>
    %85 = tpu.matmul %82, %84, %cst_89 {dimension_numbers = #tpu.dot_dimension_numbers<[1], [0], [0], [1], [0, 0, 1, 1], [], []>} : vector<64x64xbf16>, vector<64x64xbf16>, vector<64x64xf32> -> vector<64x64xf32>
    %86 = arith.addf %79, %85 : vector<64x64xf32>
    %c0_90 = arith.constant 0 : index
    %c1_91 = arith.constant 1 : index
    %c0_92 = arith.constant 0 : index
    %87 = vector.load %arg5[%c0_90, %c1_91, %c0_92] : memref<10x10x64xf32, #tpu.memory_space<vmem>>, vector<8x8x64xf32>
    %88 = vector.shape_cast %87 : vector<8x8x64xf32> to vector<64x64xf32>
    %89 = arith.truncf %88 : vector<64x64xf32> to vector<64x64xbf16>
    %c1_93 = arith.constant 1 : index
    %c1_94 = arith.constant 1 : index
    %c0_95 = arith.constant 0 : index
    %c0_96 = arith.constant 0 : index
    %90 = vector.load %arg2[%c1_93, %c1_94, %c0_95, %c0_96] : memref<4x9x64x64xbf16, #tpu.memory_space<vmem>>, vector<1x1x64x64xbf16>
    %91 = vector.shape_cast %90 : vector<1x1x64x64xbf16> to vector<64x64xbf16>
    %cst_97 = arith.constant dense<0.000000e+00> : vector<64x64xf32>
    %92 = tpu.matmul %89, %91, %cst_97 {dimension_numbers = #tpu.dot_dimension_numbers<[1], [0], [0], [1], [0, 0, 1, 1], [], []>} : vector<64x64xbf16>, vector<64x64xbf16>, vector<64x64xf32> -> vector<64x64xf32>
    %93 = arith.addf %86, %92 : vector<64x64xf32>
    %c0_98 = arith.constant 0 : index
    %c2_99 = arith.constant 2 : index
    %c0_100 = arith.constant 0 : index
    %94 = vector.load %arg5[%c0_98, %c2_99, %c0_100] : memref<10x10x64xf32, #tpu.memory_space<vmem>>, vector<8x8x64xf32>
    %95 = vector.shape_cast %94 : vector<8x8x64xf32> to vector<64x64xf32>
    %96 = arith.truncf %95 : vector<64x64xf32> to vector<64x64xbf16>
    %c1_101 = arith.constant 1 : index
    %c2_102 = arith.constant 2 : index
    %c0_103 = arith.constant 0 : index
    %c0_104 = arith.constant 0 : index
    %97 = vector.load %arg2[%c1_101, %c2_102, %c0_103, %c0_104] : memref<4x9x64x64xbf16, #tpu.memory_space<vmem>>, vector<1x1x64x64xbf16>
    %98 = vector.shape_cast %97 : vector<1x1x64x64xbf16> to vector<64x64xbf16>
    %cst_105 = arith.constant dense<0.000000e+00> : vector<64x64xf32>
    %99 = tpu.matmul %96, %98, %cst_105 {dimension_numbers = #tpu.dot_dimension_numbers<[1], [0], [0], [1], [0, 0, 1, 1], [], []>} : vector<64x64xbf16>, vector<64x64xbf16>, vector<64x64xf32> -> vector<64x64xf32>
    %100 = arith.addf %93, %99 : vector<64x64xf32>
    %c1_106 = arith.constant 1 : index
    %c0_107 = arith.constant 0 : index
    %c0_108 = arith.constant 0 : index
    %101 = vector.load %arg5[%c1_106, %c0_107, %c0_108] : memref<10x10x64xf32, #tpu.memory_space<vmem>>, vector<8x8x64xf32>
    %102 = vector.shape_cast %101 : vector<8x8x64xf32> to vector<64x64xf32>
    %103 = arith.truncf %102 : vector<64x64xf32> to vector<64x64xbf16>
    %c1_109 = arith.constant 1 : index
    %c3_110 = arith.constant 3 : index
    %c0_111 = arith.constant 0 : index
    %c0_112 = arith.constant 0 : index
    %104 = vector.load %arg2[%c1_109, %c3_110, %c0_111, %c0_112] : memref<4x9x64x64xbf16, #tpu.memory_space<vmem>>, vector<1x1x64x64xbf16>
    %105 = vector.shape_cast %104 : vector<1x1x64x64xbf16> to vector<64x64xbf16>
    %cst_113 = arith.constant dense<0.000000e+00> : vector<64x64xf32>
    %106 = tpu.matmul %103, %105, %cst_113 {dimension_numbers = #tpu.dot_dimension_numbers<[1], [0], [0], [1], [0, 0, 1, 1], [], []>} : vector<64x64xbf16>, vector<64x64xbf16>, vector<64x64xf32> -> vector<64x64xf32>
    %107 = arith.addf %100, %106 : vector<64x64xf32>
    %c1_114 = arith.constant 1 : index
    %c1_115 = arith.constant 1 : index
    %c0_116 = arith.constant 0 : index
    %108 = vector.load %arg5[%c1_114, %c1_115, %c0_116] : memref<10x10x64xf32, #tpu.memory_space<vmem>>, vector<8x8x64xf32>
    %109 = vector.shape_cast %108 : vector<8x8x64xf32> to vector<64x64xf32>
    %110 = arith.truncf %109 : vector<64x64xf32> to vector<64x64xbf16>
    %c1_117 = arith.constant 1 : index
    %c4_118 = arith.constant 4 : index
    %c0_119 = arith.constant 0 : index
    %c0_120 = arith.constant 0 : index
    %111 = vector.load %arg2[%c1_117, %c4_118, %c0_119, %c0_120] : memref<4x9x64x64xbf16, #tpu.memory_space<vmem>>, vector<1x1x64x64xbf16>
    %112 = vector.shape_cast %111 : vector<1x1x64x64xbf16> to vector<64x64xbf16>
    %cst_121 = arith.constant dense<0.000000e+00> : vector<64x64xf32>
    %113 = tpu.matmul %110, %112, %cst_121 {dimension_numbers = #tpu.dot_dimension_numbers<[1], [0], [0], [1], [0, 0, 1, 1], [], []>} : vector<64x64xbf16>, vector<64x64xbf16>, vector<64x64xf32> -> vector<64x64xf32>
    %114 = arith.addf %107, %113 : vector<64x64xf32>
    %c1_122 = arith.constant 1 : index
    %c2_123 = arith.constant 2 : index
    %c0_124 = arith.constant 0 : index
    %115 = vector.load %arg5[%c1_122, %c2_123, %c0_124] : memref<10x10x64xf32, #tpu.memory_space<vmem>>, vector<8x8x64xf32>
    %116 = vector.shape_cast %115 : vector<8x8x64xf32> to vector<64x64xf32>
    %117 = arith.truncf %116 : vector<64x64xf32> to vector<64x64xbf16>
    %c1_125 = arith.constant 1 : index
    %c5_126 = arith.constant 5 : index
    %c0_127 = arith.constant 0 : index
    %c0_128 = arith.constant 0 : index
    %118 = vector.load %arg2[%c1_125, %c5_126, %c0_127, %c0_128] : memref<4x9x64x64xbf16, #tpu.memory_space<vmem>>, vector<1x1x64x64xbf16>
    %119 = vector.shape_cast %118 : vector<1x1x64x64xbf16> to vector<64x64xbf16>
    %cst_129 = arith.constant dense<0.000000e+00> : vector<64x64xf32>
    %120 = tpu.matmul %117, %119, %cst_129 {dimension_numbers = #tpu.dot_dimension_numbers<[1], [0], [0], [1], [0, 0, 1, 1], [], []>} : vector<64x64xbf16>, vector<64x64xbf16>, vector<64x64xf32> -> vector<64x64xf32>
    %121 = arith.addf %114, %120 : vector<64x64xf32>
    %c2_130 = arith.constant 2 : index
    %c0_131 = arith.constant 0 : index
    %c0_132 = arith.constant 0 : index
    %122 = vector.load %arg5[%c2_130, %c0_131, %c0_132] : memref<10x10x64xf32, #tpu.memory_space<vmem>>, vector<8x8x64xf32>
    %123 = vector.shape_cast %122 : vector<8x8x64xf32> to vector<64x64xf32>
    %124 = arith.truncf %123 : vector<64x64xf32> to vector<64x64xbf16>
    %c1_133 = arith.constant 1 : index
    %c6_134 = arith.constant 6 : index
    %c0_135 = arith.constant 0 : index
    %c0_136 = arith.constant 0 : index
    %125 = vector.load %arg2[%c1_133, %c6_134, %c0_135, %c0_136] : memref<4x9x64x64xbf16, #tpu.memory_space<vmem>>, vector<1x1x64x64xbf16>
    %126 = vector.shape_cast %125 : vector<1x1x64x64xbf16> to vector<64x64xbf16>
    %cst_137 = arith.constant dense<0.000000e+00> : vector<64x64xf32>
    %127 = tpu.matmul %124, %126, %cst_137 {dimension_numbers = #tpu.dot_dimension_numbers<[1], [0], [0], [1], [0, 0, 1, 1], [], []>} : vector<64x64xbf16>, vector<64x64xbf16>, vector<64x64xf32> -> vector<64x64xf32>
    %128 = arith.addf %121, %127 : vector<64x64xf32>
    %c2_138 = arith.constant 2 : index
    %c1_139 = arith.constant 1 : index
    %c0_140 = arith.constant 0 : index
    %129 = vector.load %arg5[%c2_138, %c1_139, %c0_140] : memref<10x10x64xf32, #tpu.memory_space<vmem>>, vector<8x8x64xf32>
    %130 = vector.shape_cast %129 : vector<8x8x64xf32> to vector<64x64xf32>
    %131 = arith.truncf %130 : vector<64x64xf32> to vector<64x64xbf16>
    %c1_141 = arith.constant 1 : index
    %c7_142 = arith.constant 7 : index
    %c0_143 = arith.constant 0 : index
    %c0_144 = arith.constant 0 : index
    %132 = vector.load %arg2[%c1_141, %c7_142, %c0_143, %c0_144] : memref<4x9x64x64xbf16, #tpu.memory_space<vmem>>, vector<1x1x64x64xbf16>
    %133 = vector.shape_cast %132 : vector<1x1x64x64xbf16> to vector<64x64xbf16>
    %cst_145 = arith.constant dense<0.000000e+00> : vector<64x64xf32>
    %134 = tpu.matmul %131, %133, %cst_145 {dimension_numbers = #tpu.dot_dimension_numbers<[1], [0], [0], [1], [0, 0, 1, 1], [], []>} : vector<64x64xbf16>, vector<64x64xbf16>, vector<64x64xf32> -> vector<64x64xf32>
    %135 = arith.addf %128, %134 : vector<64x64xf32>
    %c2_146 = arith.constant 2 : index
    %c2_147 = arith.constant 2 : index
    %c0_148 = arith.constant 0 : index
    %136 = vector.load %arg5[%c2_146, %c2_147, %c0_148] : memref<10x10x64xf32, #tpu.memory_space<vmem>>, vector<8x8x64xf32>
    %137 = vector.shape_cast %136 : vector<8x8x64xf32> to vector<64x64xf32>
    %138 = arith.truncf %137 : vector<64x64xf32> to vector<64x64xbf16>
    %c1_149 = arith.constant 1 : index
    %c8_150 = arith.constant 8 : index
    %c0_151 = arith.constant 0 : index
    %c0_152 = arith.constant 0 : index
    %139 = vector.load %arg2[%c1_149, %c8_150, %c0_151, %c0_152] : memref<4x9x64x64xbf16, #tpu.memory_space<vmem>>, vector<1x1x64x64xbf16>
    %140 = vector.shape_cast %139 : vector<1x1x64x64xbf16> to vector<64x64xbf16>
    %cst_153 = arith.constant dense<0.000000e+00> : vector<64x64xf32>
    %141 = tpu.matmul %138, %140, %cst_153 {dimension_numbers = #tpu.dot_dimension_numbers<[1], [0], [0], [1], [0, 0, 1, 1], [], []>} : vector<64x64xbf16>, vector<64x64xbf16>, vector<64x64xf32> -> vector<64x64xf32>
    %142 = arith.addf %135, %141 : vector<64x64xf32>
    %c1_154 = arith.constant 1 : index
    %c0_155 = arith.constant 0 : index
    %c0_156 = arith.constant 0 : index
    %143 = vector.load %arg3[%c1_154, %c0_155, %c0_156] : memref<4x1x64xf32, #tpu.memory_space<vmem>>, vector<1x1x64xf32>
    %144 = vector.shape_cast %143 : vector<1x1x64xf32> to vector<1x64xf32>
    %145 = vector.broadcast %144 : vector<1x64xf32> to vector<64x64xf32>
    %146 = arith.addf %142, %145 : vector<64x64xf32>
    %147 = arith.addf %146, %4 : vector<64x64xf32>
    %cst_157 = arith.constant 0.000000e+00 : f32
    %148 = vector.broadcast %cst_157 : f32 to vector<64x64xf32>
    %149 = arith.maximumf %147, %148 : vector<64x64xf32>
    %150 = vector.shape_cast %149 : vector<64x64xf32> to vector<8x8x64xf32>
    %c1_158 = arith.constant 1 : index
    %c1_159 = arith.constant 1 : index
    %c0_160 = arith.constant 0 : index
    %151 = vector.load %arg5[%c1_158, %c1_159, %c0_160] : memref<10x10x64xf32, #tpu.memory_space<vmem>>, vector<8x8x64xf32>
    tpu.vector_store %arg5[%c1_158, %c1_159, %c0_160], %150 {strides = array<i32>} : memref<10x10x64xf32, #tpu.memory_space<vmem>>, vector<8x8x64xf32>,
    %cst_161 = arith.constant 0.000000e+00 : f32
    %152 = vector.broadcast %cst_161 : f32 to vector<64x64xf32>
    %c0_162 = arith.constant 0 : index
    %c0_163 = arith.constant 0 : index
    %c0_164 = arith.constant 0 : index
    %153 = vector.load %arg5[%c0_162, %c0_163, %c0_164] : memref<10x10x64xf32, #tpu.memory_space<vmem>>, vector<8x8x64xf32>
    %154 = vector.shape_cast %153 : vector<8x8x64xf32> to vector<64x64xf32>
    %155 = arith.truncf %154 : vector<64x64xf32> to vector<64x64xbf16>
    %c2_165 = arith.constant 2 : index
    %c0_166 = arith.constant 0 : index
    %c0_167 = arith.constant 0 : index
    %c0_168 = arith.constant 0 : index
    %156 = vector.load %arg2[%c2_165, %c0_166, %c0_167, %c0_168] : memref<4x9x64x64xbf16, #tpu.memory_space<vmem>>, vector<1x1x64x64xbf16>
    %157 = vector.shape_cast %156 : vector<1x1x64x64xbf16> to vector<64x64xbf16>
    %cst_169 = arith.constant dense<0.000000e+00> : vector<64x64xf32>
    %158 = tpu.matmul %155, %157, %cst_169 {dimension_numbers = #tpu.dot_dimension_numbers<[1], [0], [0], [1], [0, 0, 1, 1], [], []>} : vector<64x64xbf16>, vector<64x64xbf16>, vector<64x64xf32> -> vector<64x64xf32>
    %159 = arith.addf %152, %158 : vector<64x64xf32>
    %c0_170 = arith.constant 0 : index
    %c1_171 = arith.constant 1 : index
    %c0_172 = arith.constant 0 : index
    %160 = vector.load %arg5[%c0_170, %c1_171, %c0_172] : memref<10x10x64xf32, #tpu.memory_space<vmem>>, vector<8x8x64xf32>
    %161 = vector.shape_cast %160 : vector<8x8x64xf32> to vector<64x64xf32>
    %162 = arith.truncf %161 : vector<64x64xf32> to vector<64x64xbf16>
    %c2_173 = arith.constant 2 : index
    %c1_174 = arith.constant 1 : index
    %c0_175 = arith.constant 0 : index
    %c0_176 = arith.constant 0 : index
    %163 = vector.load %arg2[%c2_173, %c1_174, %c0_175, %c0_176] : memref<4x9x64x64xbf16, #tpu.memory_space<vmem>>, vector<1x1x64x64xbf16>
    %164 = vector.shape_cast %163 : vector<1x1x64x64xbf16> to vector<64x64xbf16>
    %cst_177 = arith.constant dense<0.000000e+00> : vector<64x64xf32>
    %165 = tpu.matmul %162, %164, %cst_177 {dimension_numbers = #tpu.dot_dimension_numbers<[1], [0], [0], [1], [0, 0, 1, 1], [], []>} : vector<64x64xbf16>, vector<64x64xbf16>, vector<64x64xf32> -> vector<64x64xf32>
    %166 = arith.addf %159, %165 : vector<64x64xf32>
    %c0_178 = arith.constant 0 : index
    %c2_179 = arith.constant 2 : index
    %c0_180 = arith.constant 0 : index
    %167 = vector.load %arg5[%c0_178, %c2_179, %c0_180] : memref<10x10x64xf32, #tpu.memory_space<vmem>>, vector<8x8x64xf32>
    %168 = vector.shape_cast %167 : vector<8x8x64xf32> to vector<64x64xf32>
    %169 = arith.truncf %168 : vector<64x64xf32> to vector<64x64xbf16>
    %c2_181 = arith.constant 2 : index
    %c2_182 = arith.constant 2 : index
    %c0_183 = arith.constant 0 : index
    %c0_184 = arith.constant 0 : index
    %170 = vector.load %arg2[%c2_181, %c2_182, %c0_183, %c0_184] : memref<4x9x64x64xbf16, #tpu.memory_space<vmem>>, vector<1x1x64x64xbf16>
    %171 = vector.shape_cast %170 : vector<1x1x64x64xbf16> to vector<64x64xbf16>
    %cst_185 = arith.constant dense<0.000000e+00> : vector<64x64xf32>
    %172 = tpu.matmul %169, %171, %cst_185 {dimension_numbers = #tpu.dot_dimension_numbers<[1], [0], [0], [1], [0, 0, 1, 1], [], []>} : vector<64x64xbf16>, vector<64x64xbf16>, vector<64x64xf32> -> vector<64x64xf32>
    %173 = arith.addf %166, %172 : vector<64x64xf32>
    %c1_186 = arith.constant 1 : index
    %c0_187 = arith.constant 0 : index
    %c0_188 = arith.constant 0 : index
    %174 = vector.load %arg5[%c1_186, %c0_187, %c0_188] : memref<10x10x64xf32, #tpu.memory_space<vmem>>, vector<8x8x64xf32>
    %175 = vector.shape_cast %174 : vector<8x8x64xf32> to vector<64x64xf32>
    %176 = arith.truncf %175 : vector<64x64xf32> to vector<64x64xbf16>
    %c2_189 = arith.constant 2 : index
    %c3_190 = arith.constant 3 : index
    %c0_191 = arith.constant 0 : index
    %c0_192 = arith.constant 0 : index
    %177 = vector.load %arg2[%c2_189, %c3_190, %c0_191, %c0_192] : memref<4x9x64x64xbf16, #tpu.memory_space<vmem>>, vector<1x1x64x64xbf16>
    %178 = vector.shape_cast %177 : vector<1x1x64x64xbf16> to vector<64x64xbf16>
    %cst_193 = arith.constant dense<0.000000e+00> : vector<64x64xf32>
    %179 = tpu.matmul %176, %178, %cst_193 {dimension_numbers = #tpu.dot_dimension_numbers<[1], [0], [0], [1], [0, 0, 1, 1], [], []>} : vector<64x64xbf16>, vector<64x64xbf16>, vector<64x64xf32> -> vector<64x64xf32>
    %180 = arith.addf %173, %179 : vector<64x64xf32>
    %c1_194 = arith.constant 1 : index
    %c1_195 = arith.constant 1 : index
    %c0_196 = arith.constant 0 : index
    %181 = vector.load %arg5[%c1_194, %c1_195, %c0_196] : memref<10x10x64xf32, #tpu.memory_space<vmem>>, vector<8x8x64xf32>
    %182 = vector.shape_cast %181 : vector<8x8x64xf32> to vector<64x64xf32>
    %183 = arith.truncf %182 : vector<64x64xf32> to vector<64x64xbf16>
    %c2_197 = arith.constant 2 : index
    %c4_198 = arith.constant 4 : index
    %c0_199 = arith.constant 0 : index
    %c0_200 = arith.constant 0 : index
    %184 = vector.load %arg2[%c2_197, %c4_198, %c0_199, %c0_200] : memref<4x9x64x64xbf16, #tpu.memory_space<vmem>>, vector<1x1x64x64xbf16>
    %185 = vector.shape_cast %184 : vector<1x1x64x64xbf16> to vector<64x64xbf16>
    %cst_201 = arith.constant dense<0.000000e+00> : vector<64x64xf32>
    %186 = tpu.matmul %183, %185, %cst_201 {dimension_numbers = #tpu.dot_dimension_numbers<[1], [0], [0], [1], [0, 0, 1, 1], [], []>} : vector<64x64xbf16>, vector<64x64xbf16>, vector<64x64xf32> -> vector<64x64xf32>
    %187 = arith.addf %180, %186 : vector<64x64xf32>
    %c1_202 = arith.constant 1 : index
    %c2_203 = arith.constant 2 : index
    %c0_204 = arith.constant 0 : index
    %188 = vector.load %arg5[%c1_202, %c2_203, %c0_204] : memref<10x10x64xf32, #tpu.memory_space<vmem>>, vector<8x8x64xf32>
    %189 = vector.shape_cast %188 : vector<8x8x64xf32> to vector<64x64xf32>
    %190 = arith.truncf %189 : vector<64x64xf32> to vector<64x64xbf16>
    %c2_205 = arith.constant 2 : index
    %c5_206 = arith.constant 5 : index
    %c0_207 = arith.constant 0 : index
    %c0_208 = arith.constant 0 : index
    %191 = vector.load %arg2[%c2_205, %c5_206, %c0_207, %c0_208] : memref<4x9x64x64xbf16, #tpu.memory_space<vmem>>, vector<1x1x64x64xbf16>
    %192 = vector.shape_cast %191 : vector<1x1x64x64xbf16> to vector<64x64xbf16>
    %cst_209 = arith.constant dense<0.000000e+00> : vector<64x64xf32>
    %193 = tpu.matmul %190, %192, %cst_209 {dimension_numbers = #tpu.dot_dimension_numbers<[1], [0], [0], [1], [0, 0, 1, 1], [], []>} : vector<64x64xbf16>, vector<64x64xbf16>, vector<64x64xf32> -> vector<64x64xf32>
    %194 = arith.addf %187, %193 : vector<64x64xf32>
    %c2_210 = arith.constant 2 : index
    %c0_211 = arith.constant 0 : index
    %c0_212 = arith.constant 0 : index
    %195 = vector.load %arg5[%c2_210, %c0_211, %c0_212] : memref<10x10x64xf32, #tpu.memory_space<vmem>>, vector<8x8x64xf32>
    %196 = vector.shape_cast %195 : vector<8x8x64xf32> to vector<64x64xf32>
    %197 = arith.truncf %196 : vector<64x64xf32> to vector<64x64xbf16>
    %c2_213 = arith.constant 2 : index
    %c6_214 = arith.constant 6 : index
    %c0_215 = arith.constant 0 : index
    %c0_216 = arith.constant 0 : index
    %198 = vector.load %arg2[%c2_213, %c6_214, %c0_215, %c0_216] : memref<4x9x64x64xbf16, #tpu.memory_space<vmem>>, vector<1x1x64x64xbf16>
    %199 = vector.shape_cast %198 : vector<1x1x64x64xbf16> to vector<64x64xbf16>
    %cst_217 = arith.constant dense<0.000000e+00> : vector<64x64xf32>
    %200 = tpu.matmul %197, %199, %cst_217 {dimension_numbers = #tpu.dot_dimension_numbers<[1], [0], [0], [1], [0, 0, 1, 1], [], []>} : vector<64x64xbf16>, vector<64x64xbf16>, vector<64x64xf32> -> vector<64x64xf32>
    %201 = arith.addf %194, %200 : vector<64x64xf32>
    %c2_218 = arith.constant 2 : index
    %c1_219 = arith.constant 1 : index
    %c0_220 = arith.constant 0 : index
    %202 = vector.load %arg5[%c2_218, %c1_219, %c0_220] : memref<10x10x64xf32, #tpu.memory_space<vmem>>, vector<8x8x64xf32>
    %203 = vector.shape_cast %202 : vector<8x8x64xf32> to vector<64x64xf32>
    %204 = arith.truncf %203 : vector<64x64xf32> to vector<64x64xbf16>
    %c2_221 = arith.constant 2 : index
    %c7_222 = arith.constant 7 : index
    %c0_223 = arith.constant 0 : index
    %c0_224 = arith.constant 0 : index
    %205 = vector.load %arg2[%c2_221, %c7_222, %c0_223, %c0_224] : memref<4x9x64x64xbf16, #tpu.memory_space<vmem>>, vector<1x1x64x64xbf16>
    %206 = vector.shape_cast %205 : vector<1x1x64x64xbf16> to vector<64x64xbf16>
    %cst_225 = arith.constant dense<0.000000e+00> : vector<64x64xf32>
    %207 = tpu.matmul %204, %206, %cst_225 {dimension_numbers = #tpu.dot_dimension_numbers<[1], [0], [0], [1], [0, 0, 1, 1], [], []>} : vector<64x64xbf16>, vector<64x64xbf16>, vector<64x64xf32> -> vector<64x64xf32>
    %208 = arith.addf %201, %207 : vector<64x64xf32>
    %c2_226 = arith.constant 2 : index
    %c2_227 = arith.constant 2 : index
    %c0_228 = arith.constant 0 : index
    %209 = vector.load %arg5[%c2_226, %c2_227, %c0_228] : memref<10x10x64xf32, #tpu.memory_space<vmem>>, vector<8x8x64xf32>
    %210 = vector.shape_cast %209 : vector<8x8x64xf32> to vector<64x64xf32>
    %211 = arith.truncf %210 : vector<64x64xf32> to vector<64x64xbf16>
    %c2_229 = arith.constant 2 : index
    %c8_230 = arith.constant 8 : index
    %c0_231 = arith.constant 0 : index
    %c0_232 = arith.constant 0 : index
    %212 = vector.load %arg2[%c2_229, %c8_230, %c0_231, %c0_232] : memref<4x9x64x64xbf16, #tpu.memory_space<vmem>>, vector<1x1x64x64xbf16>
    %213 = vector.shape_cast %212 : vector<1x1x64x64xbf16> to vector<64x64xbf16>
    %cst_233 = arith.constant dense<0.000000e+00> : vector<64x64xf32>
    %214 = tpu.matmul %211, %213, %cst_233 {dimension_numbers = #tpu.dot_dimension_numbers<[1], [0], [0], [1], [0, 0, 1, 1], [], []>} : vector<64x64xbf16>, vector<64x64xbf16>, vector<64x64xf32> -> vector<64x64xf32>
    %215 = arith.addf %208, %214 : vector<64x64xf32>
    %c2_234 = arith.constant 2 : index
    %c0_235 = arith.constant 0 : index
    %c0_236 = arith.constant 0 : index
    %216 = vector.load %arg3[%c2_234, %c0_235, %c0_236] : memref<4x1x64xf32, #tpu.memory_space<vmem>>, vector<1x1x64xf32>
    %217 = vector.shape_cast %216 : vector<1x1x64xf32> to vector<1x64xf32>
    %218 = vector.broadcast %217 : vector<1x64xf32> to vector<64x64xf32>
    %219 = arith.addf %215, %218 : vector<64x64xf32>
    %cst_237 = arith.constant 0.000000e+00 : f32
    %220 = vector.broadcast %cst_237 : f32 to vector<64x64xf32>
    %221 = arith.maximumf %219, %220 : vector<64x64xf32>
    %222 = vector.shape_cast %221 : vector<64x64xf32> to vector<8x8x64xf32>
    %c1_238 = arith.constant 1 : index
    %c1_239 = arith.constant 1 : index
    %c0_240 = arith.constant 0 : index
    %223 = vector.load %arg5[%c1_238, %c1_239, %c0_240] : memref<10x10x64xf32, #tpu.memory_space<vmem>>, vector<8x8x64xf32>
    tpu.vector_store %arg5[%c1_238, %c1_239, %c0_240], %222 {strides = array<i32>} : memref<10x10x64xf32, #tpu.memory_space<vmem>>, vector<8x8x64xf32>,
    %cst_241 = arith.constant 0.000000e+00 : f32
    %224 = vector.broadcast %cst_241 : f32 to vector<64x64xf32>
    %c0_242 = arith.constant 0 : index
    %c0_243 = arith.constant 0 : index
    %c0_244 = arith.constant 0 : index
    %225 = vector.load %arg5[%c0_242, %c0_243, %c0_244] : memref<10x10x64xf32, #tpu.memory_space<vmem>>, vector<8x8x64xf32>
    %226 = vector.shape_cast %225 : vector<8x8x64xf32> to vector<64x64xf32>
    %227 = arith.truncf %226 : vector<64x64xf32> to vector<64x64xbf16>
    %c3_245 = arith.constant 3 : index
    %c0_246 = arith.constant 0 : index
    %c0_247 = arith.constant 0 : index
    %c0_248 = arith.constant 0 : index
    %228 = vector.load %arg2[%c3_245, %c0_246, %c0_247, %c0_248] : memref<4x9x64x64xbf16, #tpu.memory_space<vmem>>, vector<1x1x64x64xbf16>
    %229 = vector.shape_cast %228 : vector<1x1x64x64xbf16> to vector<64x64xbf16>
    %cst_249 = arith.constant dense<0.000000e+00> : vector<64x64xf32>
    %230 = tpu.matmul %227, %229, %cst_249 {dimension_numbers = #tpu.dot_dimension_numbers<[1], [0], [0], [1], [0, 0, 1, 1], [], []>} : vector<64x64xbf16>, vector<64x64xbf16>, vector<64x64xf32> -> vector<64x64xf32>
    %231 = arith.addf %224, %230 : vector<64x64xf32>
    %c0_250 = arith.constant 0 : index
    %c1_251 = arith.constant 1 : index
    %c0_252 = arith.constant 0 : index
    %232 = vector.load %arg5[%c0_250, %c1_251, %c0_252] : memref<10x10x64xf32, #tpu.memory_space<vmem>>, vector<8x8x64xf32>
    %233 = vector.shape_cast %232 : vector<8x8x64xf32> to vector<64x64xf32>
    %234 = arith.truncf %233 : vector<64x64xf32> to vector<64x64xbf16>
    %c3_253 = arith.constant 3 : index
    %c1_254 = arith.constant 1 : index
    %c0_255 = arith.constant 0 : index
    %c0_256 = arith.constant 0 : index
    %235 = vector.load %arg2[%c3_253, %c1_254, %c0_255, %c0_256] : memref<4x9x64x64xbf16, #tpu.memory_space<vmem>>, vector<1x1x64x64xbf16>
    %236 = vector.shape_cast %235 : vector<1x1x64x64xbf16> to vector<64x64xbf16>
    %cst_257 = arith.constant dense<0.000000e+00> : vector<64x64xf32>
    %237 = tpu.matmul %234, %236, %cst_257 {dimension_numbers = #tpu.dot_dimension_numbers<[1], [0], [0], [1], [0, 0, 1, 1], [], []>} : vector<64x64xbf16>, vector<64x64xbf16>, vector<64x64xf32> -> vector<64x64xf32>
    %238 = arith.addf %231, %237 : vector<64x64xf32>
    %c0_258 = arith.constant 0 : index
    %c2_259 = arith.constant 2 : index
    %c0_260 = arith.constant 0 : index
    %239 = vector.load %arg5[%c0_258, %c2_259, %c0_260] : memref<10x10x64xf32, #tpu.memory_space<vmem>>, vector<8x8x64xf32>
    %240 = vector.shape_cast %239 : vector<8x8x64xf32> to vector<64x64xf32>
    %241 = arith.truncf %240 : vector<64x64xf32> to vector<64x64xbf16>
    %c3_261 = arith.constant 3 : index
    %c2_262 = arith.constant 2 : index
    %c0_263 = arith.constant 0 : index
    %c0_264 = arith.constant 0 : index
    %242 = vector.load %arg2[%c3_261, %c2_262, %c0_263, %c0_264] : memref<4x9x64x64xbf16, #tpu.memory_space<vmem>>, vector<1x1x64x64xbf16>
    %243 = vector.shape_cast %242 : vector<1x1x64x64xbf16> to vector<64x64xbf16>
    %cst_265 = arith.constant dense<0.000000e+00> : vector<64x64xf32>
    %244 = tpu.matmul %241, %243, %cst_265 {dimension_numbers = #tpu.dot_dimension_numbers<[1], [0], [0], [1], [0, 0, 1, 1], [], []>} : vector<64x64xbf16>, vector<64x64xbf16>, vector<64x64xf32> -> vector<64x64xf32>
    %245 = arith.addf %238, %244 : vector<64x64xf32>
    %c1_266 = arith.constant 1 : index
    %c0_267 = arith.constant 0 : index
    %c0_268 = arith.constant 0 : index
    %246 = vector.load %arg5[%c1_266, %c0_267, %c0_268] : memref<10x10x64xf32, #tpu.memory_space<vmem>>, vector<8x8x64xf32>
    %247 = vector.shape_cast %246 : vector<8x8x64xf32> to vector<64x64xf32>
    %248 = arith.truncf %247 : vector<64x64xf32> to vector<64x64xbf16>
    %c3_269 = arith.constant 3 : index
    %c3_270 = arith.constant 3 : index
    %c0_271 = arith.constant 0 : index
    %c0_272 = arith.constant 0 : index
    %249 = vector.load %arg2[%c3_269, %c3_270, %c0_271, %c0_272] : memref<4x9x64x64xbf16, #tpu.memory_space<vmem>>, vector<1x1x64x64xbf16>
    %250 = vector.shape_cast %249 : vector<1x1x64x64xbf16> to vector<64x64xbf16>
    %cst_273 = arith.constant dense<0.000000e+00> : vector<64x64xf32>
    %251 = tpu.matmul %248, %250, %cst_273 {dimension_numbers = #tpu.dot_dimension_numbers<[1], [0], [0], [1], [0, 0, 1, 1], [], []>} : vector<64x64xbf16>, vector<64x64xbf16>, vector<64x64xf32> -> vector<64x64xf32>
    %252 = arith.addf %245, %251 : vector<64x64xf32>
    %c1_274 = arith.constant 1 : index
    %c1_275 = arith.constant 1 : index
    %c0_276 = arith.constant 0 : index
    %253 = vector.load %arg5[%c1_274, %c1_275, %c0_276] : memref<10x10x64xf32, #tpu.memory_space<vmem>>, vector<8x8x64xf32>
    %254 = vector.shape_cast %253 : vector<8x8x64xf32> to vector<64x64xf32>
    %255 = arith.truncf %254 : vector<64x64xf32> to vector<64x64xbf16>
    %c3_277 = arith.constant 3 : index
    %c4_278 = arith.constant 4 : index
    %c0_279 = arith.constant 0 : index
    %c0_280 = arith.constant 0 : index
    %256 = vector.load %arg2[%c3_277, %c4_278, %c0_279, %c0_280] : memref<4x9x64x64xbf16, #tpu.memory_space<vmem>>, vector<1x1x64x64xbf16>
    %257 = vector.shape_cast %256 : vector<1x1x64x64xbf16> to vector<64x64xbf16>
    %cst_281 = arith.constant dense<0.000000e+00> : vector<64x64xf32>
    %258 = tpu.matmul %255, %257, %cst_281 {dimension_numbers = #tpu.dot_dimension_numbers<[1], [0], [0], [1], [0, 0, 1, 1], [], []>} : vector<64x64xbf16>, vector<64x64xbf16>, vector<64x64xf32> -> vector<64x64xf32>
    %259 = arith.addf %252, %258 : vector<64x64xf32>
    %c1_282 = arith.constant 1 : index
    %c2_283 = arith.constant 2 : index
    %c0_284 = arith.constant 0 : index
    %260 = vector.load %arg5[%c1_282, %c2_283, %c0_284] : memref<10x10x64xf32, #tpu.memory_space<vmem>>, vector<8x8x64xf32>
    %261 = vector.shape_cast %260 : vector<8x8x64xf32> to vector<64x64xf32>
    %262 = arith.truncf %261 : vector<64x64xf32> to vector<64x64xbf16>
    %c3_285 = arith.constant 3 : index
    %c5_286 = arith.constant 5 : index
    %c0_287 = arith.constant 0 : index
    %c0_288 = arith.constant 0 : index
    %263 = vector.load %arg2[%c3_285, %c5_286, %c0_287, %c0_288] : memref<4x9x64x64xbf16, #tpu.memory_space<vmem>>, vector<1x1x64x64xbf16>
    %264 = vector.shape_cast %263 : vector<1x1x64x64xbf16> to vector<64x64xbf16>
    %cst_289 = arith.constant dense<0.000000e+00> : vector<64x64xf32>
    %265 = tpu.matmul %262, %264, %cst_289 {dimension_numbers = #tpu.dot_dimension_numbers<[1], [0], [0], [1], [0, 0, 1, 1], [], []>} : vector<64x64xbf16>, vector<64x64xbf16>, vector<64x64xf32> -> vector<64x64xf32>
    %266 = arith.addf %259, %265 : vector<64x64xf32>
    %c2_290 = arith.constant 2 : index
    %c0_291 = arith.constant 0 : index
    %c0_292 = arith.constant 0 : index
    %267 = vector.load %arg5[%c2_290, %c0_291, %c0_292] : memref<10x10x64xf32, #tpu.memory_space<vmem>>, vector<8x8x64xf32>
    %268 = vector.shape_cast %267 : vector<8x8x64xf32> to vector<64x64xf32>
    %269 = arith.truncf %268 : vector<64x64xf32> to vector<64x64xbf16>
    %c3_293 = arith.constant 3 : index
    %c6_294 = arith.constant 6 : index
    %c0_295 = arith.constant 0 : index
    %c0_296 = arith.constant 0 : index
    %270 = vector.load %arg2[%c3_293, %c6_294, %c0_295, %c0_296] : memref<4x9x64x64xbf16, #tpu.memory_space<vmem>>, vector<1x1x64x64xbf16>
    %271 = vector.shape_cast %270 : vector<1x1x64x64xbf16> to vector<64x64xbf16>
    %cst_297 = arith.constant dense<0.000000e+00> : vector<64x64xf32>
    %272 = tpu.matmul %269, %271, %cst_297 {dimension_numbers = #tpu.dot_dimension_numbers<[1], [0], [0], [1], [0, 0, 1, 1], [], []>} : vector<64x64xbf16>, vector<64x64xbf16>, vector<64x64xf32> -> vector<64x64xf32>
    %273 = arith.addf %266, %272 : vector<64x64xf32>
    %c2_298 = arith.constant 2 : index
    %c1_299 = arith.constant 1 : index
    %c0_300 = arith.constant 0 : index
    %274 = vector.load %arg5[%c2_298, %c1_299, %c0_300] : memref<10x10x64xf32, #tpu.memory_space<vmem>>, vector<8x8x64xf32>
    %275 = vector.shape_cast %274 : vector<8x8x64xf32> to vector<64x64xf32>
    %276 = arith.truncf %275 : vector<64x64xf32> to vector<64x64xbf16>
    %c3_301 = arith.constant 3 : index
    %c7_302 = arith.constant 7 : index
    %c0_303 = arith.constant 0 : index
    %c0_304 = arith.constant 0 : index
    %277 = vector.load %arg2[%c3_301, %c7_302, %c0_303, %c0_304] : memref<4x9x64x64xbf16, #tpu.memory_space<vmem>>, vector<1x1x64x64xbf16>
    %278 = vector.shape_cast %277 : vector<1x1x64x64xbf16> to vector<64x64xbf16>
    %cst_305 = arith.constant dense<0.000000e+00> : vector<64x64xf32>
    %279 = tpu.matmul %276, %278, %cst_305 {dimension_numbers = #tpu.dot_dimension_numbers<[1], [0], [0], [1], [0, 0, 1, 1], [], []>} : vector<64x64xbf16>, vector<64x64xbf16>, vector<64x64xf32> -> vector<64x64xf32>
    %280 = arith.addf %273, %279 : vector<64x64xf32>
    %c2_306 = arith.constant 2 : index
    %c2_307 = arith.constant 2 : index
    %c0_308 = arith.constant 0 : index
    %281 = vector.load %arg5[%c2_306, %c2_307, %c0_308] : memref<10x10x64xf32, #tpu.memory_space<vmem>>, vector<8x8x64xf32>
    %282 = vector.shape_cast %281 : vector<8x8x64xf32> to vector<64x64xf32>
    %283 = arith.truncf %282 : vector<64x64xf32> to vector<64x64xbf16>
    %c3_309 = arith.constant 3 : index
    %c8_310 = arith.constant 8 : index
    %c0_311 = arith.constant 0 : index
    %c0_312 = arith.constant 0 : index
    %284 = vector.load %arg2[%c3_309, %c8_310, %c0_311, %c0_312] : memref<4x9x64x64xbf16, #tpu.memory_space<vmem>>, vector<1x1x64x64xbf16>
    %285 = vector.shape_cast %284 : vector<1x1x64x64xbf16> to vector<64x64xbf16>
    %cst_313 = arith.constant dense<0.000000e+00> : vector<64x64xf32>
    %286 = tpu.matmul %283, %285, %cst_313 {dimension_numbers = #tpu.dot_dimension_numbers<[1], [0], [0], [1], [0, 0, 1, 1], [], []>} : vector<64x64xbf16>, vector<64x64xbf16>, vector<64x64xf32> -> vector<64x64xf32>
    %287 = arith.addf %280, %286 : vector<64x64xf32>
    %c3_314 = arith.constant 3 : index
    %c0_315 = arith.constant 0 : index
    %c0_316 = arith.constant 0 : index
    %288 = vector.load %arg3[%c3_314, %c0_315, %c0_316] : memref<4x1x64xf32, #tpu.memory_space<vmem>>, vector<1x1x64xf32>
    %289 = vector.shape_cast %288 : vector<1x1x64xf32> to vector<1x64xf32>
    %290 = vector.broadcast %289 : vector<1x64xf32> to vector<64x64xf32>
    %291 = arith.addf %287, %290 : vector<64x64xf32>
    %292 = arith.addf %291, %149 : vector<64x64xf32>
    %cst_317 = arith.constant 0.000000e+00 : f32
    %293 = vector.broadcast %cst_317 : f32 to vector<64x64xf32>
    %294 = arith.maximumf %292, %293 : vector<64x64xf32>
    %295 = vector.shape_cast %294 : vector<64x64xf32> to vector<8x8x64xf32>
    %c0_318 = arith.constant 0 : index
    %c0_319 = arith.constant 0 : index
    %c0_320 = arith.constant 0 : index
    %c0_321 = arith.constant 0 : index
    %296 = vector.load %arg4[%c0_318, %c0_319, %c0_320, %c0_321] : memref<1x8x8x64xf32, #tpu.memory_space<vmem>>, vector<1x8x8x64xf32>
    %297 = vector.shape_cast %296 : vector<1x8x8x64xf32> to vector<8x8x64xf32>
    %298 = vector.shape_cast %295 : vector<8x8x64xf32> to vector<1x8x8x64xf32>
    tpu.vector_store %arg4[%c0_318, %c0_319, %c0_320, %c0_321], %298 {strides = array<i32>} : memref<1x8x8x64xf32, #tpu.memory_space<vmem>>, vector<1x8x8x64xf32>,
    return
  }
  func.func @transform_0(%arg0: i32) -> (i32, i32, i32, i32) {
    %c0_i32 = arith.constant 0 : i32
    %c0_i32_0 = arith.constant 0 : i32
    %c0_i32_1 = arith.constant 0 : i32
    %c0_i32_2 = arith.constant 0 : i32
    return %arg0, %c0_i32, %c0_i32_0, %c0_i32_1 : i32, i32, i32, i32
  }
  func.func @transform_1(%arg0: i32) -> (i32, i32, i32, i32) {
    %c0_i32 = arith.constant 0 : i32
    %c0_i32_0 = arith.constant 0 : i32
    %c0_i32_1 = arith.constant 0 : i32
    %c0_i32_2 = arith.constant 0 : i32
    %c0_i32_3 = arith.constant 0 : i32
    return %c0_i32, %c0_i32_0, %c0_i32_1, %c0_i32_2 : i32, i32, i32, i32
  }
  func.func @transform_2(%arg0: i32) -> (i32, i32, i32) {
    %c0_i32 = arith.constant 0 : i32
    %c0_i32_0 = arith.constant 0 : i32
    %c0_i32_1 = arith.constant 0 : i32
    %c0_i32_2 = arith.constant 0 : i32
    return %c0_i32, %c0_i32_0, %c0_i32_1 : i32, i32, i32
  }
  func.func @transform_3(%arg0: i32) -> (i32, i32, i32, i32) {
    %c0_i32 = arith.constant 0 : i32
    %c0_i32_0 = arith.constant 0 : i32
    %c0_i32_1 = arith.constant 0 : i32
    %c0_i32_2 = arith.constant 0 : i32
    return %arg0, %c0_i32, %c0_i32_0, %c0_i32_1 : i32, i32, i32, i32
  }
}

</mosaic_0001>

<llo_original>
// kernel: client_model_forward.2
$region0: #{client_model_forward.2}
  #allocation0 [shape = 'u32[]', space=smem, size = 0x4, offset = 0x4, fixed_abs, tag = 'smem constant byte address 0x4 - core index']
  #allocation1 [shape = 'u32[144,128]{1,0:T(1,128)}', space=vmem, size = 0x12000, scoped, tag = 'internal scratch']
  %s0 = inlined_call_operand.vmem [shape: bf16[512,256], index: 0, kind: input, shape index: {}]
  %s1 = inlined_call_operand.vmem [shape: bf16[256,64], index: 1, kind: input, shape index: {}]
  %s2 = inlined_call_operand.vmem [shape: f32[1,64], index: 2, kind: input, shape index: {}]
  %s3 = inlined_call_operand.vmem [shape: f32[512,64], index: 3, kind: output, shape index: {}]
  %s4 = sld [smem:[#allocation0]]
  $region45: #{client_model_forward.2} parent=0
    _
  %s6 = ssub.s32 1, %s4
  %s7 = scalar_select 0, %s6, %s4
  loop: start=0, step=1, limit=4
  $region2: #{client_model_forward.2} parent=0 // loop_pre_header
    _
  $region3: #{client_model_forward.2} parent=0 // loop_header
    %s9 = sphi 0, %s13
    %p10 = scmp.ge.s32.totalorder %s9, 4
    %s19 = sphi 0, %s21
    %s22 = sphi 0, %s19
    %s23 = sphi 0, %s22
    %s39 = sphi 0, %s23
    %s43 = sphi 0, %s43
    %s45 = sphi 0, %s43
    %s46 = sphi 0, %s45
    %s60 = sphi 0, %s46
    %s64 = sphi 0, %s64
    %s66 = sphi 0, %s64
    %s67 = sphi 0, %s66
    %s81 = sphi 0, %s67
    %s87 = sphi 0, %s89
    %s90 = sphi 0, %s87
    %s91 = sphi 0, %s90
    %s107 = sphi 0, %s91
  $region4: #{client_model_forward.2} parent=0 // loop_header_branch
    %12 = sbr.rel (%p10) target = $region8
  $region5: #{client_model_forward.2} parent=0 // loop_body
    %s14 = ssub.s32 %s9, 1
    %s15 = ssub.s32 %s9, 2
    %s16 = sadd.s32 %s9, 1
    %s17 = ssub.s32 %s9, %s16
    %p18 = scmp.eq.s32.totalorder %s17, 0
    %s20 = sadd.s32 %s19, 1
    %s21 = scalar_select %p18, %s19, %s20
    %p24 = pneg %p18
    %p25 = scmp.eq.s32.totalorder %s9, 1
    %p26 = por %p24, %p25
    %p27 = scmp.ne.s32.totalorder %s19, %s22
    %p28 = scmp.eq.s32.totalorder %s9, 0
    %p29 = por %p27, %p28
    %p30 = scmp.ne.s32.totalorder %s19, %s22
    %p31 = scmp.eq.s32.totalorder %s14, 1
    %p32 = por %p30, %p31
    %p33 = scmp.ne.s32.totalorder %s22, %s23
    %p34 = scmp.eq.s32.totalorder %s14, 0
    %p35 = por %p33, %p34
    %p36 = scmp.ne.s32.totalorder %s22, %s23
    %p37 = scmp.eq.s32.totalorder %s15, 1
    %p38 = por %p36, %p37
    %p40 = scmp.ne.s32.totalorder %s23, %s39
    %p41 = scmp.eq.s32.totalorder %s15, 0
    %p42 = por %p40, %p41
    %s44 = sadd.s32 %s43, 1
    %p47 = scmp.eq.s32.totalorder %s9, 1
    %p48 = scmp.ne.s32.totalorder %s43, %s45
    %p49 = scmp.eq.s32.totalorder %s9, 0
    %p50 = por %p48, %p49
    %p51 = scmp.ne.s32.totalorder %s43, %s45
    %p52 = scmp.eq.s32.totalorder %s14, 1
    %p53 = por %p51, %p52
    %p54 = scmp.ne.s32.totalorder %s45, %s46
    %p55 = scmp.eq.s32.totalorder %s14, 0
    %p56 = por %p54, %p55
    %p57 = scmp.ne.s32.totalorder %s45, %s46
    %p58 = scmp.eq.s32.totalorder %s15, 1
    %p59 = por %p57, %p58
    %p61 = scmp.ne.s32.totalorder %s46, %s60
    %p62 = scmp.eq.s32.totalorder %s15, 0
    %p63 = por %p61, %p62
    %s65 = sadd.s32 %s64, 1
    %p68 = scmp.eq.s32.totalorder %s9, 1
    %p69 = scmp.ne.s32.totalorder %s64, %s66
    %p70 = scmp.eq.s32.totalorder %s9, 0
    %p71 = por %p69, %p70
    %p72 = scmp.ne.s32.totalorder %s64, %s66
    %p73 = scmp.eq.s32.totalorder %s14, 1
    %p74 = por %p72, %p73
    %p75 = scmp.ne.s32.totalorder %s66, %s67
    %p76 = scmp.eq.s32.totalorder %s14, 0
    %p77 = por %p75, %p76
    %p78 = scmp.ne.s32.totalorder %s66, %s67
    %p79 = scmp.eq.s32.totalorder %s15, 1
    %p80 = por %p78, %p79
    %p82 = scmp.ne.s32.totalorder %s67, %s81
    %p83 = scmp.eq.s32.totalorder %s15, 0
    %p84 = por %p82, %p83
    %s85 = ssub.s32 %s9, %s16
    %p86 = scmp.eq.s32.totalorder %s85, 0
    %s88 = sadd.s32 %s87, 1
    %s89 = scalar_select %p86, %s87, %s88
    %p92 = pneg %p86
    %p93 = scmp.eq.s32.totalorder %s9, 1
    %p94 = por %p92, %p93
    %p95 = scmp.ne.s32.totalorder %s87, %s90
    %p96 = scmp.eq.s32.totalorder %s9, 0
    %p97 = por %p95, %p96
    %p98 = scmp.ne.s32.totalorder %s87, %s90
    %p99 = scmp.eq.s32.totalorder %s14, 1
    %p100 = por %p98, %p99
    %p101 = scmp.ne.s32.totalorder %s90, %s91
    %p102 = scmp.eq.s32.totalorder %s14, 0
    %p103 = por %p101, %p102
    %p104 = scmp.ne.s32.totalorder %s90, %s91
    %p105 = scmp.eq.s32.totalorder %s15, 1
    %p106 = por %p104, %p105
    %p108 = scmp.ne.s32.totalorder %s91, %s107
    %p109 = scmp.eq.s32.totalorder %s15, 0
    %p110 = por %p108, %p109
    %p111 = scmp.le.s32.totalorder 1, %s9
    %p112 = scmp.lt.s32.totalorder %s9, 3
    %p113 = pnand %p111, %p112
    %p114 = pneg %p113
    // Predicated region
    $region9: #{client_model_forward.2} parent=5 // pred_check
      _
    $region10: #{client_model_forward.2} parent=5 // pred_check_branch
      %116 = sbr.rel (%p113) target = $region12
    $region11: #{client_model_forward.2} parent=5 // pred_region
      %s117 = ssub.s32 %s9, 1
      // Predicated region
      $region13: #{client_model_forward.2} parent=11 // pred_check
        %p118 = pneg %p56
      $region14: #{client_model_forward.2} parent=11 // pred_check_branch
        %120 = sbr.rel (%p118) target = $region16
      $region15: #{client_model_forward.2} parent=11 // pred_region
        _
      $region16: #{client_model_forward.2} parent=11 // pred_fallthru
        _
      // Predicated region
      $region17: #{client_model_forward.2} parent=11 // pred_check
        %p121 = pneg %p77
      $region18: #{client_model_forward.2} parent=11 // pred_check_branch
        %123 = sbr.rel (%p121) target = $region20
      $region19: #{client_model_forward.2} parent=11 // pred_region
        _
      $region20: #{client_model_forward.2} parent=11 // pred_fallthru
        _
    $region12: #{client_model_forward.2} parent=5 // pred_fallthru
      _
    %p124 = scmp.lt.s32.totalorder %s9, 2
    // Predicated region
    $region21: #{client_model_forward.2} parent=5 // pred_check
      %p125 = pneg %p124
    $region22: #{client_model_forward.2} parent=5 // pred_check_branch
      %127 = sbr.rel (%p125) target = $region24
    $region23: #{client_model_forward.2} parent=5 // pred_region
      // Predicated region
      $region25: #{client_model_forward.2} parent=23 // pred_check
        %p128 = pneg %p29
      $region26: #{client_model_forward.2} parent=23 // pred_check_branch
        %130 = sbr.rel (%p128) target = $region28
      $region27: #{client_model_forward.2} parent=23 // pred_region
        %s131 = smul.u32 32, %s9
        %p132 = scmp.lt.s32.totalorder %s131, 63
        %s133 = scalar_select %p132, %s131, 63
        %s134 = smul.addr %s133, 2
        %s135 = smul.addr %s134, 4
        %s136 = scalar_lea.vmem %s0, %s135
        %s137 = smul.u32 32, %s9
      $region28: #{client_model_forward.2} parent=23 // pred_fallthru
        _
    $region24: #{client_model_forward.2} parent=5 // pred_fallthru
      _
    %p138 = scmp.le.s32.totalorder 1, %s9
    %p139 = scmp.lt.s32.totalorder %s9, 3
    %p140 = pnand %p138, %p139
    %p141 = pneg %p140
    // Predicated region
    $region29: #{client_model_forward.2} parent=5 // pred_check
      _
    $region30: #{client_model_forward.2} parent=5 // pred_check_branch
      %143 = sbr.rel (%p140) target = $region32
    $region31: #{client_model_forward.2} parent=5 // pred_region
      %s144 = ssub.s32 %s9, 1
      %s145 = smul.u32 32, %s14
      %p146 = scmp.lt.s32.totalorder %s145, 63
      %s147 = scalar_select %p146, %s145, 63
      %s148 = smul.addr %s147, 2
      %s149 = smul.addr %s148, 4
      %s150 = scalar_lea.vmem %s0, %s149
      %p151 = pneg %p35
      %p152 = pneg %p32
      %p153 = pneg %p56
      %p154 = pneg %p53
      %p155 = pneg %p77
      %p156 = pneg %p74
      %p157 = pneg %p103
      %p158 = pneg %p100
      %s159 = smul.u32 32, %s14
      %p160 = scmp.lt.s32.totalorder %s159, 63
      %s161 = scalar_select %p160, %s159, 63
      %s162 = smul.addr %s161, 8
      %s163 = scalar_lea.vmem %s3, %s162
      %s164 = smul.u32 32, %s14
      %p165 = scmp.lt.s32.totalorder %s164, 63
      %s166 = scalar_select %p165, %s164, 63
      %s167 = smul.addr %s166, 2
      %s168 = smul.addr %s167, 4
      %s169 = scalar_lea.vmem %s0, %s168
      %s170 = smul.u32 32, %s14
      %s171 = smul.u32 32, %s14
      %p172 = scmp.lt.s32.totalorder %s171, 63
      %s173 = scalar_select %p172, %s171, 63
      %s174 = smul.addr %s173, 8
      %s175 = scalar_lea.vmem %s3, %s174
      %s176 = smul.u32 32, %s14
      %v178 = vld [vmem:[%s169] sm:$0xff]
      %v179 = vld [vmem:[%s169 + $0x8] sm:$0xff]
      %v180 = vld [vmem:[%s169 + $0x10] sm:$0xff]
      %v181 = vld [vmem:[%s169 + $0x18] sm:$0xff]
      %v182 = vld [vmem:[%s169 + $0x20] sm:$0xff]
      %v183 = vld [vmem:[%s169 + $0x28] sm:$0xff]
      %v184 = vld [vmem:[%s169 + $0x30] sm:$0xff]
      %v185 = vld [vmem:[%s169 + $0x38] sm:$0xff]
      %v186 = vld [vmem:[%s169 + $0x40] sm:$0xff]
      %v187 = vld [vmem:[%s169 + $0x48] sm:$0xff]
      %v188 = vld [vmem:[%s169 + $0x50] sm:$0xff]
      %v189 = vld [vmem:[%s169 + $0x58] sm:$0xff]
      %v190 = vld [vmem:[%s169 + $0x60] sm:$0xff]
      %v191 = vld [vmem:[%s169 + $0x68] sm:$0xff]
      %v192 = vld [vmem:[%s169 + $0x70] sm:$0xff]
      %v193 = vld [vmem:[%s169 + $0x78] sm:$0xff]
      %v194 = vld [vmem:[%s169 + $0x80] sm:$0xff]
      %v195 = vld [vmem:[%s169 + $0x88] sm:$0xff]
      %v196 = vld [vmem:[%s169 + $0x90] sm:$0xff]
      %v197 = vld [vmem:[%s169 + $0x98] sm:$0xff]
      %v198 = vld [vmem:[%s169 + $0xa0] sm:$0xff]
      %v199 = vld [vmem:[%s169 + $0xa8] sm:$0xff]
      %v200 = vld [vmem:[%s169 + $0xb0] sm:$0xff]
      %v201 = vld [vmem:[%s169 + $0xb8] sm:$0xff]
      %v202 = vld [vmem:[%s169 + $0xc0] sm:$0xff]
      %v203 = vld [vmem:[%s169 + $0xc8] sm:$0xff]
      %v204 = vld [vmem:[%s169 + $0xd0] sm:$0xff]
      %v205 = vld [vmem:[%s169 + $0xd8] sm:$0xff]
      %v206 = vld [vmem:[%s169 + $0xe0] sm:$0xff]
      %v207 = vld [vmem:[%s169 + $0xe8] sm:$0xff]
      %v208 = vld [vmem:[%s169 + $0xf0] sm:$0xff]
      %v209 = vld [vmem:[%s169 + $0xf8] sm:$0xff]
      %v210 = vld [vmem:[%s1] sm:$0xf]
      %v211 = vld [vmem:[%s1 + $0x4] sm:$0xf]
      %v212 = vld [vmem:[%s1 + $0x8] sm:$0xf]
      %v213 = vld [vmem:[%s1 + $0xc] sm:$0xf]
      %v214 = vld [vmem:[%s1 + $0x10] sm:$0xf]
      %v215 = vld [vmem:[%s1 + $0x14] sm:$0xf]
      %v216 = vld [vmem:[%s1 + $0x18] sm:$0xf]
      %v217 = vld [vmem:[%s1 + $0x1c] sm:$0xf]
      %v218 = vld [vmem:[%s1 + $0x20] sm:$0xf]
      %v219 = vld [vmem:[%s1 + $0x24] sm:$0xf]
      %v220 = vld [vmem:[%s1 + $0x28] sm:$0xf]
      %v221 = vld [vmem:[%s1 + $0x2c] sm:$0xf]
      %v222 = vld [vmem:[%s1 + $0x30] sm:$0xf]
      %v223 = vld [vmem:[%s1 + $0x34] sm:$0xf]
      %v224 = vld [vmem:[%s1 + $0x38] sm:$0xf]
      %v225 = vld [vmem:[%s1 + $0x3c] sm:$0xf]
      %v226 = vld [vmem:[%s1 + $0x40] sm:$0xf]
      %v227 = vld [vmem:[%s1 + $0x44] sm:$0xf]
      %v228 = vld [vmem:[%s1 + $0x48] sm:$0xf]
      %v229 = vld [vmem:[%s1 + $0x4c] sm:$0xf]
      %v230 = vld [vmem:[%s1 + $0x50] sm:$0xf]
      %v231 = vld [vmem:[%s1 + $0x54] sm:$0xf]
      %v232 = vld [vmem:[%s1 + $0x58] sm:$0xf]
      %v233 = vld [vmem:[%s1 + $0x5c] sm:$0xf]
      %v234 = vld [vmem:[%s1 + $0x60] sm:$0xf]
      %v235 = vld [vmem:[%s1 + $0x64] sm:$0xf]
      %v236 = vld [vmem:[%s1 + $0x68] sm:$0xf]
      %v237 = vld [vmem:[%s1 + $0x6c] sm:$0xf]
      %v238 = vld [vmem:[%s1 + $0x70] sm:$0xf]
      %v239 = vld [vmem:[%s1 + $0x74] sm:$0xf]
      %v240 = vld [vmem:[%s1 + $0x78] sm:$0xf]
      %v241 = vld [vmem:[%s1 + $0x7c] sm:$0xf]
      %v242 = vld [vmem:[%s2] sm:$0x1]
      %v244 = vlaneseq
      %v245 = vshrl.u32 %v244, 7
      %v246 = vsub.s32 0, %v245
      %v247 = vrot.slane %v242, %v246
      %v281 = vunpack.c.l.b16 %v178
      %v282 = vunpack.c.h.b16 %v178
      %v283 = vunpack.c.l.b16 %v179
      %v284 = vunpack.c.h.b16 %v179
      %v285 = vunpack.c.l.b16 %v180
      %v286 = vunpack.c.h.b16 %v180
      %v287 = vunpack.c.l.b16 %v181
      %v288 = vunpack.c.h.b16 %v181
      %v289 = vunpack.c.l.b16 %v182
      %v290 = vunpack.c.h.b16 %v182
      %v291 = vunpack.c.l.b16 %v183
      %v292 = vunpack.c.h.b16 %v183
      %v293 = vunpack.c.l.b16 %v184
      %v294 = vunpack.c.h.b16 %v184
      %v295 = vunpack.c.l.b16 %v185
      %v296 = vunpack.c.h.b16 %v185
      %v297 = vunpack.c.l.b16 %v186
      %v298 = vunpack.c.h.b16 %v186
      %v299 = vunpack.c.l.b16 %v187
      %v300 = vunpack.c.h.b16 %v187
      %v301 = vunpack.c.l.b16 %v188
      %v302 = vunpack.c.h.b16 %v188
      %v303 = vunpack.c.l.b16 %v189
      %v304 = vunpack.c.h.b16 %v189
      %v305 = vunpack.c.l.b16 %v190
      %v306 = vunpack.c.h.b16 %v190
      %v307 = vunpack.c.l.b16 %v191
      %v308 = vunpack.c.h.b16 %v191
      %v309 = vunpack.c.l.b16 %v192
      %v310 = vunpack.c.h.b16 %v192
      %v311 = vunpack.c.l.b16 %v193
      %v312 = vunpack.c.h.b16 %v193
      %v313 = vunpack.c.l.b16 %v194
      %v314 = vunpack.c.h.b16 %v194
      %v315 = vunpack.c.l.b16 %v195
      %v316 = vunpack.c.h.b16 %v195
      %v317 = vunpack.c.l.b16 %v196
      %v318 = vunpack.c.h.b16 %v196
      %v319 = vunpack.c.l.b16 %v197
      %v320 = vunpack.c.h.b16 %v197
      %v321 = vunpack.c.l.b16 %v198
      %v322 = vunpack.c.h.b16 %v198
      %v323 = vunpack.c.l.b16 %v199
      %v324 = vunpack.c.h.b16 %v199
      %v325 = vunpack.c.l.b16 %v200
      %v326 = vunpack.c.h.b16 %v200
      %v327 = vunpack.c.l.b16 %v201
      %v328 = vunpack.c.h.b16 %v201
      %v329 = vunpack.c.l.b16 %v202
      %v330 = vunpack.c.h.b16 %v202
      %v331 = vunpack.c.l.b16 %v203
      %v332 = vunpack.c.h.b16 %v203
      %v333 = vunpack.c.l.b16 %v204
      %v334 = vunpack.c.h.b16 %v204
      %v335 = vunpack.c.l.b16 %v205
      %v336 = vunpack.c.h.b16 %v205
      %v337 = vunpack.c.l.b16 %v206
      %v338 = vunpack.c.h.b16 %v206
      %v339 = vunpack.c.l.b16 %v207
      %v340 = vunpack.c.h.b16 %v207
      %v341 = vunpack.c.l.b16 %v208
      %v342 = vunpack.c.h.b16 %v208
      %v343 = vunpack.c.l.b16 %v209
      %v344 = vunpack.c.h.b16 %v209
      %v345 = vpack.c.b16 %v283, %v281
      %v346 = vpack.c.b16 %v284, %v282
      %v347 = vpack.c.b16 %v287, %v285
      %v348 = vpack.c.b16 %v288, %v286
      %v349 = vpack.c.b16 %v291, %v289
      %v350 = vpack.c.b16 %v292, %v290
      %v351 = vpack.c.b16 %v295, %v293
      %v352 = vpack.c.b16 %v296, %v294
      %v353 = vpack.c.b16 %v299, %v297
      %v354 = vpack.c.b16 %v300, %v298
      %v355 = vpack.c.b16 %v303, %v301
      %v356 = vpack.c.b16 %v304, %v302
      %v357 = vpack.c.b16 %v307, %v305
      %v358 = vpack.c.b16 %v308, %v306
      %v359 = vpack.c.b16 %v311, %v309
      %v360 = vpack.c.b16 %v312, %v310
      %v361 = vpack.c.b16 %v315, %v313
      %v362 = vpack.c.b16 %v316, %v314
      %v363 = vpack.c.b16 %v319, %v317
      %v364 = vpack.c.b16 %v320, %v318
      %v365 = vpack.c.b16 %v323, %v321
      %v366 = vpack.c.b16 %v324, %v322
      %v367 = vpack.c.b16 %v327, %v325
      %v368 = vpack.c.b16 %v328, %v326
      %v369 = vpack.c.b16 %v331, %v329
      %v370 = vpack.c.b16 %v332, %v330
      %v371 = vpack.c.b16 %v335, %v333
      %v372 = vpack.c.b16 %v336, %v334
      %v373 = vpack.c.b16 %v339, %v337
      %v374 = vpack.c.b16 %v340, %v338
      %v375 = vpack.c.b16 %v343, %v341
      %v376 = vpack.c.b16 %v344, %v342
      %v441 = vunpack.c.l.b16 %v210
      %v442 = vunpack.c.l.b16 %v211
      %v443 = vunpack.c.l.b16 %v212
      %v444 = vunpack.c.l.b16 %v213
      %v445 = vunpack.c.l.b16 %v214
      %v446 = vunpack.c.l.b16 %v215
      %v447 = vunpack.c.l.b16 %v216
      %v448 = vunpack.c.l.b16 %v217
      %v449 = vunpack.c.l.b16 %v218
      %v450 = vunpack.c.l.b16 %v219
      %v451 = vunpack.c.l.b16 %v220
      %v452 = vunpack.c.l.b16 %v221
      %v453 = vunpack.c.l.b16 %v222
      %v454 = vunpack.c.l.b16 %v223
      %v455 = vunpack.c.l.b16 %v224
      %v456 = vunpack.c.l.b16 %v225
      %v457 = vunpack.c.l.b16 %v226
      %v458 = vunpack.c.l.b16 %v227
      %v459 = vunpack.c.l.b16 %v228
      %v460 = vunpack.c.l.b16 %v229
      %v461 = vunpack.c.l.b16 %v230
      %v462 = vunpack.c.l.b16 %v231
      %v463 = vunpack.c.l.b16 %v232
      %v464 = vunpack.c.l.b16 %v233
      %v465 = vunpack.c.l.b16 %v234
      %v466 = vunpack.c.l.b16 %v235
      %v467 = vunpack.c.l.b16 %v236
      %v468 = vunpack.c.l.b16 %v237
      %v469 = vunpack.c.l.b16 %v238
      %v470 = vunpack.c.l.b16 %v239
      %v471 = vunpack.c.l.b16 %v240
      %v472 = vunpack.c.l.b16 %v241
      %v473 = vpack.c.b16 %v442, %v441
      %v474 = vpack.c.b16 %v444, %v443
      %v475 = vpack.c.b16 %v446, %v445
      %v476 = vpack.c.b16 %v448, %v447
      %v477 = vpack.c.b16 %v450, %v449
      %v478 = vpack.c.b16 %v452, %v451
      %v479 = vpack.c.b16 %v454, %v453
      %v480 = vpack.c.b16 %v456, %v455
      %v481 = vpack.c.b16 %v458, %v457
      %v482 = vpack.c.b16 %v460, %v459
      %v483 = vpack.c.b16 %v462, %v461
      %v484 = vpack.c.b16 %v464, %v463
      %v485 = vpack.c.b16 %v466, %v465
      %v486 = vpack.c.b16 %v468, %v467
      %v487 = vpack.c.b16 %v470, %v469
      %v488 = vpack.c.b16 %v472, %v471
      %505 = vmatprep.subr.bf16.mxu0 0
      %506 = vmatpush1.bf16.msra.mxu0 %v480
      %507 = vmatprep.subr.bf16.mxu0 0
      %508 = vmatpush1.bf16.msra.mxu0 %v479
      %509 = vmatprep.subr.bf16.mxu0 0
      %510 = vmatpush1.bf16.msra.mxu0 %v478
      %511 = vmatprep.subr.bf16.mxu0 0
      %512 = vmatpush1.bf16.msra.mxu0 %v477
      %513 = vmatprep.subr.bf16.mxu0 0
      %514 = vmatpush1.bf16.msra.mxu0 %v476
      %515 = vmatprep.subr.bf16.mxu0 0
      %516 = vmatpush1.bf16.msra.mxu0 %v475
      %517 = vmatprep.subr.bf16.mxu0 0
      %518 = vmatpush1.bf16.msra.mxu0 %v474
      %519 = vmatprep.subr.bf16.mxu0 0
      %520 = vmatpush1.bf16.msra.mxu0 %v473
      %521 = vmatprep.subr.bf16.mxu0 0
      %522 = vmatpush2.bf16.msra.mxu0 %v488
      %523 = vmatprep.subr.bf16.mxu0 0
      %524 = vmatpush2.bf16.msra.mxu0 %v487
      %525 = vmatprep.subr.bf16.mxu0 0
      %526 = vmatpush2.bf16.msra.mxu0 %v486
      %527 = vmatprep.subr.bf16.mxu0 0
      %528 = vmatpush2.bf16.msra.mxu0 %v485
      %529 = vmatprep.subr.bf16.mxu0 0
      %530 = vmatpush2.bf16.msra.mxu0 %v484
      %531 = vmatprep.subr.bf16.mxu0 0
      %532 = vmatpush2.bf16.msra.mxu0 %v483
      %533 = vmatprep.subr.bf16.mxu0 0
      %534 = vmatpush2.bf16.msra.mxu0 %v482
      %535 = vmatprep.subr.bf16.mxu0 0
      %536 = vmatpush2.bf16.msra.mxu0 %v481
      %537 = vmatprep.mubr.bf16.mxu0 %v346
      %538 = vmatmul.mubr.bf16.gmra.mxu0 %v345
      %v539 = vpop.f32.mrf.mxu0
      %v540 = vadd.f32 %v247, %v539
      %v541 = vpop.f32.mrf.mxu0
      %v542 = vpop.f32.mrf.mxu0
      %v543 = vadd.f32 %v247, %v542
      %v544 = vpop.f32.mrf.mxu0
      %545 = vmatprep.mubr.bf16.mxu0 %v348
      %546 = vmatmul.mubr.bf16.gmra.mxu0 %v347
      %v547 = vpop.f32.mrf.mxu0
      %v548 = vadd.f32 %v247, %v547
      %v549 = vpop.f32.mrf.mxu0
      %v550 = vpop.f32.mrf.mxu0
      %v551 = vadd.f32 %v247, %v550
      %v552 = vpop.f32.mrf.mxu0
      %553 = vmatprep.mubr.bf16.mxu0 %v350
      %554 = vmatmul.mubr.bf16.gmra.mxu0 %v349
      %v555 = vpop.f32.mrf.mxu0
      %v556 = vadd.f32 %v247, %v555
      %v557 = vpop.f32.mrf.mxu0
      %v558 = vpop.f32.mrf.mxu0
      %v559 = vadd.f32 %v247, %v558
      %v560 = vpop.f32.mrf.mxu0
      %561 = vmatprep.mubr.bf16.mxu0 %v352
      %562 = vmatmul.mubr.bf16.gmra.mxu0 %v351
      %v563 = vpop.f32.mrf.mxu0
      %v564 = vadd.f32 %v247, %v563
      %v565 = vpop.f32.mrf.mxu0
      %v566 = vpop.f32.mrf.mxu0
      %v567 = vadd.f32 %v247, %v566
      %v568 = vpop.f32.mrf.mxu0
      %569 = vmatprep.mubr.bf16.mxu0 %v354
      %570 = vmatmul.mubr.bf16.gmra.mxu0 %v353
      %v571 = vpop.f32.mrf.mxu0
      %v572 = vadd.f32 %v247, %v571
      %v573 = vpop.f32.mrf.mxu0
      %v574 = vpop.f32.mrf.mxu0
      %v575 = vadd.f32 %v247, %v574
      %v576 = vpop.f32.mrf.mxu0
      %577 = vmatprep.mubr.bf16.mxu0 %v356
      %578 = vmatmul.mubr.bf16.gmra.mxu0 %v355
      %v579 = vpop.f32.mrf.mxu0
      %v580 = vadd.f32 %v247, %v579
      %v581 = vpop.f32.mrf.mxu0
      %v582 = vpop.f32.mrf.mxu0
      %v583 = vadd.f32 %v247, %v582
      %v584 = vpop.f32.mrf.mxu0
      %585 = vmatprep.mubr.bf16.mxu0 %v358
      %586 = vmatmul.mubr.bf16.gmra.mxu0 %v357
      %v587 = vpop.f32.mrf.mxu0
      %v588 = vadd.f32 %v247, %v587
      %v589 = vpop.f32.mrf.mxu0
      %v590 = vpop.f32.mrf.mxu0
      %v591 = vadd.f32 %v247, %v590
      %v592 = vpop.f32.mrf.mxu0
      %593 = vmatprep.mubr.bf16.mxu0 %v360
      %594 = vmatmul.mubr.bf16.gmra.mxu0 %v359
      %v595 = vpop.f32.mrf.mxu0
      %v596 = vadd.f32 %v247, %v595
      %v597 = vpop.f32.mrf.mxu0
      %v598 = vpop.f32.mrf.mxu0
      %v599 = vadd.f32 %v247, %v598
      %v600 = vpop.f32.mrf.mxu0
      %601 = vmatprep.mubr.bf16.mxu0 %v362
      %602 = vmatmul.mubr.bf16.gmra.mxu0 %v361
      %v603 = vpop.f32.mrf.mxu0
      %v604 = vadd.f32 %v247, %v603
      %v605 = vpop.f32.mrf.mxu0
      %v606 = vpop.f32.mrf.mxu0
      %v607 = vadd.f32 %v247, %v606
      %v608 = vpop.f32.mrf.mxu0
      %609 = vmatprep.mubr.bf16.mxu0 %v364
      %610 = vmatmul.mubr.bf16.gmra.mxu0 %v363
      %v611 = vpop.f32.mrf.mxu0
      %v612 = vadd.f32 %v247, %v611
      %v613 = vpop.f32.mrf.mxu0
      %v614 = vpop.f32.mrf.mxu0
      %v615 = vadd.f32 %v247, %v614
      %v616 = vpop.f32.mrf.mxu0
      %617 = vmatprep.mubr.bf16.mxu0 %v366
      %618 = vmatmul.mubr.bf16.gmra.mxu0 %v365
      %v619 = vpop.f32.mrf.mxu0
      %v620 = vadd.f32 %v247, %v619
      %v621 = vpop.f32.mrf.mxu0
      %v622 = vpop.f32.mrf.mxu0
      %v623 = vadd.f32 %v247, %v622
      %v624 = vpop.f32.mrf.mxu0
      %625 = vmatprep.mubr.bf16.mxu0 %v368
      %626 = vmatmul.mubr.bf16.gmra.mxu0 %v367
      %v627 = vpop.f32.mrf.mxu0
      %v628 = vadd.f32 %v247, %v627
      %v629 = vpop.f32.mrf.mxu0
      %v630 = vpop.f32.mrf.mxu0
      %v631 = vadd.f32 %v247, %v630
      %v632 = vpop.f32.mrf.mxu0
      %633 = vmatprep.mubr.bf16.mxu0 %v370
      %634 = vmatmul.mubr.bf16.gmra.mxu0 %v369
      %v635 = vpop.f32.mrf.mxu0
      %v636 = vadd.f32 %v247, %v635
      %v637 = vpop.f32.mrf.mxu0
      %v638 = vpop.f32.mrf.mxu0
      %v639 = vadd.f32 %v247, %v638
      %v640 = vpop.f32.mrf.mxu0
      %641 = vmatprep.mubr.bf16.mxu0 %v372
      %642 = vmatmul.mubr.bf16.gmra.mxu0 %v371
      %v643 = vpop.f32.mrf.mxu0
      %v644 = vadd.f32 %v247, %v643
      %v645 = vpop.f32.mrf.mxu0
      %v646 = vpop.f32.mrf.mxu0
      %v647 = vadd.f32 %v247, %v646
      %v648 = vpop.f32.mrf.mxu0
      %649 = vmatprep.mubr.bf16.mxu0 %v374
      %650 = vmatmul.mubr.bf16.gmra.mxu0 %v373
      %v651 = vpop.f32.mrf.mxu0
      %v652 = vadd.f32 %v247, %v651
      %v653 = vpop.f32.mrf.mxu0
      %v654 = vpop.f32.mrf.mxu0
      %v655 = vadd.f32 %v247, %v654
      %v656 = vpop.f32.mrf.mxu0
      %657 = vmatprep.mubr.bf16.mxu0 %v376
      %658 = vmatmul.mubr.bf16.gmra.mxu0 %v375
      %v659 = vpop.f32.mrf.mxu0
      %v660 = vadd.f32 %v247, %v659
      %v661 = vpop.f32.mrf.mxu0
      %v662 = vpop.f32.mrf.mxu0
      %v663 = vadd.f32 %v247, %v662
      %v664 = vpop.f32.mrf.mxu0
      %665 = vdwg.mxu0
      %v666 = vmax.f32 %v540, 0.0
      %v667 = vmax.f32 %v543, 0.0
      %v668 = vmax.f32 %v548, 0.0
      %v669 = vmax.f32 %v551, 0.0
      %v670 = vmax.f32 %v556, 0.0
      %v671 = vmax.f32 %v559, 0.0
      %v672 = vmax.f32 %v564, 0.0
      %v673 = vmax.f32 %v567, 0.0
      %v674 = vmax.f32 %v572, 0.0
      %v675 = vmax.f32 %v575, 0.0
      %v676 = vmax.f32 %v580, 0.0
      %v677 = vmax.f32 %v583, 0.0
      %v678 = vmax.f32 %v588, 0.0
      %v679 = vmax.f32 %v591, 0.0
      %v680 = vmax.f32 %v596, 0.0
      %v681 = vmax.f32 %v599, 0.0
      %v682 = vmax.f32 %v604, 0.0
      %v683 = vmax.f32 %v607, 0.0
      %v684 = vmax.f32 %v612, 0.0
      %v685 = vmax.f32 %v615, 0.0
      %v686 = vmax.f32 %v620, 0.0
      %v687 = vmax.f32 %v623, 0.0
      %v688 = vmax.f32 %v628, 0.0
      %v689 = vmax.f32 %v631, 0.0
      %v690 = vmax.f32 %v636, 0.0
      %v691 = vmax.f32 %v639, 0.0
      %v692 = vmax.f32 %v644, 0.0
      %v693 = vmax.f32 %v647, 0.0
      %v694 = vmax.f32 %v652, 0.0
      %v695 = vmax.f32 %v655, 0.0
      %v696 = vmax.f32 %v660, 0.0
      %v697 = vmax.f32 %v663, 0.0
      %vm698 = vcmask 523264
      %699 = vst.msk [vmem:[%s175] sm:$0xff] %vm698, %v666
      %700 = vst.msk [vmem:[%s175 + $0x8] sm:$0xff] %vm698, %v667
      %701 = vst.msk [vmem:[%s175 + $0x10] sm:$0xff] %vm698, %v668
      %702 = vst.msk [vmem:[%s175 + $0x18] sm:$0xff] %vm698, %v669
      %703 = vst.msk [vmem:[%s175 + $0x20] sm:$0xff] %vm698, %v670
      %704 = vst.msk [vmem:[%s175 + $0x28] sm:$0xff] %vm698, %v671
      %705 = vst.msk [vmem:[%s175 + $0x30] sm:$0xff] %vm698, %v672
      %706 = vst.msk [vmem:[%s175 + $0x38] sm:$0xff] %vm698, %v673
      %707 = vst.msk [vmem:[%s175 + $0x40] sm:$0xff] %vm698, %v674
      %708 = vst.msk [vmem:[%s175 + $0x48] sm:$0xff] %vm698, %v675
      %709 = vst.msk [vmem:[%s175 + $0x50] sm:$0xff] %vm698, %v676
      %710 = vst.msk [vmem:[%s175 + $0x58] sm:$0xff] %vm698, %v677
      %711 = vst.msk [vmem:[%s175 + $0x60] sm:$0xff] %vm698, %v678
      %712 = vst.msk [vmem:[%s175 + $0x68] sm:$0xff] %vm698, %v679
      %713 = vst.msk [vmem:[%s175 + $0x70] sm:$0xff] %vm698, %v680
      %714 = vst.msk [vmem:[%s175 + $0x78] sm:$0xff] %vm698, %v681
      %715 = vst.msk [vmem:[%s175 + $0x80] sm:$0xff] %vm698, %v682
      %716 = vst.msk [vmem:[%s175 + $0x88] sm:$0xff] %vm698, %v683
      %717 = vst.msk [vmem:[%s175 + $0x90] sm:$0xff] %vm698, %v684
      %718 = vst.msk [vmem:[%s175 + $0x98] sm:$0xff] %vm698, %v685
      %719 = vst.msk [vmem:[%s175 + $0xa0] sm:$0xff] %vm698, %v686
      %720 = vst.msk [vmem:[%s175 + $0xa8] sm:$0xff] %vm698, %v687
      %721 = vst.msk [vmem:[%s175 + $0xb0] sm:$0xff] %vm698, %v688
      %722 = vst.msk [vmem:[%s175 + $0xb8] sm:$0xff] %vm698, %v689
      %723 = vst.msk [vmem:[%s175 + $0xc0] sm:$0xff] %vm698, %v690
      %724 = vst.msk [vmem:[%s175 + $0xc8] sm:$0xff] %vm698, %v691
      %725 = vst.msk [vmem:[%s175 + $0xd0] sm:$0xff] %vm698, %v692
      %726 = vst.msk [vmem:[%s175 + $0xd8] sm:$0xff] %vm698, %v693
      %727 = vst.msk [vmem:[%s175 + $0xe0] sm:$0xff] %vm698, %v694
      %728 = vst.msk [vmem:[%s175 + $0xe8] sm:$0xff] %vm698, %v695
      %729 = vst.msk [vmem:[%s175 + $0xf0] sm:$0xff] %vm698, %v696
      %730 = vst.msk [vmem:[%s175 + $0xf8] sm:$0xff] %vm698, %v697
      %s731 = smul.u32 32, %s14
      %p732 = scmp.lt.s32.totalorder %s731, 63
      %s733 = scalar_select %p732, %s731, 63
      %s734 = smul.addr %s733, 8
      %s735 = scalar_lea.vmem %s3, %s734
      // Predicated region
      $region33: #{client_model_forward.2} parent=31 // pred_check
        %p736 = pneg %p100
      $region34: #{client_model_forward.2} parent=31 // pred_check_branch
        %738 = sbr.rel (%p736) target = $region36
      $region35: #{client_model_forward.2} parent=31 // pred_region
        %s739 = smul.u32 32, %s14
      $region36: #{client_model_forward.2} parent=31 // pred_fallthru
        _
    $region32: #{client_model_forward.2} parent=5 // pred_fallthru
      _
    %p740 = scmp.le.s32.totalorder 2, %s9
    // Predicated region
    $region37: #{client_model_forward.2} parent=5 // pred_check
      %p741 = pneg %p740
    $region38: #{client_model_forward.2} parent=5 // pred_check_branch
      %743 = sbr.rel (%p741) target = $region40
    $region39: #{client_model_forward.2} parent=5 // pred_region
      %s744 = ssub.s32 %s9, 2
      // Predicated region
      $region41: #{client_model_forward.2} parent=39 // pred_check
        %p745 = pneg %p106
      $region42: #{client_model_forward.2} parent=39 // pred_check_branch
        %747 = sbr.rel (%p745) target = $region44
      $region43: #{client_model_forward.2} parent=39 // pred_region
        %s748 = smul.u32 32, %s15
        %p749 = scmp.lt.s32.totalorder %s748, 63
        %s750 = scalar_select %p749, %s748, 63
        %s751 = smul.addr %s750, 8
        %s752 = scalar_lea.vmem %s3, %s751
      $region44: #{client_model_forward.2} parent=39 // pred_fallthru
        _
    $region40: #{client_model_forward.2} parent=5 // pred_fallthru
      _
  $region6: #{client_model_forward.2} parent=0 // loop_footer
    %s13 = sadd.s32 1, %s9
  $region7: #{client_model_forward.2} parent=0 // loop_footer_branch
    %8 = sbr.rel target = $region3
  $region8: #{client_model_forward.2} parent=0 // loop_exit
    _

// kernel: client_model_forward.3
$region0: #{client_model_forward.3}
  #allocation0 [shape = 'u32[]', space=smem, size = 0x4, offset = 0x4, fixed_abs, tag = 'smem constant byte address 0x4 - core index']
  #allocation1 [shape = 'u32[144,128]{1,0:T(1,128)}', space=vmem, size = 0x12000, scoped, tag = 'internal scratch']
  #allocation2 [shape = 'f32[10,10,64]{2,1,0:T(8,128)}', space=vmem, size = 0x14000, scoped, tag = 'scratch operand']
  %s0 = inlined_call_operand.vmem [shape: f32[2,8,8,64], index: 0, kind: input, shape index: {}]
  %s1 = inlined_call_operand.vmem [shape: bf16[4,9,64,64], index: 1, kind: input, shape index: {}]
  %s2 = inlined_call_operand.vmem [shape: f32[4,1,64], index: 2, kind: input, shape index: {}]
  %s3 = inlined_call_operand.hbm [shape: f32[2,8,8,64], index: 3, kind: output, shape index: {}]
  %s4 = sld [smem:[#allocation0]]
  $region45: #{client_model_forward.3} parent=0
    _
  %s6 = ssub.s32 1, %s4
  %s7 = scalar_select 0, %s6, %s4
  $region1: #{client_model_forward.3} parent=0
    #allocation3 [shape = 'u8[65536]{0}', space=vmem, size = 0x10000, scoped, tag = 'output window, operand 0']
    #allocation4 [shape = 's32[2]{0}', space=sflag, size = 0x8, scoped, tag = 'scoped memory for client_model_forward.3']
    %8 = vsyncpa [#allocation4], 0
    %s9 = scalar_lea.sflag [#allocation4], 1
    %10 = vsyncpa %s9, 0
    loop: start=0, step=1, limit=4
    $region2: #{client_model_forward.3} parent=1 // loop_pre_header
      _
    $region3: #{client_model_forward.3} parent=1 // loop_header
      %s12 = sphi 0, %s16
      %p13 = scmp.ge.s32.totalorder %s12, 4
      %s22 = sphi 0, %s24
      %s25 = sphi 0, %s22
      %s26 = sphi 0, %s25
      %s42 = sphi 0, %s26
      %s46 = sphi 0, %s46
      %s48 = sphi 0, %s46
      %s49 = sphi 0, %s48
      %s63 = sphi 0, %s49
      %s67 = sphi 0, %s67
      %s69 = sphi 0, %s67
      %s70 = sphi 0, %s69
      %s84 = sphi 0, %s70
      %s90 = sphi 0, %s92
      %s93 = sphi 0, %s90
      %s94 = sphi 0, %s93
      %s110 = sphi 0, %s94
    $region4: #{client_model_forward.3} parent=1 // loop_header_branch
      %15 = sbr.rel (%p13) target = $region8
    $region5: #{client_model_forward.3} parent=1 // loop_body
      %s17 = ssub.s32 %s12, 1
      %s18 = ssub.s32 %s12, 2
      %s19 = sadd.s32 %s12, 1
      %s20 = ssub.s32 %s12, %s19
      %p21 = scmp.eq.s32.totalorder %s20, 0
      %s23 = sadd.s32 %s22, 1
      %s24 = scalar_select %p21, %s22, %s23
      %p27 = pneg %p21
      %p28 = scmp.eq.s32.totalorder %s12, 1
      %p29 = por %p27, %p28
      %p30 = scmp.ne.s32.totalorder %s22, %s25
      %p31 = scmp.eq.s32.totalorder %s12, 0
      %p32 = por %p30, %p31
      %p33 = scmp.ne.s32.totalorder %s22, %s25
      %p34 = scmp.eq.s32.totalorder %s17, 1
      %p35 = por %p33, %p34
      %p36 = scmp.ne.s32.totalorder %s25, %s26
      %p37 = scmp.eq.s32.totalorder %s17, 0
      %p38 = por %p36, %p37
      %p39 = scmp.ne.s32.totalorder %s25, %s26
      %p40 = scmp.eq.s32.totalorder %s18, 1
      %p41 = por %p39, %p40
      %p43 = scmp.ne.s32.totalorder %s26, %s42
      %p44 = scmp.eq.s32.totalorder %s18, 0
      %p45 = por %p43, %p44
      %s47 = sadd.s32 %s46, 1
      %p50 = scmp.eq.s32.totalorder %s12, 1
      %p51 = scmp.ne.s32.totalorder %s46, %s48
      %p52 = scmp.eq.s32.totalorder %s12, 0
      %p53 = por %p51, %p52
      %p54 = scmp.ne.s32.totalorder %s46, %s48
      %p55 = scmp.eq.s32.totalorder %s17, 1
      %p56 = por %p54, %p55
      %p57 = scmp.ne.s32.totalorder %s48, %s49
      %p58 = scmp.eq.s32.totalorder %s17, 0
      %p59 = por %p57, %p58
      %p60 = scmp.ne.s32.totalorder %s48, %s49
      %p61 = scmp.eq.s32.totalorder %s18, 1
      %p62 = por %p60, %p61
      %p64 = scmp.ne.s32.totalorder %s49, %s63
      %p65 = scmp.eq.s32.totalorder %s18, 0
      %p66 = por %p64, %p65
      %s68 = sadd.s32 %s67, 1
      %p71 = scmp.eq.s32.totalorder %s12, 1
      %p72 = scmp.ne.s32.totalorder %s67, %s69
      %p73 = scmp.eq.s32.totalorder %s12, 0
      %p74 = por %p72, %p73
      %p75 = scmp.ne.s32.totalorder %s67, %s69
      %p76 = scmp.eq.s32.totalorder %s17, 1
      %p77 = por %p75, %p76
      %p78 = scmp.ne.s32.totalorder %s69, %s70
      %p79 = scmp.eq.s32.totalorder %s17, 0
      %p80 = por %p78, %p79
      %p81 = scmp.ne.s32.totalorder %s69, %s70
      %p82 = scmp.eq.s32.totalorder %s18, 1
      %p83 = por %p81, %p82
      %p85 = scmp.ne.s32.totalorder %s70, %s84
      %p86 = scmp.eq.s32.totalorder %s18, 0
      %p87 = por %p85, %p86
      %s88 = ssub.s32 %s12, %s19
      %p89 = scmp.eq.s32.totalorder %s88, 0
      %s91 = sadd.s32 %s90, 1
      %s92 = scalar_select %p89, %s90, %s91
      %p95 = pneg %p89
      %p96 = scmp.eq.s32.totalorder %s12, 1
      %p97 = por %p95, %p96
      %p98 = scmp.ne.s32.totalorder %s90, %s93
      %p99 = scmp.eq.s32.totalorder %s12, 0
      %p100 = por %p98, %p99
      %p101 = scmp.ne.s32.totalorder %s90, %s93
      %p102 = scmp.eq.s32.totalorder %s17, 1
      %p103 = por %p101, %p102
      %p104 = scmp.ne.s32.totalorder %s93, %s94
      %p105 = scmp.eq.s32.totalorder %s17, 0
      %p106 = por %p104, %p105
      %p107 = scmp.ne.s32.totalorder %s93, %s94
      %p108 = scmp.eq.s32.totalorder %s18, 1
      %p109 = por %p107, %p108
      %p111 = scmp.ne.s32.totalorder %s94, %s110
      %p112 = scmp.eq.s32.totalorder %s18, 0
      %p113 = por %p111, %p112
      %p114 = scmp.le.s32.totalorder 1, %s12
      %p115 = scmp.lt.s32.totalorder %s12, 3
      %p116 = pnand %p114, %p115
      %p117 = pneg %p116
      // Predicated region
      $region9: #{client_model_forward.3} parent=5 // pred_check
        _
      $region10: #{client_model_forward.3} parent=5 // pred_check_branch
        %119 = sbr.rel (%p116) target = $region12
      $region11: #{client_model_forward.3} parent=5 // pred_region
        %s120 = ssub.s32 %s12, 1
        // Predicated region
        $region13: #{client_model_forward.3} parent=11 // pred_check
          %p121 = pneg %p59
        $region14: #{client_model_forward.3} parent=11 // pred_check_branch
          %123 = sbr.rel (%p121) target = $region16
        $region15: #{client_model_forward.3} parent=11 // pred_region
          _
        $region16: #{client_model_forward.3} parent=11 // pred_fallthru
          _
        // Predicated region
        $region17: #{client_model_forward.3} parent=11 // pred_check
          %p124 = pneg %p80
        $region18: #{client_model_forward.3} parent=11 // pred_check_branch
          %126 = sbr.rel (%p124) target = $region20
        $region19: #{client_model_forward.3} parent=11 // pred_region
          _
        $region20: #{client_model_forward.3} parent=11 // pred_fallthru
          _
      $region12: #{client_model_forward.3} parent=5 // pred_fallthru
        _
      %p127 = scmp.lt.s32.totalorder %s12, 2
      // Predicated region
      $region21: #{client_model_forward.3} parent=5 // pred_check
        %p128 = pneg %p127
      $region22: #{client_model_forward.3} parent=5 // pred_check_branch
        %130 = sbr.rel (%p128) target = $region24
      $region23: #{client_model_forward.3} parent=5 // pred_region
        // Predicated region
        $region25: #{client_model_forward.3} parent=23 // pred_check
          %p131 = pneg %p32
        $region26: #{client_model_forward.3} parent=23 // pred_check_branch
          %133 = sbr.rel (%p131) target = $region28
        $region27: #{client_model_forward.3} parent=23 // pred_region
          %p134 = scmp.lt.s32.totalorder %s12, 1
          %s135 = scalar_select %p134, %s12, 1
          %s136 = smul.addr %s135, 8
          %s137 = smul.addr %s136, 8
          %s138 = scalar_lea.vmem %s0, %s137
        $region28: #{client_model_forward.3} parent=23 // pred_fallthru
          _
      $region24: #{client_model_forward.3} parent=5 // pred_fallthru
        _
      %p139 = scmp.le.s32.totalorder 1, %s12
      %p140 = scmp.lt.s32.totalorder %s12, 3
      %p141 = pnand %p139, %p140
      %p142 = pneg %p141
      // Predicated region
      $region29: #{client_model_forward.3} parent=5 // pred_check
        _
      $region30: #{client_model_forward.3} parent=5 // pred_check_branch
        %144 = sbr.rel (%p141) target = $region32
      $region31: #{client_model_forward.3} parent=5 // pred_region
        %s145 = ssub.s32 %s12, 1
        %p146 = scmp.lt.s32.totalorder %s17, 1
        %s147 = scalar_select %p146, %s17, 1
        %s148 = smul.addr %s147, 8
        %s149 = smul.addr %s148, 8
        %s150 = scalar_lea.vmem %s0, %s149
        %p151 = pneg %p38
        %p152 = pneg %p35
        %p153 = pneg %p59
        %p154 = pneg %p56
        %p155 = pneg %p80
        %p156 = pneg %p77
        %p157 = pneg %p106
        %p158 = pneg %p103
        %s159 = sand.u32 %s93, 1
        %s160 = scalar_lea.sflag [#allocation4], %s159
        %s161 = sand.u32 %s93, 1
        %s162 = smul.addr %s161, 64
        %s163 = scalar_lea.vmem [#allocation3], %s162
        %p164 = scmp.lt.s32.totalorder %s17, 1
        %s165 = scalar_select %p164, %s17, 1
        %s166 = smul.addr %s165, 8
        %s167 = smul.addr %s166, 8
        %s168 = scalar_lea.vmem %s0, %s167
        %vm170 = vcmask 523264
        %171 = vst.msk [vmem:[#allocation2] sm:$0xff] %vm170, 0.0
        %vm172 = vcmask 517120
        %173 = vst.msk [vmem:[#allocation2 + $0x8] sm:$0x3] %vm172, 0.0
        %174 = vst.msk [vmem:[#allocation2 + $0x10] sm:$0xff] %vm170, 0.0
        %175 = vst.msk [vmem:[#allocation2 + $0x18] sm:$0x3] %vm172, 0.0
        %176 = vst.msk [vmem:[#allocation2 + $0x20] sm:$0xff] %vm170, 0.0
        %177 = vst.msk [vmem:[#allocation2 + $0x28] sm:$0x3] %vm172, 0.0
        %178 = vst.msk [vmem:[#allocation2 + $0x30] sm:$0xff] %vm170, 0.0
        %179 = vst.msk [vmem:[#allocation2 + $0x38] sm:$0x3] %vm172, 0.0
        %180 = vst.msk [vmem:[#allocation2 + $0x40] sm:$0xff] %vm170, 0.0
        %181 = vst.msk [vmem:[#allocation2 + $0x48] sm:$0x3] %vm172, 0.0
        %182 = vst.msk [vmem:[#allocation2 + $0x50] sm:$0xff] %vm170, 0.0
        %183 = vst.msk [vmem:[#allocation2 + $0x58] sm:$0x3] %vm172, 0.0
        %184 = vst.msk [vmem:[#allocation2 + $0x60] sm:$0xff] %vm170, 0.0
        %185 = vst.msk [vmem:[#allocation2 + $0x68] sm:$0x3] %vm172, 0.0
        %186 = vst.msk [vmem:[#allocation2 + $0x70] sm:$0xff] %vm170, 0.0
        %187 = vst.msk [vmem:[#allocation2 + $0x78] sm:$0x3] %vm172, 0.0
        %188 = vst.msk [vmem:[#allocation2 + $0x80] sm:$0xff] %vm170, 0.0
        %189 = vst.msk [vmem:[#allocation2 + $0x88] sm:$0x3] %vm172, 0.0
        %190 = vst.msk [vmem:[#allocation2 + $0x90] sm:$0xff] %vm170, 0.0
        %191 = vst.msk [vmem:[#allocation2 + $0x98] sm:$0x3] %vm172, 0.0
        %v192 = vld [vmem:[%s168] sm:$0xff]
        %v193 = vld [vmem:[%s168 + $0x8] sm:$0xff]
        %v194 = vld [vmem:[%s168 + $0x10] sm:$0xff]
        %v195 = vld [vmem:[%s168 + $0x18] sm:$0xff]
        %v196 = vld [vmem:[%s168 + $0x20] sm:$0xff]
        %v197 = vld [vmem:[%s168 + $0x28] sm:$0xff]
        %v198 = vld [vmem:[%s168 + $0x30] sm:$0xff]
        %v199 = vld [vmem:[%s168 + $0x38] sm:$0xff]
        %s200 = scalar_lea.vmem [#allocation2], 16
        %201 = vst.msk [vmem:[%s200 + $0x1] sm:$0xff] %vm170, %v192
        %202 = vst.msk [vmem:[%s200 + $0x11] sm:$0xff] %vm170, %v193
        %203 = vst.msk [vmem:[%s200 + $0x21] sm:$0xff] %vm170, %v194
        %204 = vst.msk [vmem:[%s200 + $0x31] sm:$0xff] %vm170, %v195
        %205 = vst.msk [vmem:[%s200 + $0x41] sm:$0xff] %vm170, %v196
        %206 = vst.msk [vmem:[%s200 + $0x51] sm:$0xff] %vm170, %v197
        %207 = vst.msk [vmem:[%s200 + $0x61] sm:$0xff] %vm170, %v198
        %208 = vst.msk [vmem:[%s200 + $0x71] sm:$0xff] %vm170, %v199
        %v209 = vld [vmem:[#allocation2] sm:$0xff]
        %v210 = vld [vmem:[#allocation2 + $0x10] sm:$0xff]
        %v211 = vld [vmem:[#allocation2 + $0x20] sm:$0xff]
        %v212 = vld [vmem:[#allocation2 + $0x30] sm:$0xff]
        %v213 = vld [vmem:[#allocation2 + $0x40] sm:$0xff]
        %v214 = vld [vmem:[#allocation2 + $0x50] sm:$0xff]
        %v215 = vld [vmem:[#allocation2 + $0x60] sm:$0xff]
        %v216 = vld [vmem:[#allocation2 + $0x70] sm:$0xff]
        %v217 = vpack.c.bf16 %v210, %v209
        %v218 = vpack.c.bf16 %v212, %v211
        %v219 = vpack.c.bf16 %v214, %v213
        %v220 = vpack.c.bf16 %v216, %v215
        %v221 = vld [vmem:[%s1] sm:$0xf]
        %v222 = vld [vmem:[%s1 + $0x4] sm:$0xf]
        %v223 = vld [vmem:[%s1 + $0x8] sm:$0xf]
        %v224 = vld [vmem:[%s1 + $0xc] sm:$0xf]
        %v225 = vld [vmem:[%s1 + $0x10] sm:$0xf]
        %v226 = vld [vmem:[%s1 + $0x14] sm:$0xf]
        %v227 = vld [vmem:[%s1 + $0x18] sm:$0xf]
        %v228 = vld [vmem:[%s1 + $0x1c] sm:$0xf]
        %v229 = vld [vmem:[#allocation2 + $0x1] sm:$0xff]
        %v230 = vld [vmem:[#allocation2 + $0x11] sm:$0xff]
        %v231 = vld [vmem:[#allocation2 + $0x21] sm:$0xff]
        %v232 = vld [vmem:[#allocation2 + $0x31] sm:$0xff]
        %v233 = vld [vmem:[#allocation2 + $0x41] sm:$0xff]
        %v234 = vld [vmem:[#allocation2 + $0x51] sm:$0xff]
        %v235 = vld [vmem:[#allocation2 + $0x61] sm:$0xff]
        %v236 = vld [vmem:[#allocation2 + $0x71] sm:$0xff]
        %v237 = vpack.c.bf16 %v230, %v229
        %v238 = vpack.c.bf16 %v232, %v231
        %v239 = vpack.c.bf16 %v234, %v233
        %v240 = vpack.c.bf16 %v236, %v235
        %s241 = scalar_lea.vmem %s1, 32
        %v242 = vld [vmem:[%s241] sm:$0xf]
        %v243 = vld [vmem:[%s241 + $0x4] sm:$0xf]
        %v244 = vld [vmem:[%s241 + $0x8] sm:$0xf]
        %v245 = vld [vmem:[%s241 + $0xc] sm:$0xf]
        %v246 = vld [vmem:[%s241 + $0x10] sm:$0xf]
        %v247 = vld [vmem:[%s241 + $0x14] sm:$0xf]
        %v248 = vld [vmem:[%s241 + $0x18] sm:$0xf]
        %v249 = vld [vmem:[%s241 + $0x1c] sm:$0xf]
        %v258 = vunpack.c.l.b16 %v242
        %v259 = vunpack.c.l.b16 %v243
        %v260 = vunpack.c.l.b16 %v244
        %v261 = vunpack.c.l.b16 %v245
        %v262 = vunpack.c.l.b16 %v246
        %v263 = vunpack.c.l.b16 %v247
        %v264 = vunpack.c.l.b16 %v248
        %v265 = vunpack.c.l.b16 %v249
        %v266 = vpack.c.b16 %v259, %v258
        %v267 = vpack.c.b16 %v261, %v260
        %v268 = vpack.c.b16 %v263, %v262
        %v269 = vpack.c.b16 %v265, %v264
        %v275 = vsel %vm170, %v237, 0
        %v278 = vsel %vm170, %v238, 0
        %v281 = vsel %vm170, %v239, 0
        %v284 = vsel %vm170, %v240, 0
        %286 = vmatprep.subr.bf16.mxu0 0
        %287 = vmatpush1.bf16.msra.mxu0 0
        %288 = vmatprep.subr.bf16.mxu0 0
        %289 = vmatpush1.bf16.msra.mxu0 0
        %290 = vmatprep.subr.bf16.mxu0 0
        %291 = vmatpush1.bf16.msra.mxu0 0
        %292 = vmatprep.subr.bf16.mxu0 0
        %293 = vmatpush1.bf16.msra.mxu0 0
        %294 = vmatprep.subr.bf16.mxu0 0
        %295 = vmatpush1.bf16.msra.mxu0 %v269
        %296 = vmatprep.subr.bf16.mxu0 0
        %297 = vmatpush1.bf16.msra.mxu0 %v268
        %298 = vmatprep.subr.bf16.mxu0 0
        %299 = vmatpush1.bf16.msra.mxu0 %v267
        %300 = vmatprep.subr.bf16.mxu0 0
        %301 = vmatpush1.bf16.msra.mxu0 %v266
        %302 = vmatprep.subr.bf16.mxu0 0
        %303 = vmatpush2.bf16.msra.mxu0 0
        %304 = vmatprep.subr.bf16.mxu0 0
        %305 = vmatpush2.bf16.msra.mxu0 0
        %306 = vmatprep.subr.bf16.mxu0 0
        %307 = vmatpush2.bf16.msra.mxu0 0
        %308 = vmatprep.subr.bf16.mxu0 0
        %309 = vmatpush2.bf16.msra.mxu0 0
        %310 = vmatprep.subr.bf16.mxu0 0
        %311 = vmatpush2.bf16.msra.mxu0 0
        %312 = vmatprep.subr.bf16.mxu0 0
        %313 = vmatpush2.bf16.msra.mxu0 0
        %314 = vmatprep.subr.bf16.mxu0 0
        %315 = vmatpush2.bf16.msra.mxu0 0
        %316 = vmatprep.subr.bf16.mxu0 0
        %317 = vmatpush2.bf16.msra.mxu0 0
        %318 = vmatprep.mubr.bf16.mxu0 0
        %319 = vmatmul.mubr.bf16.gmra.mxu0 %v275
        %v320 = vpop.f32.mrf.mxu0
        %v321 = vadd.f32 0.0, %v320
        %v322 = vpop.f32.mrf.mxu0
        %v323 = vpop.f32.mrf.mxu0
        %v324 = vadd.f32 0.0, %v323
        %v325 = vpop.f32.mrf.mxu0
        %326 = vmatprep.mubr.bf16.mxu0 0
        %327 = vmatmul.mubr.bf16.gmra.mxu0 %v278
        %v328 = vpop.f32.mrf.mxu0
        %v329 = vadd.f32 0.0, %v328
        %v330 = vpop.f32.mrf.mxu0
        %v331 = vpop.f32.mrf.mxu0
        %v332 = vadd.f32 0.0, %v331
        %v333 = vpop.f32.mrf.mxu0
        %334 = vmatprep.mubr.bf16.mxu0 0
        %335 = vmatmul.mubr.bf16.gmra.mxu0 %v281
        %v336 = vpop.f32.mrf.mxu0
        %v337 = vadd.f32 0.0, %v336
        %v338 = vpop.f32.mrf.mxu0
        %v339 = vpop.f32.mrf.mxu0
        %v340 = vadd.f32 0.0, %v339
        %v341 = vpop.f32.mrf.mxu0
        %342 = vmatprep.mubr.bf16.mxu0 0
        %343 = vmatmul.mubr.bf16.gmra.mxu0 %v284
        %v344 = vpop.f32.mrf.mxu0
        %v345 = vadd.f32 0.0, %v344
        %v346 = vpop.f32.mrf.mxu0
        %v347 = vpop.f32.mrf.mxu0
        %v348 = vadd.f32 0.0, %v347
        %v349 = vpop.f32.mrf.mxu0
        %350 = vdwg.mxu0
        %v359 = vunpack.c.l.b16 %v221
        %v360 = vunpack.c.l.b16 %v222
        %v361 = vunpack.c.l.b16 %v223
        %v362 = vunpack.c.l.b16 %v224
        %v363 = vunpack.c.l.b16 %v225
        %v364 = vunpack.c.l.b16 %v226
        %v365 = vunpack.c.l.b16 %v227
        %v366 = vunpack.c.l.b16 %v228
        %v367 = vpack.c.b16 %v360, %v359
        %v368 = vpack.c.b16 %v362, %v361
        %v369 = vpack.c.b16 %v364, %v363
        %v370 = vpack.c.b16 %v366, %v365
        %v376 = vsel %vm170, %v217, 0
        %v379 = vsel %vm170, %v218, 0
        %v382 = vsel %vm170, %v219, 0
        %v385 = vsel %vm170, %v220, 0
        %387 = vmatprep.subr.bf16.mxu0 0
        %388 = vmatpush1.bf16.msra.mxu0 0
        %389 = vmatprep.subr.bf16.mxu0 0
        %390 = vmatpush1.bf16.msra.mxu0 0
        %391 = vmatprep.subr.bf16.mxu0 0
        %392 = vmatpush1.bf16.msra.mxu0 0
        %393 = vmatprep.subr.bf16.mxu0 0
        %394 = vmatpush1.bf16.msra.mxu0 0
        %395 = vmatprep.subr.bf16.mxu0 0
        %396 = vmatpush1.bf16.msra.mxu0 %v370
        %397 = vmatprep.subr.bf16.mxu0 0
        %398 = vmatpush1.bf16.msra.mxu0 %v369
        %399 = vmatprep.subr.bf16.mxu0 0
        %400 = vmatpush1.bf16.msra.mxu0 %v368
        %401 = vmatprep.subr.bf16.mxu0 0
        %402 = vmatpush1.bf16.msra.mxu0 %v367
        %403 = vmatprep.subr.bf16.mxu0 0
        %404 = vmatpush2.bf16.msra.mxu0 0
        %405 = vmatprep.subr.bf16.mxu0 0
        %406 = vmatpush2.bf16.msra.mxu0 0
        %407 = vmatprep.subr.bf16.mxu0 0
        %408 = vmatpush2.bf16.msra.mxu0 0
        %409 = vmatprep.subr.bf16.mxu0 0
        %410 = vmatpush2.bf16.msra.mxu0 0
        %411 = vmatprep.subr.bf16.mxu0 0
        %412 = vmatpush2.bf16.msra.mxu0 0
        %413 = vmatprep.subr.bf16.mxu0 0
        %414 = vmatpush2.bf16.msra.mxu0 0
        %415 = vmatprep.subr.bf16.mxu0 0
        %416 = vmatpush2.bf16.msra.mxu0 0
        %417 = vmatprep.subr.bf16.mxu0 0
        %418 = vmatpush2.bf16.msra.mxu0 0
        %419 = vmatprep.mubr.bf16.mxu0 0
        %420 = vmatmul.mubr.bf16.gmra.mxu0 %v376
        %v421 = vpop.f32.mrf.mxu0
        %v422 = vadd.f32 %v321, %v421
        %v423 = vpop.f32.mrf.mxu0
        %v424 = vpop.f32.mrf.mxu0
        %v425 = vadd.f32 %v324, %v424
        %v426 = vpop.f32.mrf.mxu0
        %427 = vmatprep.mubr.bf16.mxu0 0
        %428 = vmatmul.mubr.bf16.gmra.mxu0 %v379
        %v429 = vpop.f32.mrf.mxu0
        %v430 = vadd.f32 %v329, %v429
        %v431 = vpop.f32.mrf.mxu0
        %v432 = vpop.f32.mrf.mxu0
        %v433 = vadd.f32 %v332, %v432
        %v434 = vpop.f32.mrf.mxu0
        %435 = vmatprep.mubr.bf16.mxu0 0
        %436 = vmatmul.mubr.bf16.gmra.mxu0 %v382
        %v437 = vpop.f32.mrf.mxu0
        %v438 = vadd.f32 %v337, %v437
        %v439 = vpop.f32.mrf.mxu0
        %v440 = vpop.f32.mrf.mxu0
        %v441 = vadd.f32 %v340, %v440
        %v442 = vpop.f32.mrf.mxu0
        %443 = vmatprep.mubr.bf16.mxu0 0
        %444 = vmatmul.mubr.bf16.gmra.mxu0 %v385
        %v445 = vpop.f32.mrf.mxu0
        %v446 = vadd.f32 %v345, %v445
        %v447 = vpop.f32.mrf.mxu0
        %v448 = vpop.f32.mrf.mxu0
        %v449 = vadd.f32 %v348, %v448
        %v450 = vpop.f32.mrf.mxu0
        %451 = vdwg.mxu0
        %v452 = vld [vmem:[#allocation2 + $0x2] sm:$0xff]
        %v453 = vld [vmem:[#allocation2 + $0x12] sm:$0xff]
        %v454 = vld [vmem:[#allocation2 + $0x22] sm:$0xff]
        %v455 = vld [vmem:[#allocation2 + $0x32] sm:$0xff]
        %v456 = vld [vmem:[#allocation2 + $0x42] sm:$0xff]
        %v457 = vld [vmem:[#allocation2 + $0x52] sm:$0xff]
        %v458 = vld [vmem:[#allocation2 + $0x62] sm:$0xff]
        %v459 = vld [vmem:[#allocation2 + $0x72] sm:$0xff]
        %v460 = vpack.c.bf16 %v453, %v452
        %v461 = vpack.c.bf16 %v455, %v454
        %v462 = vpack.c.bf16 %v457, %v456
        %v463 = vpack.c.bf16 %v459, %v458
        %s464 = scalar_lea.vmem %s1, 64
        %v465 = vld [vmem:[%s464] sm:$0xf]
        %v466 = vld [vmem:[%s464 + $0x4] sm:$0xf]
        %v467 = vld [vmem:[%s464 + $0x8] sm:$0xf]
        %v468 = vld [vmem:[%s464 + $0xc] sm:$0xf]
        %v469 = vld [vmem:[%s464 + $0x10] sm:$0xf]
        %v470 = vld [vmem:[%s464 + $0x14] sm:$0xf]
        %v471 = vld [vmem:[%s464 + $0x18] sm:$0xf]
        %v472 = vld [vmem:[%s464 + $0x1c] sm:$0xf]
        %v481 = vunpack.c.l.b16 %v465
        %v482 = vunpack.c.l.b16 %v466
        %v483 = vunpack.c.l.b16 %v467
        %v484 = vunpack.c.l.b16 %v468
        %v485 = vunpack.c.l.b16 %v469
        %v486 = vunpack.c.l.b16 %v470
        %v487 = vunpack.c.l.b16 %v471
        %v488 = vunpack.c.l.b16 %v472
        %v489 = vpack.c.b16 %v482, %v481
        %v490 = vpack.c.b16 %v484, %v483
        %v491 = vpack.c.b16 %v486, %v485
        %v492 = vpack.c.b16 %v488, %v487
        %v498 = vsel %vm170, %v460, 0
        %v501 = vsel %vm170, %v461, 0
        %v504 = vsel %vm170, %v462, 0
        %v507 = vsel %vm170, %v463, 0
        %509 = vmatprep.subr.bf16.mxu0 0
        %510 = vmatpush1.bf16.msra.mxu0 0
        %511 = vmatprep.subr.bf16.mxu0 0
        %512 = vmatpush1.bf16.msra.mxu0 0
        %513 = vmatprep.subr.bf16.mxu0 0
        %514 = vmatpush1.bf16.msra.mxu0 0
        %515 = vmatprep.subr.bf16.mxu0 0
        %516 = vmatpush1.bf16.msra.mxu0 0
        %517 = vmatprep.subr.bf16.mxu0 0
        %518 = vmatpush1.bf16.msra.mxu0 %v492
        %519 = vmatprep.subr.bf16.mxu0 0
        %520 = vmatpush1.bf16.msra.mxu0 %v491
        %521 = vmatprep.subr.bf16.mxu0 0
        %522 = vmatpush1.bf16.msra.mxu0 %v490
        %523 = vmatprep.subr.bf16.mxu0 0
        %524 = vmatpush1.bf16.msra.mxu0 %v489
        %525 = vmatprep.subr.bf16.mxu0 0
        %526 = vmatpush2.bf16.msra.mxu0 0
        %527 = vmatprep.subr.bf16.mxu0 0
        %528 = vmatpush2.bf16.msra.mxu0 0
        %529 = vmatprep.subr.bf16.mxu0 0
        %530 = vmatpush2.bf16.msra.mxu0 0
        %531 = vmatprep.subr.bf16.mxu0 0
        %532 = vmatpush2.bf16.msra.mxu0 0
        %533 = vmatprep.subr.bf16.mxu0 0
        %534 = vmatpush2.bf16.msra.mxu0 0
        %535 = vmatprep.subr.bf16.mxu0 0
        %536 = vmatpush2.bf16.msra.mxu0 0
        %537 = vmatprep.subr.bf16.mxu0 0
        %538 = vmatpush2.bf16.msra.mxu0 0
        %539 = vmatprep.subr.bf16.mxu0 0
        %540 = vmatpush2.bf16.msra.mxu0 0
        %541 = vmatprep.mubr.bf16.mxu0 0
        %542 = vmatmul.mubr.bf16.gmra.mxu0 %v498
        %v543 = vpop.f32.mrf.mxu0
        %v544 = vadd.f32 0.0, %v543
        %v545 = vpop.f32.mrf.mxu0
        %v546 = vpop.f32.mrf.mxu0
        %v547 = vadd.f32 0.0, %v546
        %v548 = vpop.f32.mrf.mxu0
        %549 = vmatprep.mubr.bf16.mxu0 0
        %550 = vmatmul.mubr.bf16.gmra.mxu0 %v501
        %v551 = vpop.f32.mrf.mxu0
        %v552 = vadd.f32 0.0, %v551
        %v553 = vpop.f32.mrf.mxu0
        %v554 = vpop.f32.mrf.mxu0
        %v555 = vadd.f32 0.0, %v554
        %v556 = vpop.f32.mrf.mxu0
        %557 = vmatprep.mubr.bf16.mxu0 0
        %558 = vmatmul.mubr.bf16.gmra.mxu0 %v504
        %v559 = vpop.f32.mrf.mxu0
        %v560 = vadd.f32 0.0, %v559
        %v561 = vpop.f32.mrf.mxu0
        %v562 = vpop.f32.mrf.mxu0
        %v563 = vadd.f32 0.0, %v562
        %v564 = vpop.f32.mrf.mxu0
        %565 = vmatprep.mubr.bf16.mxu0 0
        %566 = vmatmul.mubr.bf16.gmra.mxu0 %v507
        %v567 = vpop.f32.mrf.mxu0
        %v568 = vadd.f32 0.0, %v567
        %v569 = vpop.f32.mrf.mxu0
        %v570 = vpop.f32.mrf.mxu0
        %v571 = vadd.f32 0.0, %v570
        %v572 = vpop.f32.mrf.mxu0
        %573 = vdwg.mxu0
        %v574 = vadd.f32 %v422, %v544
        %v575 = vadd.f32 %v425, %v547
        %v576 = vadd.f32 %v430, %v552
        %v577 = vadd.f32 %v433, %v555
        %v578 = vadd.f32 %v438, %v560
        %v579 = vadd.f32 %v441, %v563
        %v580 = vadd.f32 %v446, %v568
        %v581 = vadd.f32 %v449, %v571
        %v582 = vld [vmem:[%s200] sm:$0xff]
        %v583 = vld [vmem:[%s200 + $0x10] sm:$0xff]
        %v584 = vld [vmem:[%s200 + $0x20] sm:$0xff]
        %v585 = vld [vmem:[%s200 + $0x30] sm:$0xff]
        %v586 = vld [vmem:[%s200 + $0x40] sm:$0xff]
        %v587 = vld [vmem:[%s200 + $0x50] sm:$0xff]
        %v588 = vld [vmem:[%s200 + $0x60] sm:$0xff]
        %v589 = vld [vmem:[%s200 + $0x70] sm:$0xff]
        %v590 = vpack.c.bf16 %v583, %v582
        %v591 = vpack.c.bf16 %v585, %v584
        %v592 = vpack.c.bf16 %v587, %v586
        %v593 = vpack.c.bf16 %v589, %v588
        %s594 = scalar_lea.vmem %s1, 96
        %v595 = vld [vmem:[%s594] sm:$0xf]
        %v596 = vld [vmem:[%s594 + $0x4] sm:$0xf]
        %v597 = vld [vmem:[%s594 + $0x8] sm:$0xf]
        %v598 = vld [vmem:[%s594 + $0xc] sm:$0xf]
        %v599 = vld [vmem:[%s594 + $0x10] sm:$0xf]
        %v600 = vld [vmem:[%s594 + $0x14] sm:$0xf]
        %v601 = vld [vmem:[%s594 + $0x18] sm:$0xf]
        %v602 = vld [vmem:[%s594 + $0x1c] sm:$0xf]
        %v611 = vunpack.c.l.b16 %v595
        %v612 = vunpack.c.l.b16 %v596
        %v613 = vunpack.c.l.b16 %v597
        %v614 = vunpack.c.l.b16 %v598
        %v615 = vunpack.c.l.b16 %v599
        %v616 = vunpack.c.l.b16 %v600
        %v617 = vunpack.c.l.b16 %v601
        %v618 = vunpack.c.l.b16 %v602
        %v619 = vpack.c.b16 %v612, %v611
        %v620 = vpack.c.b16 %v614, %v613
        %v621 = vpack.c.b16 %v616, %v615
        %v622 = vpack.c.b16 %v618, %v617
        %v628 = vsel %vm170, %v590, 0
        %v631 = vsel %vm170, %v591, 0
        %v634 = vsel %vm170, %v592, 0
        %v637 = vsel %vm170, %v593, 0
        %639 = vmatprep.subr.bf16.mxu0 0
        %640 = vmatpush1.bf16.msra.mxu0 0
        %641 = vmatprep.subr.bf16.mxu0 0
        %642 = vmatpush1.bf16.msra.mxu0 0
        %643 = vmatprep.subr.bf16.mxu0 0
        %644 = vmatpush1.bf16.msra.mxu0 0
        %645 = vmatprep.subr.bf16.mxu0 0
        %646 = vmatpush1.bf16.msra.mxu0 0
        %647 = vmatprep.subr.bf16.mxu0 0
        %648 = vmatpush1.bf16.msra.mxu0 %v622
        %649 = vmatprep.subr.bf16.mxu0 0
        %650 = vmatpush1.bf16.msra.mxu0 %v621
        %651 = vmatprep.subr.bf16.mxu0 0
        %652 = vmatpush1.bf16.msra.mxu0 %v620
        %653 = vmatprep.subr.bf16.mxu0 0
        %654 = vmatpush1.bf16.msra.mxu0 %v619
        %655 = vmatprep.subr.bf16.mxu0 0
        %656 = vmatpush2.bf16.msra.mxu0 0
        %657 = vmatprep.subr.bf16.mxu0 0
        %658 = vmatpush2.bf16.msra.mxu0 0
        %659 = vmatprep.subr.bf16.mxu0 0
        %660 = vmatpush2.bf16.msra.mxu0 0
        %661 = vmatprep.subr.bf16.mxu0 0
        %662 = vmatpush2.bf16.msra.mxu0 0
        %663 = vmatprep.subr.bf16.mxu0 0
        %664 = vmatpush2.bf16.msra.mxu0 0
        %665 = vmatprep.subr.bf16.mxu0 0
        %666 = vmatpush2.bf16.msra.mxu0 0
        %667 = vmatprep.subr.bf16.mxu0 0
        %668 = vmatpush2.bf16.msra.mxu0 0
        %669 = vmatprep.subr.bf16.mxu0 0
        %670 = vmatpush2.bf16.msra.mxu0 0
        %671 = vmatprep.mubr.bf16.mxu0 0
        %672 = vmatmul.mubr.bf16.gmra.mxu0 %v628
        %v673 = vpop.f32.mrf.mxu0
        %v674 = vadd.f32 0.0, %v673
        %v675 = vpop.f32.mrf.mxu0
        %v676 = vpop.f32.mrf.mxu0
        %v677 = vadd.f32 0.0, %v676
        %v678 = vpop.f32.mrf.mxu0
        %679 = vmatprep.mubr.bf16.mxu0 0
        %680 = vmatmul.mubr.bf16.gmra.mxu0 %v631
        %v681 = vpop.f32.mrf.mxu0
        %v682 = vadd.f32 0.0, %v681
        %v683 = vpop.f32.mrf.mxu0
        %v684 = vpop.f32.mrf.mxu0
        %v685 = vadd.f32 0.0, %v684
        %v686 = vpop.f32.mrf.mxu0
        %687 = vmatprep.mubr.bf16.mxu0 0
        %688 = vmatmul.mubr.bf16.gmra.mxu0 %v634
        %v689 = vpop.f32.mrf.mxu0
        %v690 = vadd.f32 0.0, %v689
        %v691 = vpop.f32.mrf.mxu0
        %v692 = vpop.f32.mrf.mxu0
        %v693 = vadd.f32 0.0, %v692
        %v694 = vpop.f32.mrf.mxu0
        %695 = vmatprep.mubr.bf16.mxu0 0
        %696 = vmatmul.mubr.bf16.gmra.mxu0 %v637
        %v697 = vpop.f32.mrf.mxu0
        %v698 = vadd.f32 0.0, %v697
        %v699 = vpop.f32.mrf.mxu0
        %v700 = vpop.f32.mrf.mxu0
        %v701 = vadd.f32 0.0, %v700
        %v702 = vpop.f32.mrf.mxu0
        %703 = vdwg.mxu0
        %v704 = vadd.f32 %v574, %v674
        %v705 = vadd.f32 %v575, %v677
        %v706 = vadd.f32 %v576, %v682
        %v707 = vadd.f32 %v577, %v685
        %v708 = vadd.f32 %v578, %v690
        %v709 = vadd.f32 %v579, %v693
        %v710 = vadd.f32 %v580, %v698
        %v711 = vadd.f32 %v581, %v701
        %v712 = vld [vmem:[%s200 + $0x1] sm:$0xff]
        %v713 = vld [vmem:[%s200 + $0x11] sm:$0xff]
        %v714 = vld [vmem:[%s200 + $0x21] sm:$0xff]
        %v715 = vld [vmem:[%s200 + $0x31] sm:$0xff]
        %v716 = vld [vmem:[%s200 + $0x41] sm:$0xff]
        %v717 = vld [vmem:[%s200 + $0x51] sm:$0xff]
        %v718 = vld [vmem:[%s200 + $0x61] sm:$0xff]
        %v719 = vld [vmem:[%s200 + $0x71] sm:$0xff]
        %v720 = vpack.c.bf16 %v713, %v712
        %v721 = vpack.c.bf16 %v715, %v714
        %v722 = vpack.c.bf16 %v717, %v716
        %v723 = vpack.c.bf16 %v719, %v718
        %s724 = scalar_lea.vmem %s1, 128
        %v725 = vld [vmem:[%s724] sm:$0xf]
        %v726 = vld [vmem:[%s724 + $0x4] sm:$0xf]
        %v727 = vld [vmem:[%s724 + $0x8] sm:$0xf]
        %v728 = vld [vmem:[%s724 + $0xc] sm:$0xf]
        %v729 = vld [vmem:[%s724 + $0x10] sm:$0xf]
        %v730 = vld [vmem:[%s724 + $0x14] sm:$0xf]
        %v731 = vld [vmem:[%s724 + $0x18] sm:$0xf]
        %v732 = vld [vmem:[%s724 + $0x1c] sm:$0xf]
        %v741 = vunpack.c.l.b16 %v725
        %v742 = vunpack.c.l.b16 %v726
        %v743 = vunpack.c.l.b16 %v727
        %v744 = vunpack.c.l.b16 %v728
        %v745 = vunpack.c.l.b16 %v729
        %v746 = vunpack.c.l.b16 %v730
        %v747 = vunpack.c.l.b16 %v731
        %v748 = vunpack.c.l.b16 %v732
        %v749 = vpack.c.b16 %v742, %v741
        %v750 = vpack.c.b16 %v744, %v743
        %v751 = vpack.c.b16 %v746, %v745
        %v752 = vpack.c.b16 %v748, %v747
        %v758 = vsel %vm170, %v720, 0
        %v761 = vsel %vm170, %v721, 0
        %v764 = vsel %vm170, %v722, 0
        %v767 = vsel %vm170, %v723, 0
        %769 = vmatprep.subr.bf16.mxu0 0
        %770 = vmatpush1.bf16.msra.mxu0 0
        %771 = vmatprep.subr.bf16.mxu0 0
        %772 = vmatpush1.bf16.msra.mxu0 0
        %773 = vmatprep.subr.bf16.mxu0 0
        %774 = vmatpush1.bf16.msra.mxu0 0
        %775 = vmatprep.subr.bf16.mxu0 0
        %776 = vmatpush1.bf16.msra.mxu0 0
        %777 = vmatprep.subr.bf16.mxu0 0
        %778 = vmatpush1.bf16.msra.mxu0 %v752
        %779 = vmatprep.subr.bf16.mxu0 0
        %780 = vmatpush1.bf16.msra.mxu0 %v751
        %781 = vmatprep.subr.bf16.mxu0 0
        %782 = vmatpush1.bf16.msra.mxu0 %v750
        %783 = vmatprep.subr.bf16.mxu0 0
        %784 = vmatpush1.bf16.msra.mxu0 %v749
        %785 = vmatprep.subr.bf16.mxu0 0
        %786 = vmatpush2.bf16.msra.mxu0 0
        %787 = vmatprep.subr.bf16.mxu0 0
        %788 = vmatpush2.bf16.msra.mxu0 0
        %789 = vmatprep.subr.bf16.mxu0 0
        %790 = vmatpush2.bf16.msra.mxu0 0
        %791 = vmatprep.subr.bf16.mxu0 0
        %792 = vmatpush2.bf16.msra.mxu0 0
        %793 = vmatprep.subr.bf16.mxu0 0
        %794 = vmatpush2.bf16.msra.mxu0 0
        %795 = vmatprep.subr.bf16.mxu0 0
        %796 = vmatpush2.bf16.msra.mxu0 0
        %797 = vmatprep.subr.bf16.mxu0 0
        %798 = vmatpush2.bf16.msra.mxu0 0
        %799 = vmatprep.subr.bf16.mxu0 0
        %800 = vmatpush2.bf16.msra.mxu0 0
        %801 = vmatprep.mubr.bf16.mxu0 0
        %802 = vmatmul.mubr.bf16.gmra.mxu0 %v758
        %v803 = vpop.f32.mrf.mxu0
        %v804 = vadd.f32 0.0, %v803
        %v805 = vpop.f32.mrf.mxu0
        %v806 = vpop.f32.mrf.mxu0
        %v807 = vadd.f32 0.0, %v806
        %v808 = vpop.f32.mrf.mxu0
        %809 = vmatprep.mubr.bf16.mxu0 0
        %810 = vmatmul.mubr.bf16.gmra.mxu0 %v761
        %v811 = vpop.f32.mrf.mxu0
        %v812 = vadd.f32 0.0, %v811
        %v813 = vpop.f32.mrf.mxu0
        %v814 = vpop.f32.mrf.mxu0
        %v815 = vadd.f32 0.0, %v814
        %v816 = vpop.f32.mrf.mxu0
        %817 = vmatprep.mubr.bf16.mxu0 0
        %818 = vmatmul.mubr.bf16.gmra.mxu0 %v764
        %v819 = vpop.f32.mrf.mxu0
        %v820 = vadd.f32 0.0, %v819
        %v821 = vpop.f32.mrf.mxu0
        %v822 = vpop.f32.mrf.mxu0
        %v823 = vadd.f32 0.0, %v822
        %v824 = vpop.f32.mrf.mxu0
        %825 = vmatprep.mubr.bf16.mxu0 0
        %826 = vmatmul.mubr.bf16.gmra.mxu0 %v767
        %v827 = vpop.f32.mrf.mxu0
        %v828 = vadd.f32 0.0, %v827
        %v829 = vpop.f32.mrf.mxu0
        %v830 = vpop.f32.mrf.mxu0
        %v831 = vadd.f32 0.0, %v830
        %v832 = vpop.f32.mrf.mxu0
        %833 = vdwg.mxu0
        %v834 = vadd.f32 %v704, %v804
        %v835 = vadd.f32 %v705, %v807
        %v836 = vadd.f32 %v706, %v812
        %v837 = vadd.f32 %v707, %v815
        %v838 = vadd.f32 %v708, %v820
        %v839 = vadd.f32 %v709, %v823
        %v840 = vadd.f32 %v710, %v828
        %v841 = vadd.f32 %v711, %v831
        %v842 = vld [vmem:[%s200 + $0x2] sm:$0xff]
        %v843 = vld [vmem:[%s200 + $0x12] sm:$0xff]
        %v844 = vld [vmem:[%s200 + $0x22] sm:$0xff]
        %v845 = vld [vmem:[%s200 + $0x32] sm:$0xff]
        %v846 = vld [vmem:[%s200 + $0x42] sm:$0xff]
        %v847 = vld [vmem:[%s200 + $0x52] sm:$0xff]
        %v848 = vld [vmem:[%s200 + $0x62] sm:$0xff]
        %v849 = vld [vmem:[%s200 + $0x72] sm:$0xff]
        %v850 = vpack.c.bf16 %v843, %v842
        %v851 = vpack.c.bf16 %v845, %v844
        %v852 = vpack.c.bf16 %v847, %v846
        %v853 = vpack.c.bf16 %v849, %v848
        %s854 = scalar_lea.vmem %s1, 160
        %v855 = vld [vmem:[%s854] sm:$0xf]
        %v856 = vld [vmem:[%s854 + $0x4] sm:$0xf]
        %v857 = vld [vmem:[%s854 + $0x8] sm:$0xf]
        %v858 = vld [vmem:[%s854 + $0xc] sm:$0xf]
        %v859 = vld [vmem:[%s854 + $0x10] sm:$0xf]
        %v860 = vld [vmem:[%s854 + $0x14] sm:$0xf]
        %v861 = vld [vmem:[%s854 + $0x18] sm:$0xf]
        %v862 = vld [vmem:[%s854 + $0x1c] sm:$0xf]
        %v871 = vunpack.c.l.b16 %v855
        %v872 = vunpack.c.l.b16 %v856
        %v873 = vunpack.c.l.b16 %v857
        %v874 = vunpack.c.l.b16 %v858
        %v875 = vunpack.c.l.b16 %v859
        %v876 = vunpack.c.l.b16 %v860
        %v877 = vunpack.c.l.b16 %v861
        %v878 = vunpack.c.l.b16 %v862
        %v879 = vpack.c.b16 %v872, %v871
        %v880 = vpack.c.b16 %v874, %v873
        %v881 = vpack.c.b16 %v876, %v875
        %v882 = vpack.c.b16 %v878, %v877
        %v888 = vsel %vm170, %v850, 0
        %v891 = vsel %vm170, %v851, 0
        %v894 = vsel %vm170, %v852, 0
        %v897 = vsel %vm170, %v853, 0
        %899 = vmatprep.subr.bf16.mxu0 0
        %900 = vmatpush1.bf16.msra.mxu0 0
        %901 = vmatprep.subr.bf16.mxu0 0
        %902 = vmatpush1.bf16.msra.mxu0 0
        %903 = vmatprep.subr.bf16.mxu0 0
        %904 = vmatpush1.bf16.msra.mxu0 0
        %905 = vmatprep.subr.bf16.mxu0 0
        %906 = vmatpush1.bf16.msra.mxu0 0
        %907 = vmatprep.subr.bf16.mxu0 0
        %908 = vmatpush1.bf16.msra.mxu0 %v882
        %909 = vmatprep.subr.bf16.mxu0 0
        %910 = vmatpush1.bf16.msra.mxu0 %v881
        %911 = vmatprep.subr.bf16.mxu0 0
        %912 = vmatpush1.bf16.msra.mxu0 %v880
        %913 = vmatprep.subr.bf16.mxu0 0
        %914 = vmatpush1.bf16.msra.mxu0 %v879
        %915 = vmatprep.subr.bf16.mxu0 0
        %916 = vmatpush2.bf16.msra.mxu0 0
        %917 = vmatprep.subr.bf16.mxu0 0
        %918 = vmatpush2.bf16.msra.mxu0 0
        %919 = vmatprep.subr.bf16.mxu0 0
        %920 = vmatpush2.bf16.msra.mxu0 0
        %921 = vmatprep.subr.bf16.mxu0 0
        %922 = vmatpush2.bf16.msra.mxu0 0
        %923 = vmatprep.subr.bf16.mxu0 0
        %924 = vmatpush2.bf16.msra.mxu0 0
        %925 = vmatprep.subr.bf16.mxu0 0
        %926 = vmatpush2.bf16.msra.mxu0 0
        %927 = vmatprep.subr.bf16.mxu0 0
        %928 = vmatpush2.bf16.msra.mxu0 0
        %929 = vmatprep.subr.bf16.mxu0 0
        %930 = vmatpush2.bf16.msra.mxu0 0
        %931 = vmatprep.mubr.bf16.mxu0 0
        %932 = vmatmul.mubr.bf16.gmra.mxu0 %v888
        %v933 = vpop.f32.mrf.mxu0
        %v934 = vadd.f32 0.0, %v933
        %v935 = vpop.f32.mrf.mxu0
        %v936 = vpop.f32.mrf.mxu0
        %v937 = vadd.f32 0.0, %v936
        %v938 = vpop.f32.mrf.mxu0
        %939 = vmatprep.mubr.bf16.mxu0 0
        %940 = vmatmul.mubr.bf16.gmra.mxu0 %v891
        %v941 = vpop.f32.mrf.mxu0
        %v942 = vadd.f32 0.0, %v941
        %v943 = vpop.f32.mrf.mxu0
        %v944 = vpop.f32.mrf.mxu0
        %v945 = vadd.f32 0.0, %v944
        %v946 = vpop.f32.mrf.mxu0
        %947 = vmatprep.mubr.bf16.mxu0 0
        %948 = vmatmul.mubr.bf16.gmra.mxu0 %v894
        %v949 = vpop.f32.mrf.mxu0
        %v950 = vadd.f32 0.0, %v949
        %v951 = vpop.f32.mrf.mxu0
        %v952 = vpop.f32.mrf.mxu0
        %v953 = vadd.f32 0.0, %v952
        %v954 = vpop.f32.mrf.mxu0
        %955 = vmatprep.mubr.bf16.mxu0 0
        %956 = vmatmul.mubr.bf16.gmra.mxu0 %v897
        %v957 = vpop.f32.mrf.mxu0
        %v958 = vadd.f32 0.0, %v957
        %v959 = vpop.f32.mrf.mxu0
        %v960 = vpop.f32.mrf.mxu0
        %v961 = vadd.f32 0.0, %v960
        %v962 = vpop.f32.mrf.mxu0
        %963 = vdwg.mxu0
        %v964 = vadd.f32 %v834, %v934
        %v965 = vadd.f32 %v835, %v937
        %v966 = vadd.f32 %v836, %v942
        %v967 = vadd.f32 %v837, %v945
        %v968 = vadd.f32 %v838, %v950
        %v969 = vadd.f32 %v839, %v953
        %v970 = vadd.f32 %v840, %v958
        %v971 = vadd.f32 %v841, %v961
        %s972 = scalar_lea.vmem [#allocation2], 32
        %v973 = vld [vmem:[%s972] sm:$0xff]
        %v974 = vld [vmem:[%s972 + $0x10] sm:$0xff]
        %v975 = vld [vmem:[%s972 + $0x20] sm:$0xff]
        %v976 = vld [vmem:[%s972 + $0x30] sm:$0xff]
        %v977 = vld [vmem:[%s972 + $0x40] sm:$0xff]
        %v978 = vld [vmem:[%s972 + $0x50] sm:$0xff]
        %v979 = vld [vmem:[%s972 + $0x60] sm:$0xff]
        %v980 = vld [vmem:[%s972 + $0x70] sm:$0xff]
        %v981 = vpack.c.bf16 %v974, %v973
        %v982 = vpack.c.bf16 %v976, %v975
        %v983 = vpack.c.bf16 %v978, %v977
        %v984 = vpack.c.bf16 %v980, %v979
        %s985 = scalar_lea.vmem %s1, 192
        %v986 = vld [vmem:[%s985] sm:$0xf]
        %v987 = vld [vmem:[%s985 + $0x4] sm:$0xf]
        %v988 = vld [vmem:[%s985 + $0x8] sm:$0xf]
        %v989 = vld [vmem:[%s985 + $0xc] sm:$0xf]
        %v990 = vld [vmem:[%s985 + $0x10] sm:$0xf]
        %v991 = vld [vmem:[%s985 + $0x14] sm:$0xf]
        %v992 = vld [vmem:[%s985 + $0x18] sm:$0xf]
        %v993 = vld [vmem:[%s985 + $0x1c] sm:$0xf]
        %v1002 = vunpack.c.l.b16 %v986
        %v1003 = vunpack.c.l.b16 %v987
        %v1004 = vunpack.c.l.b16 %v988
        %v1005 = vunpack.c.l.b16 %v989
        %v1006 = vunpack.c.l.b16 %v990
        %v1007 = vunpack.c.l.b16 %v991
        %v1008 = vunpack.c.l.b16 %v992
        %v1009 = vunpack.c.l.b16 %v993
        %v1010 = vpack.c.b16 %v1003, %v1002
        %v1011 = vpack.c.b16 %v1005, %v1004
        %v1012 = vpack.c.b16 %v1007, %v1006
        %v1013 = vpack.c.b16 %v1009, %v1008
        %v1019 = vsel %vm170, %v981, 0
        %v1022 = vsel %vm170, %v982, 0
        %v1025 = vsel %vm170, %v983, 0
        %v1028 = vsel %vm170, %v984, 0
        %1030 = vmatprep.subr.bf16.mxu0 0
        %1031 = vmatpush1.bf16.msra.mxu0 0
        %1032 = vmatprep.subr.bf16.mxu0 0
        %1033 = vmatpush1.bf16.msra.mxu0 0
        %1034 = vmatprep.subr.bf16.mxu0 0
        %1035 = vmatpush1.bf16.msra.mxu0 0
        %1036 = vmatprep.subr.bf16.mxu0 0
        %1037 = vmatpush1.bf16.msra.mxu0 0
        %1038 = vmatprep.subr.bf16.mxu0 0
        %1039 = vmatpush1.bf16.msra.mxu0 %v1013
        %1040 = vmatprep.subr.bf16.mxu0 0
        %1041 = vmatpush1.bf16.msra.mxu0 %v1012
        %1042 = vmatprep.subr.bf16.mxu0 0
        %1043 = vmatpush1.bf16.msra.mxu0 %v1011
        %1044 = vmatprep.subr.bf16.mxu0 0
        %1045 = vmatpush1.bf16.msra.mxu0 %v1010
        %1046 = vmatprep.subr.bf16.mxu0 0
        %1047 = vmatpush2.bf16.msra.mxu0 0
        %1048 = vmatprep.subr.bf16.mxu0 0
        %1049 = vmatpush2.bf16.msra.mxu0 0
        %1050 = vmatprep.subr.bf16.mxu0 0
        %1051 = vmatpush2.bf16.msra.mxu0 0
        %1052 = vmatprep.subr.bf16.mxu0 0
        %1053 = vmatpush2.bf16.msra.mxu0 0
        %1054 = vmatprep.subr.bf16.mxu0 0
        %1055 = vmatpush2.bf16.msra.mxu0 0
        %1056 = vmatprep.subr.bf16.mxu0 0
        %1057 = vmatpush2.bf16.msra.mxu0 0
        %1058 = vmatprep.subr.bf16.mxu0 0
        %1059 = vmatpush2.bf16.msra.mxu0 0
        %1060 = vmatprep.subr.bf16.mxu0 0
        %1061 = vmatpush2.bf16.msra.mxu0 0
        %1062 = vmatprep.mubr.bf16.mxu0 0
        %1063 = vmatmul.mubr.bf16.gmra.mxu0 %v1019
        %v1064 = vpop.f32.mrf.mxu0
        %v1065 = vadd.f32 0.0, %v1064
        %v1066 = vpop.f32.mrf.mxu0
        %v1067 = vpop.f32.mrf.mxu0
        %v1068 = vadd.f32 0.0, %v1067
        %v1069 = vpop.f32.mrf.mxu0
        %1070 = vmatprep.mubr.bf16.mxu0 0
        %1071 = vmatmul.mubr.bf16.gmra.mxu0 %v1022
        %v1072 = vpop.f32.mrf.mxu0
        %v1073 = vadd.f32 0.0, %v1072
        %v1074 = vpop.f32.mrf.mxu0
        %v1075 = vpop.f32.mrf.mxu0
        %v1076 = vadd.f32 0.0, %v1075
        %v1077 = vpop.f32.mrf.mxu0
        %1078 = vmatprep.mubr.bf16.mxu0 0
        %1079 = vmatmul.mubr.bf16.gmra.mxu0 %v1025
        %v1080 = vpop.f32.mrf.mxu0
        %v1081 = vadd.f32 0.0, %v1080
        %v1082 = vpop.f32.mrf.mxu0
        %v1083 = vpop.f32.mrf.mxu0
        %v1084 = vadd.f32 0.0, %v1083
        %v1085 = vpop.f32.mrf.mxu0
        %1086 = vmatprep.mubr.bf16.mxu0 0
        %1087 = vmatmul.mubr.bf16.gmra.mxu0 %v1028
        %v1088 = vpop.f32.mrf.mxu0
        %v1089 = vadd.f32 0.0, %v1088
        %v1090 = vpop.f32.mrf.mxu0
        %v1091 = vpop.f32.mrf.mxu0
        %v1092 = vadd.f32 0.0, %v1091
        %v1093 = vpop.f32.mrf.mxu0
        %1094 = vdwg.mxu0
        %v1095 = vadd.f32 %v964, %v1065
        %v1096 = vadd.f32 %v965, %v1068
        %v1097 = vadd.f32 %v966, %v1073
        %v1098 = vadd.f32 %v967, %v1076
        %v1099 = vadd.f32 %v968, %v1081
        %v1100 = vadd.f32 %v969, %v1084
        %v1101 = vadd.f32 %v970, %v1089
        %v1102 = vadd.f32 %v971, %v1092
        %v1103 = vld [vmem:[%s972 + $0x1] sm:$0xff]
        %v1104 = vld [vmem:[%s972 + $0x11] sm:$0xff]
        %v1105 = vld [vmem:[%s972 + $0x21] sm:$0xff]
        %v1106 = vld [vmem:[%s972 + $0x31] sm:$0xff]
        %v1107 = vld [vmem:[%s972 + $0x41] sm:$0xff]
        %v1108 = vld [vmem:[%s972 + $0x51] sm:$0xff]
        %v1109 = vld [vmem:[%s972 + $0x61] sm:$0xff]
        %v1110 = vld [vmem:[%s972 + $0x71] sm:$0xff]
        %v1111 = vpack.c.bf16 %v1104, %v1103
        %v1112 = vpack.c.bf16 %v1106, %v1105
        %v1113 = vpack.c.bf16 %v1108, %v1107
        %v1114 = vpack.c.bf16 %v1110, %v1109
        %s1115 = scalar_lea.vmem %s1, 224
        %v1116 = vld [vmem:[%s1115] sm:$0xf]
        %v1117 = vld [vmem:[%s1115 + $0x4] sm:$0xf]
        %v1118 = vld [vmem:[%s1115 + $0x8] sm:$0xf]
        %v1119 = vld [vmem:[%s1115 + $0xc] sm:$0xf]
        %v1120 = vld [vmem:[%s1115 + $0x10] sm:$0xf]
        %v1121 = vld [vmem:[%s1115 + $0x14] sm:$0xf]
        %v1122 = vld [vmem:[%s1115 + $0x18] sm:$0xf]
        %v1123 = vld [vmem:[%s1115 + $0x1c] sm:$0xf]
        %v1132 = vunpack.c.l.b16 %v1116
        %v1133 = vunpack.c.l.b16 %v1117
        %v1134 = vunpack.c.l.b16 %v1118
        %v1135 = vunpack.c.l.b16 %v1119
        %v1136 = vunpack.c.l.b16 %v1120
        %v1137 = vunpack.c.l.b16 %v1121
        %v1138 = vunpack.c.l.b16 %v1122
        %v1139 = vunpack.c.l.b16 %v1123
        %v1140 = vpack.c.b16 %v1133, %v1132
        %v1141 = vpack.c.b16 %v1135, %v1134
        %v1142 = vpack.c.b16 %v1137, %v1136
        %v1143 = vpack.c.b16 %v1139, %v1138
        %v1149 = vsel %vm170, %v1111, 0
        %v1152 = vsel %vm170, %v1112, 0
        %v1155 = vsel %vm170, %v1113, 0
        %v1158 = vsel %vm170, %v1114, 0
        %1160 = vmatprep.subr.bf16.mxu0 0
        %1161 = vmatpush1.bf16.msra.mxu0 0
        %1162 = vmatprep.subr.bf16.mxu0 0
        %1163 = vmatpush1.bf16.msra.mxu0 0
        %1164 = vmatprep.subr.bf16.mxu0 0
        %1165 = vmatpush1.bf16.msra.mxu0 0
        %1166 = vmatprep.subr.bf16.mxu0 0
        %1167 = vmatpush1.bf16.msra.mxu0 0
        %1168 = vmatprep.subr.bf16.mxu0 0
        %1169 = vmatpush1.bf16.msra.mxu0 %v1143
        %1170 = vmatprep.subr.bf16.mxu0 0
        %1171 = vmatpush1.bf16.msra.mxu0 %v1142
        %1172 = vmatprep.subr.bf16.mxu0 0
        %1173 = vmatpush1.bf16.msra.mxu0 %v1141
        %1174 = vmatprep.subr.bf16.mxu0 0
        %1175 = vmatpush1.bf16.msra.mxu0 %v1140
        %1176 = vmatprep.subr.bf16.mxu0 0
        %1177 = vmatpush2.bf16.msra.mxu0 0
        %1178 = vmatprep.subr.bf16.mxu0 0
        %1179 = vmatpush2.bf16.msra.mxu0 0
        %1180 = vmatprep.subr.bf16.mxu0 0
        %1181 = vmatpush2.bf16.msra.mxu0 0
        %1182 = vmatprep.subr.bf16.mxu0 0
        %1183 = vmatpush2.bf16.msra.mxu0 0
        %1184 = vmatprep.subr.bf16.mxu0 0
        %1185 = vmatpush2.bf16.msra.mxu0 0
        %1186 = vmatprep.subr.bf16.mxu0 0
        %1187 = vmatpush2.bf16.msra.mxu0 0
        %1188 = vmatprep.subr.bf16.mxu0 0
        %1189 = vmatpush2.bf16.msra.mxu0 0
        %1190 = vmatprep.subr.bf16.mxu0 0
        %1191 = vmatpush2.bf16.msra.mxu0 0
        %1192 = vmatprep.mubr.bf16.mxu0 0
        %1193 = vmatmul.mubr.bf16.gmra.mxu0 %v1149
        %v1194 = vpop.f32.mrf.mxu0
        %v1195 = vadd.f32 0.0, %v1194
        %v1196 = vpop.f32.mrf.mxu0
        %v1197 = vpop.f32.mrf.mxu0
        %v1198 = vadd.f32 0.0, %v1197
        %v1199 = vpop.f32.mrf.mxu0
        %1200 = vmatprep.mubr.bf16.mxu0 0
        %1201 = vmatmul.mubr.bf16.gmra.mxu0 %v1152
        %v1202 = vpop.f32.mrf.mxu0
        %v1203 = vadd.f32 0.0, %v1202
        %v1204 = vpop.f32.mrf.mxu0
        %v1205 = vpop.f32.mrf.mxu0
        %v1206 = vadd.f32 0.0, %v1205
        %v1207 = vpop.f32.mrf.mxu0
        %1208 = vmatprep.mubr.bf16.mxu0 0
        %1209 = vmatmul.mubr.bf16.gmra.mxu0 %v1155
        %v1210 = vpop.f32.mrf.mxu0
        %v1211 = vadd.f32 0.0, %v1210
        %v1212 = vpop.f32.mrf.mxu0
        %v1213 = vpop.f32.mrf.mxu0
        %v1214 = vadd.f32 0.0, %v1213
        %v1215 = vpop.f32.mrf.mxu0
        %1216 = vmatprep.mubr.bf16.mxu0 0
        %1217 = vmatmul.mubr.bf16.gmra.mxu0 %v1158
        %v1218 = vpop.f32.mrf.mxu0
        %v1219 = vadd.f32 0.0, %v1218
        %v1220 = vpop.f32.mrf.mxu0
        %v1221 = vpop.f32.mrf.mxu0
        %v1222 = vadd.f32 0.0, %v1221
        %v1223 = vpop.f32.mrf.mxu0
        %1224 = vdwg.mxu0
        %v1225 = vadd.f32 %v1095, %v1195
        %v1226 = vadd.f32 %v1096, %v1198
        %v1227 = vadd.f32 %v1097, %v1203
        %v1228 = vadd.f32 %v1098, %v1206
        %v1229 = vadd.f32 %v1099, %v1211
        %v1230 = vadd.f32 %v1100, %v1214
        %v1231 = vadd.f32 %v1101, %v1219
        %v1232 = vadd.f32 %v1102, %v1222
        %v1233 = vld [vmem:[%s972 + $0x2] sm:$0xff]
        %v1234 = vld [vmem:[%s972 + $0x12] sm:$0xff]
        %v1235 = vld [vmem:[%s972 + $0x22] sm:$0xff]
        %v1236 = vld [vmem:[%s972 + $0x32] sm:$0xff]
        %v1237 = vld [vmem:[%s972 + $0x42] sm:$0xff]
        %v1238 = vld [vmem:[%s972 + $0x52] sm:$0xff]
        %v1239 = vld [vmem:[%s972 + $0x62] sm:$0xff]
        %v1240 = vld [vmem:[%s972 + $0x72] sm:$0xff]
        %v1241 = vpack.c.bf16 %v1234, %v1233
        %v1242 = vpack.c.bf16 %v1236, %v1235
        %v1243 = vpack.c.bf16 %v1238, %v1237
        %v1244 = vpack.c.bf16 %v1240, %v1239
        %s1245 = scalar_lea.vmem %s1, 256
        %v1246 = vld [vmem:[%s1245] sm:$0xf]
        %v1247 = vld [vmem:[%s1245 + $0x4] sm:$0xf]
        %v1248 = vld [vmem:[%s1245 + $0x8] sm:$0xf]
        %v1249 = vld [vmem:[%s1245 + $0xc] sm:$0xf]
        %v1250 = vld [vmem:[%s1245 + $0x10] sm:$0xf]
        %v1251 = vld [vmem:[%s1245 + $0x14] sm:$0xf]
        %v1252 = vld [vmem:[%s1245 + $0x18] sm:$0xf]
        %v1253 = vld [vmem:[%s1245 + $0x1c] sm:$0xf]
        %v1262 = vunpack.c.l.b16 %v1246
        %v1263 = vunpack.c.l.b16 %v1247
        %v1264 = vunpack.c.l.b16 %v1248
        %v1265 = vunpack.c.l.b16 %v1249
        %v1266 = vunpack.c.l.b16 %v1250
        %v1267 = vunpack.c.l.b16 %v1251
        %v1268 = vunpack.c.l.b16 %v1252
        %v1269 = vunpack.c.l.b16 %v1253
        %v1270 = vpack.c.b16 %v1263, %v1262
        %v1271 = vpack.c.b16 %v1265, %v1264
        %v1272 = vpack.c.b16 %v1267, %v1266
        %v1273 = vpack.c.b16 %v1269, %v1268
        %v1279 = vsel %vm170, %v1241, 0
        %v1282 = vsel %vm170, %v1242, 0
        %v1285 = vsel %vm170, %v1243, 0
        %v1288 = vsel %vm170, %v1244, 0
        %1290 = vmatprep.subr.bf16.mxu0 0
        %1291 = vmatpush1.bf16.msra.mxu0 0
        %1292 = vmatprep.subr.bf16.mxu0 0
        %1293 = vmatpush1.bf16.msra.mxu0 0
        %1294 = vmatprep.subr.bf16.mxu0 0
        %1295 = vmatpush1.bf16.msra.mxu0 0
        %1296 = vmatprep.subr.bf16.mxu0 0
        %1297 = vmatpush1.bf16.msra.mxu0 0
        %1298 = vmatprep.subr.bf16.mxu0 0
        %1299 = vmatpush1.bf16.msra.mxu0 %v1273
        %1300 = vmatprep.subr.bf16.mxu0 0
        %1301 = vmatpush1.bf16.msra.mxu0 %v1272
        %1302 = vmatprep.subr.bf16.mxu0 0
        %1303 = vmatpush1.bf16.msra.mxu0 %v1271
        %1304 = vmatprep.subr.bf16.mxu0 0
        %1305 = vmatpush1.bf16.msra.mxu0 %v1270
        %1306 = vmatprep.subr.bf16.mxu0 0
        %1307 = vmatpush2.bf16.msra.mxu0 0
        %1308 = vmatprep.subr.bf16.mxu0 0
        %1309 = vmatpush2.bf16.msra.mxu0 0
        %1310 = vmatprep.subr.bf16.mxu0 0
        %1311 = vmatpush2.bf16.msra.mxu0 0
        %1312 = vmatprep.subr.bf16.mxu0 0
        %1313 = vmatpush2.bf16.msra.mxu0 0
        %1314 = vmatprep.subr.bf16.mxu0 0
        %1315 = vmatpush2.bf16.msra.mxu0 0
        %1316 = vmatprep.subr.bf16.mxu0 0
        %1317 = vmatpush2.bf16.msra.mxu0 0
        %1318 = vmatprep.subr.bf16.mxu0 0
        %1319 = vmatpush2.bf16.msra.mxu0 0
        %1320 = vmatprep.subr.bf16.mxu0 0
        %1321 = vmatpush2.bf16.msra.mxu0 0
        %1322 = vmatprep.mubr.bf16.mxu0 0
        %1323 = vmatmul.mubr.bf16.gmra.mxu0 %v1279
        %v1324 = vpop.f32.mrf.mxu0
        %v1325 = vadd.f32 0.0, %v1324
        %v1326 = vpop.f32.mrf.mxu0
        %v1327 = vpop.f32.mrf.mxu0
        %v1328 = vadd.f32 0.0, %v1327
        %v1329 = vpop.f32.mrf.mxu0
        %1330 = vmatprep.mubr.bf16.mxu0 0
        %1331 = vmatmul.mubr.bf16.gmra.mxu0 %v1282
        %v1332 = vpop.f32.mrf.mxu0
        %v1333 = vadd.f32 0.0, %v1332
        %v1334 = vpop.f32.mrf.mxu0
        %v1335 = vpop.f32.mrf.mxu0
        %v1336 = vadd.f32 0.0, %v1335
        %v1337 = vpop.f32.mrf.mxu0
        %1338 = vmatprep.mubr.bf16.mxu0 0
        %1339 = vmatmul.mubr.bf16.gmra.mxu0 %v1285
        %v1340 = vpop.f32.mrf.mxu0
        %v1341 = vadd.f32 0.0, %v1340
        %v1342 = vpop.f32.mrf.mxu0
        %v1343 = vpop.f32.mrf.mxu0
        %v1344 = vadd.f32 0.0, %v1343
        %v1345 = vpop.f32.mrf.mxu0
        %1346 = vmatprep.mubr.bf16.mxu0 0
        %1347 = vmatmul.mubr.bf16.gmra.mxu0 %v1288
        %v1348 = vpop.f32.mrf.mxu0
        %v1349 = vadd.f32 0.0, %v1348
        %v1350 = vpop.f32.mrf.mxu0
        %v1351 = vpop.f32.mrf.mxu0
        %v1352 = vadd.f32 0.0, %v1351
        %v1353 = vpop.f32.mrf.mxu0
        %1354 = vdwg.mxu0
        %v1355 = vadd.f32 %v1225, %v1325
        %v1356 = vadd.f32 %v1226, %v1328
        %v1357 = vadd.f32 %v1227, %v1333
        %v1358 = vadd.f32 %v1228, %v1336
        %v1359 = vadd.f32 %v1229, %v1341
        %v1360 = vadd.f32 %v1230, %v1344
        %v1361 = vadd.f32 %v1231, %v1349
        %v1362 = vadd.f32 %v1232, %v1352
        %v1363 = vld [vmem:[%s2] sm:$0x1]
        %v1365 = vlaneseq
        %v1366 = vshrl.u32 %v1365, 7
        %v1367 = vsub.s32 0, %v1366
        %v1368 = vrot.slane %v1363, %v1367
        %v1370 = vadd.f32 %v1355, %v1368
        %v1371 = vadd.f32 %v1356, %v1368
        %v1372 = vadd.f32 %v1357, %v1368
        %v1373 = vadd.f32 %v1358, %v1368
        %v1374 = vadd.f32 %v1359, %v1368
        %v1375 = vadd.f32 %v1360, %v1368
        %v1376 = vadd.f32 %v1361, %v1368
        %v1377 = vadd.f32 %v1362, %v1368
        %v1378 = vmax.f32 %v1370, 0.0
        %v1379 = vmax.f32 %v1371, 0.0
        %v1380 = vmax.f32 %v1372, 0.0
        %v1381 = vmax.f32 %v1373, 0.0
        %v1382 = vmax.f32 %v1374, 0.0
        %v1383 = vmax.f32 %v1375, 0.0
        %v1384 = vmax.f32 %v1376, 0.0
        %v1385 = vmax.f32 %v1377, 0.0
        %1386 = vst.msk [vmem:[%s200 + $0x1] sm:$0xff] %vm170, %v1378
        %1387 = vst.msk [vmem:[%s200 + $0x11] sm:$0xff] %vm170, %v1379
        %1388 = vst.msk [vmem:[%s200 + $0x21] sm:$0xff] %vm170, %v1380
        %1389 = vst.msk [vmem:[%s200 + $0x31] sm:$0xff] %vm170, %v1381
        %1390 = vst.msk [vmem:[%s200 + $0x41] sm:$0xff] %vm170, %v1382
        %1391 = vst.msk [vmem:[%s200 + $0x51] sm:$0xff] %vm170, %v1383
        %1392 = vst.msk [vmem:[%s200 + $0x61] sm:$0xff] %vm170, %v1384
        %1393 = vst.msk [vmem:[%s200 + $0x71] sm:$0xff] %vm170, %v1385
        %v1394 = vld [vmem:[#allocation2] sm:$0xff]
        %v1395 = vld [vmem:[#allocation2 + $0x10] sm:$0xff]
        %v1396 = vld [vmem:[#allocation2 + $0x20] sm:$0xff]
        %v1397 = vld [vmem:[#allocation2 + $0x30] sm:$0xff]
        %v1398 = vld [vmem:[#allocation2 + $0x40] sm:$0xff]
        %v1399 = vld [vmem:[#allocation2 + $0x50] sm:$0xff]
        %v1400 = vld [vmem:[#allocation2 + $0x60] sm:$0xff]
        %v1401 = vld [vmem:[#allocation2 + $0x70] sm:$0xff]
        %v1402 = vpack.c.bf16 %v1395, %v1394
        %v1403 = vpack.c.bf16 %v1397, %v1396
        %v1404 = vpack.c.bf16 %v1399, %v1398
        %v1405 = vpack.c.bf16 %v1401, %v1400
        %s1406 = scalar_lea.vmem %s1, 288
        %v1407 = vld [vmem:[%s1406] sm:$0xf]
        %v1408 = vld [vmem:[%s1406 + $0x4] sm:$0xf]
        %v1409 = vld [vmem:[%s1406 + $0x8] sm:$0xf]
        %v1410 = vld [vmem:[%s1406 + $0xc] sm:$0xf]
        %v1411 = vld [vmem:[%s1406 + $0x10] sm:$0xf]
        %v1412 = vld [vmem:[%s1406 + $0x14] sm:$0xf]
        %v1413 = vld [vmem:[%s1406 + $0x18] sm:$0xf]
        %v1414 = vld [vmem:[%s1406 + $0x1c] sm:$0xf]
        %v1415 = vld [vmem:[#allocation2 + $0x1] sm:$0xff]
        %v1416 = vld [vmem:[#allocation2 + $0x11] sm:$0xff]
        %v1417 = vld [vmem:[#allocation2 + $0x21] sm:$0xff]
        %v1418 = vld [vmem:[#allocation2 + $0x31] sm:$0xff]
        %v1419 = vld [vmem:[#allocation2 + $0x41] sm:$0xff]
        %v1420 = vld [vmem:[#allocation2 + $0x51] sm:$0xff]
        %v1421 = vld [vmem:[#allocation2 + $0x61] sm:$0xff]
        %v1422 = vld [vmem:[#allocation2 + $0x71] sm:$0xff]
        %v1423 = vpack.c.bf16 %v1416, %v1415
        %v1424 = vpack.c.bf16 %v1418, %v1417
        %v1425 = vpack.c.bf16 %v1420, %v1419
        %v1426 = vpack.c.bf16 %v1422, %v1421
        %s1427 = scalar_lea.vmem %s1, 320
        %v1428 = vld [vmem:[%s1427] sm:$0xf]
        %v1429 = vld [vmem:[%s1427 + $0x4] sm:$0xf]
        %v1430 = vld [vmem:[%s1427 + $0x8] sm:$0xf]
        %v1431 = vld [vmem:[%s1427 + $0xc] sm:$0xf]
        %v1432 = vld [vmem:[%s1427 + $0x10] sm:$0xf]
        %v1433 = vld [vmem:[%s1427 + $0x14] sm:$0xf]
        %v1434 = vld [vmem:[%s1427 + $0x18] sm:$0xf]
        %v1435 = vld [vmem:[%s1427 + $0x1c] sm:$0xf]
        %v1444 = vunpack.c.l.b16 %v1428
        %v1445 = vunpack.c.l.b16 %v1429
        %v1446 = vunpack.c.l.b16 %v1430
        %v1447 = vunpack.c.l.b16 %v1431
        %v1448 = vunpack.c.l.b16 %v1432
        %v1449 = vunpack.c.l.b16 %v1433
        %v1450 = vunpack.c.l.b16 %v1434
        %v1451 = vunpack.c.l.b16 %v1435
        %v1452 = vpack.c.b16 %v1445, %v1444
        %v1453 = vpack.c.b16 %v1447, %v1446
        %v1454 = vpack.c.b16 %v1449, %v1448
        %v1455 = vpack.c.b16 %v1451, %v1450
        %v1461 = vsel %vm170, %v1423, 0
        %v1464 = vsel %vm170, %v1424, 0
        %v1467 = vsel %vm170, %v1425, 0
        %v1470 = vsel %vm170, %v1426, 0
        %1472 = vmatprep.subr.bf16.mxu0 0
        %1473 = vmatpush1.bf16.msra.mxu0 0
        %1474 = vmatprep.subr.bf16.mxu0 0
        %1475 = vmatpush1.bf16.msra.mxu0 0
        %1476 = vmatprep.subr.bf16.mxu0 0
        %1477 = vmatpush1.bf16.msra.mxu0 0
        %1478 = vmatprep.subr.bf16.mxu0 0
        %1479 = vmatpush1.bf16.msra.mxu0 0
        %1480 = vmatprep.subr.bf16.mxu0 0
        %1481 = vmatpush1.bf16.msra.mxu0 %v1455
        %1482 = vmatprep.subr.bf16.mxu0 0
        %1483 = vmatpush1.bf16.msra.mxu0 %v1454
        %1484 = vmatprep.subr.bf16.mxu0 0
        %1485 = vmatpush1.bf16.msra.mxu0 %v1453
        %1486 = vmatprep.subr.bf16.mxu0 0
        %1487 = vmatpush1.bf16.msra.mxu0 %v1452
        %1488 = vmatprep.subr.bf16.mxu0 0
        %1489 = vmatpush2.bf16.msra.mxu0 0
        %1490 = vmatprep.subr.bf16.mxu0 0
        %1491 = vmatpush2.bf16.msra.mxu0 0
        %1492 = vmatprep.subr.bf16.mxu0 0
        %1493 = vmatpush2.bf16.msra.mxu0 0
        %1494 = vmatprep.subr.bf16.mxu0 0
        %1495 = vmatpush2.bf16.msra.mxu0 0
        %1496 = vmatprep.subr.bf16.mxu0 0
        %1497 = vmatpush2.bf16.msra.mxu0 0
        %1498 = vmatprep.subr.bf16.mxu0 0
        %1499 = vmatpush2.bf16.msra.mxu0 0
        %1500 = vmatprep.subr.bf16.mxu0 0
        %1501 = vmatpush2.bf16.msra.mxu0 0
        %1502 = vmatprep.subr.bf16.mxu0 0
        %1503 = vmatpush2.bf16.msra.mxu0 0
        %1504 = vmatprep.mubr.bf16.mxu0 0
        %1505 = vmatmul.mubr.bf16.gmra.mxu0 %v1461
        %v1506 = vpop.f32.mrf.mxu0
        %v1507 = vadd.f32 0.0, %v1506
        %v1508 = vpop.f32.mrf.mxu0
        %v1509 = vpop.f32.mrf.mxu0
        %v1510 = vadd.f32 0.0, %v1509
        %v1511 = vpop.f32.mrf.mxu0
        %1512 = vmatprep.mubr.bf16.mxu0 0
        %1513 = vmatmul.mubr.bf16.gmra.mxu0 %v1464
        %v1514 = vpop.f32.mrf.mxu0
        %v1515 = vadd.f32 0.0, %v1514
        %v1516 = vpop.f32.mrf.mxu0
        %v1517 = vpop.f32.mrf.mxu0
        %v1518 = vadd.f32 0.0, %v1517
        %v1519 = vpop.f32.mrf.mxu0
        %1520 = vmatprep.mubr.bf16.mxu0 0
        %1521 = vmatmul.mubr.bf16.gmra.mxu0 %v1467
        %v1522 = vpop.f32.mrf.mxu0
        %v1523 = vadd.f32 0.0, %v1522
        %v1524 = vpop.f32.mrf.mxu0
        %v1525 = vpop.f32.mrf.mxu0
        %v1526 = vadd.f32 0.0, %v1525
        %v1527 = vpop.f32.mrf.mxu0
        %1528 = vmatprep.mubr.bf16.mxu0 0
        %1529 = vmatmul.mubr.bf16.gmra.mxu0 %v1470
        %v1530 = vpop.f32.mrf.mxu0
        %v1531 = vadd.f32 0.0, %v1530
        %v1532 = vpop.f32.mrf.mxu0
        %v1533 = vpop.f32.mrf.mxu0
        %v1534 = vadd.f32 0.0, %v1533
        %v1535 = vpop.f32.mrf.mxu0
        %1536 = vdwg.mxu0
        %v1545 = vunpack.c.l.b16 %v1407
        %v1546 = vunpack.c.l.b16 %v1408
        %v1547 = vunpack.c.l.b16 %v1409
        %v1548 = vunpack.c.l.b16 %v1410
        %v1549 = vunpack.c.l.b16 %v1411
        %v1550 = vunpack.c.l.b16 %v1412
        %v1551 = vunpack.c.l.b16 %v1413
        %v1552 = vunpack.c.l.b16 %v1414
        %v1553 = vpack.c.b16 %v1546, %v1545
        %v1554 = vpack.c.b16 %v1548, %v1547
        %v1555 = vpack.c.b16 %v1550, %v1549
        %v1556 = vpack.c.b16 %v1552, %v1551
        %v1562 = vsel %vm170, %v1402, 0
        %v1565 = vsel %vm170, %v1403, 0
        %v1568 = vsel %vm170, %v1404, 0
        %v1571 = vsel %vm170, %v1405, 0
        %1573 = vmatprep.subr.bf16.mxu0 0
        %1574 = vmatpush1.bf16.msra.mxu0 0
        %1575 = vmatprep.subr.bf16.mxu0 0
        %1576 = vmatpush1.bf16.msra.mxu0 0
        %1577 = vmatprep.subr.bf16.mxu0 0
        %1578 = vmatpush1.bf16.msra.mxu0 0
        %1579 = vmatprep.subr.bf16.mxu0 0
        %1580 = vmatpush1.bf16.msra.mxu0 0
        %1581 = vmatprep.subr.bf16.mxu0 0
        %1582 = vmatpush1.bf16.msra.mxu0 %v1556
        %1583 = vmatprep.subr.bf16.mxu0 0
        %1584 = vmatpush1.bf16.msra.mxu0 %v1555
        %1585 = vmatprep.subr.bf16.mxu0 0
        %1586 = vmatpush1.bf16.msra.mxu0 %v1554
        %1587 = vmatprep.subr.bf16.mxu0 0
        %1588 = vmatpush1.bf16.msra.mxu0 %v1553
        %1589 = vmatprep.subr.bf16.mxu0 0
        %1590 = vmatpush2.bf16.msra.mxu0 0
        %1591 = vmatprep.subr.bf16.mxu0 0
        %1592 = vmatpush2.bf16.msra.mxu0 0
        %1593 = vmatprep.subr.bf16.mxu0 0
        %1594 = vmatpush2.bf16.msra.mxu0 0
        %1595 = vmatprep.subr.bf16.mxu0 0
        %1596 = vmatpush2.bf16.msra.mxu0 0
        %1597 = vmatprep.subr.bf16.mxu0 0
        %1598 = vmatpush2.bf16.msra.mxu0 0
        %1599 = vmatprep.subr.bf16.mxu0 0
        %1600 = vmatpush2.bf16.msra.mxu0 0
        %1601 = vmatprep.subr.bf16.mxu0 0
        %1602 = vmatpush2.bf16.msra.mxu0 0
        %1603 = vmatprep.subr.bf16.mxu0 0
        %1604 = vmatpush2.bf16.msra.mxu0 0
        %1605 = vmatprep.mubr.bf16.mxu0 0
        %1606 = vmatmul.mubr.bf16.gmra.mxu0 %v1562
        %v1607 = vpop.f32.mrf.mxu0
        %v1608 = vadd.f32 %v1507, %v1607
        %v1609 = vpop.f32.mrf.mxu0
        %v1610 = vpop.f32.mrf.mxu0
        %v1611 = vadd.f32 %v1510, %v1610
        %v1612 = vpop.f32.mrf.mxu0
        %1613 = vmatprep.mubr.bf16.mxu0 0
        %1614 = vmatmul.mubr.bf16.gmra.mxu0 %v1565
        %v1615 = vpop.f32.mrf.mxu0
        %v1616 = vadd.f32 %v1515, %v1615
        %v1617 = vpop.f32.mrf.mxu0
        %v1618 = vpop.f32.mrf.mxu0
        %v1619 = vadd.f32 %v1518, %v1618
        %v1620 = vpop.f32.mrf.mxu0
        %1621 = vmatprep.mubr.bf16.mxu0 0
        %1622 = vmatmul.mubr.bf16.gmra.mxu0 %v1568
        %v1623 = vpop.f32.mrf.mxu0
        %v1624 = vadd.f32 %v1523, %v1623
        %v1625 = vpop.f32.mrf.mxu0
        %v1626 = vpop.f32.mrf.mxu0
        %v1627 = vadd.f32 %v1526, %v1626
        %v1628 = vpop.f32.mrf.mxu0
        %1629 = vmatprep.mubr.bf16.mxu0 0
        %1630 = vmatmul.mubr.bf16.gmra.mxu0 %v1571
        %v1631 = vpop.f32.mrf.mxu0
        %v1632 = vadd.f32 %v1531, %v1631
        %v1633 = vpop.f32.mrf.mxu0
        %v1634 = vpop.f32.mrf.mxu0
        %v1635 = vadd.f32 %v1534, %v1634
        %v1636 = vpop.f32.mrf.mxu0
        %1637 = vdwg.mxu0
        %v1638 = vld [vmem:[#allocation2 + $0x2] sm:$0xff]
        %v1639 = vld [vmem:[#allocation2 + $0x12] sm:$0xff]
        %v1640 = vld [vmem:[#allocation2 + $0x22] sm:$0xff]
        %v1641 = vld [vmem:[#allocation2 + $0x32] sm:$0xff]
        %v1642 = vld [vmem:[#allocation2 + $0x42] sm:$0xff]
        %v1643 = vld [vmem:[#allocation2 + $0x52] sm:$0xff]
        %v1644 = vld [vmem:[#allocation2 + $0x62] sm:$0xff]
        %v1645 = vld [vmem:[#allocation2 + $0x72] sm:$0xff]
        %v1646 = vpack.c.bf16 %v1639, %v1638
        %v1647 = vpack.c.bf16 %v1641, %v1640
        %v1648 = vpack.c.bf16 %v1643, %v1642
        %v1649 = vpack.c.bf16 %v1645, %v1644
        %s1650 = scalar_lea.vmem %s1, 352
        %v1651 = vld [vmem:[%s1650] sm:$0xf]
        %v1652 = vld [vmem:[%s1650 + $0x4] sm:$0xf]
        %v1653 = vld [vmem:[%s1650 + $0x8] sm:$0xf]
        %v1654 = vld [vmem:[%s1650 + $0xc] sm:$0xf]
        %v1655 = vld [vmem:[%s1650 + $0x10] sm:$0xf]
        %v1656 = vld [vmem:[%s1650 + $0x14] sm:$0xf]
        %v1657 = vld [vmem:[%s1650 + $0x18] sm:$0xf]
        %v1658 = vld [vmem:[%s1650 + $0x1c] sm:$0xf]
        %v1667 = vunpack.c.l.b16 %v1651
        %v1668 = vunpack.c.l.b16 %v1652
        %v1669 = vunpack.c.l.b16 %v1653
        %v1670 = vunpack.c.l.b16 %v1654
        %v1671 = vunpack.c.l.b16 %v1655
        %v1672 = vunpack.c.l.b16 %v1656
        %v1673 = vunpack.c.l.b16 %v1657
        %v1674 = vunpack.c.l.b16 %v1658
        %v1675 = vpack.c.b16 %v1668, %v1667
        %v1676 = vpack.c.b16 %v1670, %v1669
        %v1677 = vpack.c.b16 %v1672, %v1671
        %v1678 = vpack.c.b16 %v1674, %v1673
        %v1684 = vsel %vm170, %v1646, 0
        %v1687 = vsel %vm170, %v1647, 0
        %v1690 = vsel %vm170, %v1648, 0
        %v1693 = vsel %vm170, %v1649, 0
        %1695 = vmatprep.subr.bf16.mxu0 0
        %1696 = vmatpush1.bf16.msra.mxu0 0
        %1697 = vmatprep.subr.bf16.mxu0 0
        %1698 = vmatpush1.bf16.msra.mxu0 0
        %1699 = vmatprep.subr.bf16.mxu0 0
        %1700 = vmatpush1.bf16.msra.mxu0 0
        %1701 = vmatprep.subr.bf16.mxu0 0
        %1702 = vmatpush1.bf16.msra.mxu0 0
        %1703 = vmatprep.subr.bf16.mxu0 0
        %1704 = vmatpush1.bf16.msra.mxu0 %v1678
        %1705 = vmatprep.subr.bf16.mxu0 0
        %1706 = vmatpush1.bf16.msra.mxu0 %v1677
        %1707 = vmatprep.subr.bf16.mxu0 0
        %1708 = vmatpush1.bf16.msra.mxu0 %v1676
        %1709 = vmatprep.subr.bf16.mxu0 0
        %1710 = vmatpush1.bf16.msra.mxu0 %v1675
        %1711 = vmatprep.subr.bf16.mxu0 0
        %1712 = vmatpush2.bf16.msra.mxu0 0
        %1713 = vmatprep.subr.bf16.mxu0 0
        %1714 = vmatpush2.bf16.msra.mxu0 0
        %1715 = vmatprep.subr.bf16.mxu0 0
        %1716 = vmatpush2.bf16.msra.mxu0 0
        %1717 = vmatprep.subr.bf16.mxu0 0
        %1718 = vmatpush2.bf16.msra.mxu0 0
        %1719 = vmatprep.subr.bf16.mxu0 0
        %1720 = vmatpush2.bf16.msra.mxu0 0
        %1721 = vmatprep.subr.bf16.mxu0 0
        %1722 = vmatpush2.bf16.msra.mxu0 0
        %1723 = vmatprep.subr.bf16.mxu0 0
        %1724 = vmatpush2.bf16.msra.mxu0 0
        %1725 = vmatprep.subr.bf16.mxu0 0
        %1726 = vmatpush2.bf16.msra.mxu0 0
        %1727 = vmatprep.mubr.bf16.mxu0 0
        %1728 = vmatmul.mubr.bf16.gmra.mxu0 %v1684
        %v1729 = vpop.f32.mrf.mxu0
        %v1730 = vadd.f32 0.0, %v1729
        %v1731 = vpop.f32.mrf.mxu0
        %v1732 = vpop.f32.mrf.mxu0
        %v1733 = vadd.f32 0.0, %v1732
        %v1734 = vpop.f32.mrf.mxu0
        %1735 = vmatprep.mubr.bf16.mxu0 0
        %1736 = vmatmul.mubr.bf16.gmra.mxu0 %v1687
        %v1737 = vpop.f32.mrf.mxu0
        %v1738 = vadd.f32 0.0, %v1737
        %v1739 = vpop.f32.mrf.mxu0
        %v1740 = vpop.f32.mrf.mxu0
        %v1741 = vadd.f32 0.0, %v1740
        %v1742 = vpop.f32.mrf.mxu0
        %1743 = vmatprep.mubr.bf16.mxu0 0
        %1744 = vmatmul.mubr.bf16.gmra.mxu0 %v1690
        %v1745 = vpop.f32.mrf.mxu0
        %v1746 = vadd.f32 0.0, %v1745
        %v1747 = vpop.f32.mrf.mxu0
        %v1748 = vpop.f32.mrf.mxu0
        %v1749 = vadd.f32 0.0, %v1748
        %v1750 = vpop.f32.mrf.mxu0
        %1751 = vmatprep.mubr.bf16.mxu0 0
        %1752 = vmatmul.mubr.bf16.gmra.mxu0 %v1693
        %v1753 = vpop.f32.mrf.mxu0
        %v1754 = vadd.f32 0.0, %v1753
        %v1755 = vpop.f32.mrf.mxu0
        %v1756 = vpop.f32.mrf.mxu0
        %v1757 = vadd.f32 0.0, %v1756
        %v1758 = vpop.f32.mrf.mxu0
        %1759 = vdwg.mxu0
        %v1760 = vadd.f32 %v1608, %v1730
        %v1761 = vadd.f32 %v1611, %v1733
        %v1762 = vadd.f32 %v1616, %v1738
        %v1763 = vadd.f32 %v1619, %v1741
        %v1764 = vadd.f32 %v1624, %v1746
        %v1765 = vadd.f32 %v1627, %v1749
        %v1766 = vadd.f32 %v1632, %v1754
        %v1767 = vadd.f32 %v1635, %v1757
        %v1768 = vld [vmem:[%s200] sm:$0xff]
        %v1769 = vld [vmem:[%s200 + $0x10] sm:$0xff]
        %v1770 = vld [vmem:[%s200 + $0x20] sm:$0xff]
        %v1771 = vld [vmem:[%s200 + $0x30] sm:$0xff]
        %v1772 = vld [vmem:[%s200 + $0x40] sm:$0xff]
        %v1773 = vld [vmem:[%s200 + $0x50] sm:$0xff]
        %v1774 = vld [vmem:[%s200 + $0x60] sm:$0xff]
        %v1775 = vld [vmem:[%s200 + $0x70] sm:$0xff]
        %v1776 = vpack.c.bf16 %v1769, %v1768
        %v1777 = vpack.c.bf16 %v1771, %v1770
        %v1778 = vpack.c.bf16 %v1773, %v1772
        %v1779 = vpack.c.bf16 %v1775, %v1774
        %s1780 = scalar_lea.vmem %s1, 384
        %v1781 = vld [vmem:[%s1780] sm:$0xf]
        %v1782 = vld [vmem:[%s1780 + $0x4] sm:$0xf]
        %v1783 = vld [vmem:[%s1780 + $0x8] sm:$0xf]
        %v1784 = vld [vmem:[%s1780 + $0xc] sm:$0xf]
        %v1785 = vld [vmem:[%s1780 + $0x10] sm:$0xf]
        %v1786 = vld [vmem:[%s1780 + $0x14] sm:$0xf]
        %v1787 = vld [vmem:[%s1780 + $0x18] sm:$0xf]
        %v1788 = vld [vmem:[%s1780 + $0x1c] sm:$0xf]
        %v1797 = vunpack.c.l.b16 %v1781
        %v1798 = vunpack.c.l.b16 %v1782
        %v1799 = vunpack.c.l.b16 %v1783
        %v1800 = vunpack.c.l.b16 %v1784
        %v1801 = vunpack.c.l.b16 %v1785
        %v1802 = vunpack.c.l.b16 %v1786
        %v1803 = vunpack.c.l.b16 %v1787
        %v1804 = vunpack.c.l.b16 %v1788
        %v1805 = vpack.c.b16 %v1798, %v1797
        %v1806 = vpack.c.b16 %v1800, %v1799
        %v1807 = vpack.c.b16 %v1802, %v1801
        %v1808 = vpack.c.b16 %v1804, %v1803
        %v1814 = vsel %vm170, %v1776, 0
        %v1817 = vsel %vm170, %v1777, 0
        %v1820 = vsel %vm170, %v1778, 0
        %v1823 = vsel %vm170, %v1779, 0
        %1825 = vmatprep.subr.bf16.mxu0 0
        %1826 = vmatpush1.bf16.msra.mxu0 0
        %1827 = vmatprep.subr.bf16.mxu0 0
        %1828 = vmatpush1.bf16.msra.mxu0 0
        %1829 = vmatprep.subr.bf16.mxu0 0
        %1830 = vmatpush1.bf16.msra.mxu0 0
        %1831 = vmatprep.subr.bf16.mxu0 0
        %1832 = vmatpush1.bf16.msra.mxu0 0
        %1833 = vmatprep.subr.bf16.mxu0 0
        %1834 = vmatpush1.bf16.msra.mxu0 %v1808
        %1835 = vmatprep.subr.bf16.mxu0 0
        %1836 = vmatpush1.bf16.msra.mxu0 %v1807
        %1837 = vmatprep.subr.bf16.mxu0 0
        %1838 = vmatpush1.bf16.msra.mxu0 %v1806
        %1839 = vmatprep.subr.bf16.mxu0 0
        %1840 = vmatpush1.bf16.msra.mxu0 %v1805
        %1841 = vmatprep.subr.bf16.mxu0 0
        %1842 = vmatpush2.bf16.msra.mxu0 0
        %1843 = vmatprep.subr.bf16.mxu0 0
        %1844 = vmatpush2.bf16.msra.mxu0 0
        %1845 = vmatprep.subr.bf16.mxu0 0
        %1846 = vmatpush2.bf16.msra.mxu0 0
        %1847 = vmatprep.subr.bf16.mxu0 0
        %1848 = vmatpush2.bf16.msra.mxu0 0
        %1849 = vmatprep.subr.bf16.mxu0 0
        %1850 = vmatpush2.bf16.msra.mxu0 0
        %1851 = vmatprep.subr.bf16.mxu0 0
        %1852 = vmatpush2.bf16.msra.mxu0 0
        %1853 = vmatprep.subr.bf16.mxu0 0
        %1854 = vmatpush2.bf16.msra.mxu0 0
        %1855 = vmatprep.subr.bf16.mxu0 0
        %1856 = vmatpush2.bf16.msra.mxu0 0
        %1857 = vmatprep.mubr.bf16.mxu0 0
        %1858 = vmatmul.mubr.bf16.gmra.mxu0 %v1814
        %v1859 = vpop.f32.mrf.mxu0
        %v1860 = vadd.f32 0.0, %v1859
        %v1861 = vpop.f32.mrf.mxu0
        %v1862 = vpop.f32.mrf.mxu0
        %v1863 = vadd.f32 0.0, %v1862
        %v1864 = vpop.f32.mrf.mxu0
        %1865 = vmatprep.mubr.bf16.mxu0 0
        %1866 = vmatmul.mubr.bf16.gmra.mxu0 %v1817
        %v1867 = vpop.f32.mrf.mxu0
        %v1868 = vadd.f32 0.0, %v1867
        %v1869 = vpop.f32.mrf.mxu0
        %v1870 = vpop.f32.mrf.mxu0
        %v1871 = vadd.f32 0.0, %v1870
        %v1872 = vpop.f32.mrf.mxu0
        %1873 = vmatprep.mubr.bf16.mxu0 0
        %1874 = vmatmul.mubr.bf16.gmra.mxu0 %v1820
        %v1875 = vpop.f32.mrf.mxu0
        %v1876 = vadd.f32 0.0, %v1875
        %v1877 = vpop.f32.mrf.mxu0
        %v1878 = vpop.f32.mrf.mxu0
        %v1879 = vadd.f32 0.0, %v1878
        %v1880 = vpop.f32.mrf.mxu0
        %1881 = vmatprep.mubr.bf16.mxu0 0
        %1882 = vmatmul.mubr.bf16.gmra.mxu0 %v1823
        %v1883 = vpop.f32.mrf.mxu0
        %v1884 = vadd.f32 0.0, %v1883
        %v1885 = vpop.f32.mrf.mxu0
        %v1886 = vpop.f32.mrf.mxu0
        %v1887 = vadd.f32 0.0, %v1886
        %v1888 = vpop.f32.mrf.mxu0
        %1889 = vdwg.mxu0
        %v1890 = vadd.f32 %v1760, %v1860
        %v1891 = vadd.f32 %v1761, %v1863
        %v1892 = vadd.f32 %v1762, %v1868
        %v1893 = vadd.f32 %v1763, %v1871
        %v1894 = vadd.f32 %v1764, %v1876
        %v1895 = vadd.f32 %v1765, %v1879
        %v1896 = vadd.f32 %v1766, %v1884
        %v1897 = vadd.f32 %v1767, %v1887
        %v1898 = vld [vmem:[%s200 + $0x1] sm:$0xff]
        %v1899 = vld [vmem:[%s200 + $0x11] sm:$0xff]
        %v1900 = vld [vmem:[%s200 + $0x21] sm:$0xff]
        %v1901 = vld [vmem:[%s200 + $0x31] sm:$0xff]
        %v1902 = vld [vmem:[%s200 + $0x41] sm:$0xff]
        %v1903 = vld [vmem:[%s200 + $0x51] sm:$0xff]
        %v1904 = vld [vmem:[%s200 + $0x61] sm:$0xff]
        %v1905 = vld [vmem:[%s200 + $0x71] sm:$0xff]
        %v1906 = vpack.c.bf16 %v1899, %v1898
        %v1907 = vpack.c.bf16 %v1901, %v1900
        %v1908 = vpack.c.bf16 %v1903, %v1902
        %v1909 = vpack.c.bf16 %v1905, %v1904
        %s1910 = scalar_lea.vmem %s1, 416
        %v1911 = vld [vmem:[%s1910] sm:$0xf]
        %v1912 = vld [vmem:[%s1910 + $0x4] sm:$0xf]
        %v1913 = vld [vmem:[%s1910 + $0x8] sm:$0xf]
        %v1914 = vld [vmem:[%s1910 + $0xc] sm:$0xf]
        %v1915 = vld [vmem:[%s1910 + $0x10] sm:$0xf]
        %v1916 = vld [vmem:[%s1910 + $0x14] sm:$0xf]
        %v1917 = vld [vmem:[%s1910 + $0x18] sm:$0xf]
        %v1918 = vld [vmem:[%s1910 + $0x1c] sm:$0xf]
        %v1927 = vunpack.c.l.b16 %v1911
        %v1928 = vunpack.c.l.b16 %v1912
        %v1929 = vunpack.c.l.b16 %v1913
        %v1930 = vunpack.c.l.b16 %v1914
        %v1931 = vunpack.c.l.b16 %v1915
        %v1932 = vunpack.c.l.b16 %v1916
        %v1933 = vunpack.c.l.b16 %v1917
        %v1934 = vunpack.c.l.b16 %v1918
        %v1935 = vpack.c.b16 %v1928, %v1927
        %v1936 = vpack.c.b16 %v1930, %v1929
        %v1937 = vpack.c.b16 %v1932, %v1931
        %v1938 = vpack.c.b16 %v1934, %v1933
        %v1944 = vsel %vm170, %v1906, 0
        %v1947 = vsel %vm170, %v1907, 0
        %v1950 = vsel %vm170, %v1908, 0
        %v1953 = vsel %vm170, %v1909, 0
        %1955 = vmatprep.subr.bf16.mxu0 0
        %1956 = vmatpush1.bf16.msra.mxu0 0
        %1957 = vmatprep.subr.bf16.mxu0 0
        %1958 = vmatpush1.bf16.msra.mxu0 0
        %1959 = vmatprep.subr.bf16.mxu0 0
        %1960 = vmatpush1.bf16.msra.mxu0 0
        %1961 = vmatprep.subr.bf16.mxu0 0
        %1962 = vmatpush1.bf16.msra.mxu0 0
        %1963 = vmatprep.subr.bf16.mxu0 0
        %1964 = vmatpush1.bf16.msra.mxu0 %v1938
        %1965 = vmatprep.subr.bf16.mxu0 0
        %1966 = vmatpush1.bf16.msra.mxu0 %v1937
        %1967 = vmatprep.subr.bf16.mxu0 0
        %1968 = vmatpush1.bf16.msra.mxu0 %v1936
        %1969 = vmatprep.subr.bf16.mxu0 0
        %1970 = vmatpush1.bf16.msra.mxu0 %v1935
        %1971 = vmatprep.subr.bf16.mxu0 0
        %1972 = vmatpush2.bf16.msra.mxu0 0
        %1973 = vmatprep.subr.bf16.mxu0 0
        %1974 = vmatpush2.bf16.msra.mxu0 0
        %1975 = vmatprep.subr.bf16.mxu0 0
        %1976 = vmatpush2.bf16.msra.mxu0 0
        %1977 = vmatprep.subr.bf16.mxu0 0
        %1978 = vmatpush2.bf16.msra.mxu0 0
        %1979 = vmatprep.subr.bf16.mxu0 0
        %1980 = vmatpush2.bf16.msra.mxu0 0
        %1981 = vmatprep.subr.bf16.mxu0 0
        %1982 = vmatpush2.bf16.msra.mxu0 0
        %1983 = vmatprep.subr.bf16.mxu0 0
        %1984 = vmatpush2.bf16.msra.mxu0 0
        %1985 = vmatprep.subr.bf16.mxu0 0
        %1986 = vmatpush2.bf16.msra.mxu0 0
        %1987 = vmatprep.mubr.bf16.mxu0 0
        %1988 = vmatmul.mubr.bf16.gmra.mxu0 %v1944
        %v1989 = vpop.f32.mrf.mxu0
        %v1990 = vadd.f32 0.0, %v1989
        %v1991 = vpop.f32.mrf.mxu0
        %v1992 = vpop.f32.mrf.mxu0
        %v1993 = vadd.f32 0.0, %v1992
        %v1994 = vpop.f32.mrf.mxu0
        %1995 = vmatprep.mubr.bf16.mxu0 0
        %1996 = vmatmul.mubr.bf16.gmra.mxu0 %v1947
        %v1997 = vpop.f32.mrf.mxu0
        %v1998 = vadd.f32 0.0, %v1997
        %v1999 = vpop.f32.mrf.mxu0
        %v2000 = vpop.f32.mrf.mxu0
        %v2001 = vadd.f32 0.0, %v2000
        %v2002 = vpop.f32.mrf.mxu0
        %2003 = vmatprep.mubr.bf16.mxu0 0
        %2004 = vmatmul.mubr.bf16.gmra.mxu0 %v1950
        %v2005 = vpop.f32.mrf.mxu0
        %v2006 = vadd.f32 0.0, %v2005
        %v2007 = vpop.f32.mrf.mxu0
        %v2008 = vpop.f32.mrf.mxu0
        %v2009 = vadd.f32 0.0, %v2008
        %v2010 = vpop.f32.mrf.mxu0
        %2011 = vmatprep.mubr.bf16.mxu0 0
        %2012 = vmatmul.mubr.bf16.gmra.mxu0 %v1953
        %v2013 = vpop.f32.mrf.mxu0
        %v2014 = vadd.f32 0.0, %v2013
        %v2015 = vpop.f32.mrf.mxu0
        %v2016 = vpop.f32.mrf.mxu0
        %v2017 = vadd.f32 0.0, %v2016
        %v2018 = vpop.f32.mrf.mxu0
        %2019 = vdwg.mxu0
        %v2020 = vadd.f32 %v1890, %v1990
        %v2021 = vadd.f32 %v1891, %v1993
        %v2022 = vadd.f32 %v1892, %v1998
        %v2023 = vadd.f32 %v1893, %v2001
        %v2024 = vadd.f32 %v1894, %v2006
        %v2025 = vadd.f32 %v1895, %v2009
        %v2026 = vadd.f32 %v1896, %v2014
        %v2027 = vadd.f32 %v1897, %v2017
        %v2028 = vld [vmem:[%s200 + $0x2] sm:$0xff]
        %v2029 = vld [vmem:[%s200 + $0x12] sm:$0xff]
        %v2030 = vld [vmem:[%s200 + $0x22] sm:$0xff]
        %v2031 = vld [vmem:[%s200 + $0x32] sm:$0xff]
        %v2032 = vld [vmem:[%s200 + $0x42] sm:$0xff]
        %v2033 = vld [vmem:[%s200 + $0x52] sm:$0xff]
        %v2034 = vld [vmem:[%s200 + $0x62] sm:$0xff]
        %v2035 = vld [vmem:[%s200 + $0x72] sm:$0xff]
        %v2036 = vpack.c.bf16 %v2029, %v2028
        %v2037 = vpack.c.bf16 %v2031, %v2030
        %v2038 = vpack.c.bf16 %v2033, %v2032
        %v2039 = vpack.c.bf16 %v2035, %v2034
        %s2040 = scalar_lea.vmem %s1, 448
        %v2041 = vld [vmem:[%s2040] sm:$0xf]
        %v2042 = vld [vmem:[%s2040 + $0x4] sm:$0xf]
        %v2043 = vld [vmem:[%s2040 + $0x8] sm:$0xf]
        %v2044 = vld [vmem:[%s2040 + $0xc] sm:$0xf]
        %v2045 = vld [vmem:[%s2040 + $0x10] sm:$0xf]
        %v2046 = vld [vmem:[%s2040 + $0x14] sm:$0xf]
        %v2047 = vld [vmem:[%s2040 + $0x18] sm:$0xf]
        %v2048 = vld [vmem:[%s2040 + $0x1c] sm:$0xf]
        %v2057 = vunpack.c.l.b16 %v2041
        %v2058 = vunpack.c.l.b16 %v2042
        %v2059 = vunpack.c.l.b16 %v2043
        %v2060 = vunpack.c.l.b16 %v2044
        %v2061 = vunpack.c.l.b16 %v2045
        %v2062 = vunpack.c.l.b16 %v2046
        %v2063 = vunpack.c.l.b16 %v2047
        %v2064 = vunpack.c.l.b16 %v2048
        %v2065 = vpack.c.b16 %v2058, %v2057
        %v2066 = vpack.c.b16 %v2060, %v2059
        %v2067 = vpack.c.b16 %v2062, %v2061
        %v2068 = vpack.c.b16 %v2064, %v2063
        %v2074 = vsel %vm170, %v2036, 0
        %v2077 = vsel %vm170, %v2037, 0
        %v2080 = vsel %vm170, %v2038, 0
        %v2083 = vsel %vm170, %v2039, 0
        %2085 = vmatprep.subr.bf16.mxu0 0
        %2086 = vmatpush1.bf16.msra.mxu0 0
        %2087 = vmatprep.subr.bf16.mxu0 0
        %2088 = vmatpush1.bf16.msra.mxu0 0
        %2089 = vmatprep.subr.bf16.mxu0 0
        %2090 = vmatpush1.bf16.msra.mxu0 0
        %2091 = vmatprep.subr.bf16.mxu0 0
        %2092 = vmatpush1.bf16.msra.mxu0 0
        %2093 = vmatprep.subr.bf16.mxu0 0
        %2094 = vmatpush1.bf16.msra.mxu0 %v2068
        %2095 = vmatprep.subr.bf16.mxu0 0
        %2096 = vmatpush1.bf16.msra.mxu0 %v2067
        %2097 = vmatprep.subr.bf16.mxu0 0
        %2098 = vmatpush1.bf16.msra.mxu0 %v2066
        %2099 = vmatprep.subr.bf16.mxu0 0
        %2100 = vmatpush1.bf16.msra.mxu0 %v2065
        %2101 = vmatprep.subr.bf16.mxu0 0
        %2102 = vmatpush2.bf16.msra.mxu0 0
        %2103 = vmatprep.subr.bf16.mxu0 0
        %2104 = vmatpush2.bf16.msra.mxu0 0
        %2105 = vmatprep.subr.bf16.mxu0 0
        %2106 = vmatpush2.bf16.msra.mxu0 0
        %2107 = vmatprep.subr.bf16.mxu0 0
        %2108 = vmatpush2.bf16.msra.mxu0 0
        %2109 = vmatprep.subr.bf16.mxu0 0
        %2110 = vmatpush2.bf16.msra.mxu0 0
        %2111 = vmatprep.subr.bf16.mxu0 0
        %2112 = vmatpush2.bf16.msra.mxu0 0
        %2113 = vmatprep.subr.bf16.mxu0 0
        %2114 = vmatpush2.bf16.msra.mxu0 0
        %2115 = vmatprep.subr.bf16.mxu0 0
        %2116 = vmatpush2.bf16.msra.mxu0 0
        %2117 = vmatprep.mubr.bf16.mxu0 0
        %2118 = vmatmul.mubr.bf16.gmra.mxu0 %v2074
        %v2119 = vpop.f32.mrf.mxu0
        %v2120 = vadd.f32 0.0, %v2119
        %v2121 = vpop.f32.mrf.mxu0
        %v2122 = vpop.f32.mrf.mxu0
        %v2123 = vadd.f32 0.0, %v2122
        %v2124 = vpop.f32.mrf.mxu0
        %2125 = vmatprep.mubr.bf16.mxu0 0
        %2126 = vmatmul.mubr.bf16.gmra.mxu0 %v2077
        %v2127 = vpop.f32.mrf.mxu0
        %v2128 = vadd.f32 0.0, %v2127
        %v2129 = vpop.f32.mrf.mxu0
        %v2130 = vpop.f32.mrf.mxu0
        %v2131 = vadd.f32 0.0, %v2130
        %v2132 = vpop.f32.mrf.mxu0
        %2133 = vmatprep.mubr.bf16.mxu0 0
        %2134 = vmatmul.mubr.bf16.gmra.mxu0 %v2080
        %v2135 = vpop.f32.mrf.mxu0
        %v2136 = vadd.f32 0.0, %v2135
        %v2137 = vpop.f32.mrf.mxu0
        %v2138 = vpop.f32.mrf.mxu0
        %v2139 = vadd.f32 0.0, %v2138
        %v2140 = vpop.f32.mrf.mxu0
        %2141 = vmatprep.mubr.bf16.mxu0 0
        %2142 = vmatmul.mubr.bf16.gmra.mxu0 %v2083
        %v2143 = vpop.f32.mrf.mxu0
        %v2144 = vadd.f32 0.0, %v2143
        %v2145 = vpop.f32.mrf.mxu0
        %v2146 = vpop.f32.mrf.mxu0
        %v2147 = vadd.f32 0.0, %v2146
        %v2148 = vpop.f32.mrf.mxu0
        %2149 = vdwg.mxu0
        %v2150 = vadd.f32 %v2020, %v2120
        %v2151 = vadd.f32 %v2021, %v2123
        %v2152 = vadd.f32 %v2022, %v2128
        %v2153 = vadd.f32 %v2023, %v2131
        %v2154 = vadd.f32 %v2024, %v2136
        %v2155 = vadd.f32 %v2025, %v2139
        %v2156 = vadd.f32 %v2026, %v2144
        %v2157 = vadd.f32 %v2027, %v2147
        %v2158 = vld [vmem:[%s972] sm:$0xff]
        %v2159 = vld [vmem:[%s972 + $0x10] sm:$0xff]
        %v2160 = vld [vmem:[%s972 + $0x20] sm:$0xff]
        %v2161 = vld [vmem:[%s972 + $0x30] sm:$0xff]
        %v2162 = vld [vmem:[%s972 + $0x40] sm:$0xff]
        %v2163 = vld [vmem:[%s972 + $0x50] sm:$0xff]
        %v2164 = vld [vmem:[%s972 + $0x60] sm:$0xff]
        %v2165 = vld [vmem:[%s972 + $0x70] sm:$0xff]
        %v2166 = vpack.c.bf16 %v2159, %v2158
        %v2167 = vpack.c.bf16 %v2161, %v2160
        %v2168 = vpack.c.bf16 %v2163, %v2162
        %v2169 = vpack.c.bf16 %v2165, %v2164
        %s2170 = scalar_lea.vmem %s1, 480
        %v2171 = vld [vmem:[%s2170] sm:$0xf]
        %v2172 = vld [vmem:[%s2170 + $0x4] sm:$0xf]
        %v2173 = vld [vmem:[%s2170 + $0x8] sm:$0xf]
        %v2174 = vld [vmem:[%s2170 + $0xc] sm:$0xf]
        %v2175 = vld [vmem:[%s2170 + $0x10] sm:$0xf]
        %v2176 = vld [vmem:[%s2170 + $0x14] sm:$0xf]
        %v2177 = vld [vmem:[%s2170 + $0x18] sm:$0xf]
        %v2178 = vld [vmem:[%s2170 + $0x1c] sm:$0xf]
        %v2187 = vunpack.c.l.b16 %v2171
        %v2188 = vunpack.c.l.b16 %v2172
        %v2189 = vunpack.c.l.b16 %v2173
        %v2190 = vunpack.c.l.b16 %v2174
        %v2191 = vunpack.c.l.b16 %v2175
        %v2192 = vunpack.c.l.b16 %v2176
        %v2193 = vunpack.c.l.b16 %v2177
        %v2194 = vunpack.c.l.b16 %v2178
        %v2195 = vpack.c.b16 %v2188, %v2187
        %v2196 = vpack.c.b16 %v2190, %v2189
        %v2197 = vpack.c.b16 %v2192, %v2191
        %v2198 = vpack.c.b16 %v2194, %v2193
        %v2204 = vsel %vm170, %v2166, 0
        %v2207 = vsel %vm170, %v2167, 0
        %v2210 = vsel %vm170, %v2168, 0
        %v2213 = vsel %vm170, %v2169, 0
        %2215 = vmatprep.subr.bf16.mxu0 0
        %2216 = vmatpush1.bf16.msra.mxu0 0
        %2217 = vmatprep.subr.bf16.mxu0 0
        %2218 = vmatpush1.bf16.msra.mxu0 0
        %2219 = vmatprep.subr.bf16.mxu0 0
        %2220 = vmatpush1.bf16.msra.mxu0 0
        %2221 = vmatprep.subr.bf16.mxu0 0
        %2222 = vmatpush1.bf16.msra.mxu0 0
        %2223 = vmatprep.subr.bf16.mxu0 0
        %2224 = vmatpush1.bf16.msra.mxu0 %v2198
        %2225 = vmatprep.subr.bf16.mxu0 0
        %2226 = vmatpush1.bf16.msra.mxu0 %v2197
        %2227 = vmatprep.subr.bf16.mxu0 0
        %2228 = vmatpush1.bf16.msra.mxu0 %v2196
        %2229 = vmatprep.subr.bf16.mxu0 0
        %2230 = vmatpush1.bf16.msra.mxu0 %v2195
        %2231 = vmatprep.subr.bf16.mxu0 0
        %2232 = vmatpush2.bf16.msra.mxu0 0
        %2233 = vmatprep.subr.bf16.mxu0 0
        %2234 = vmatpush2.bf16.msra.mxu0 0
        %2235 = vmatprep.subr.bf16.mxu0 0
        %2236 = vmatpush2.bf16.msra.mxu0 0
        %2237 = vmatprep.subr.bf16.mxu0 0
        %2238 = vmatpush2.bf16.msra.mxu0 0
        %2239 = vmatprep.subr.bf16.mxu0 0
        %2240 = vmatpush2.bf16.msra.mxu0 0
        %2241 = vmatprep.subr.bf16.mxu0 0
        %2242 = vmatpush2.bf16.msra.mxu0 0
        %2243 = vmatprep.subr.bf16.mxu0 0
        %2244 = vmatpush2.bf16.msra.mxu0 0
        %2245 = vmatprep.subr.bf16.mxu0 0
        %2246 = vmatpush2.bf16.msra.mxu0 0
        %2247 = vmatprep.mubr.bf16.mxu0 0
        %2248 = vmatmul.mubr.bf16.gmra.mxu0 %v2204
        %v2249 = vpop.f32.mrf.mxu0
        %v2250 = vadd.f32 0.0, %v2249
        %v2251 = vpop.f32.mrf.mxu0
        %v2252 = vpop.f32.mrf.mxu0
        %v2253 = vadd.f32 0.0, %v2252
        %v2254 = vpop.f32.mrf.mxu0
        %2255 = vmatprep.mubr.bf16.mxu0 0
        %2256 = vmatmul.mubr.bf16.gmra.mxu0 %v2207
        %v2257 = vpop.f32.mrf.mxu0
        %v2258 = vadd.f32 0.0, %v2257
        %v2259 = vpop.f32.mrf.mxu0
        %v2260 = vpop.f32.mrf.mxu0
        %v2261 = vadd.f32 0.0, %v2260
        %v2262 = vpop.f32.mrf.mxu0
        %2263 = vmatprep.mubr.bf16.mxu0 0
        %2264 = vmatmul.mubr.bf16.gmra.mxu0 %v2210
        %v2265 = vpop.f32.mrf.mxu0
        %v2266 = vadd.f32 0.0, %v2265
        %v2267 = vpop.f32.mrf.mxu0
        %v2268 = vpop.f32.mrf.mxu0
        %v2269 = vadd.f32 0.0, %v2268
        %v2270 = vpop.f32.mrf.mxu0
        %2271 = vmatprep.mubr.bf16.mxu0 0
        %2272 = vmatmul.mubr.bf16.gmra.mxu0 %v2213
        %v2273 = vpop.f32.mrf.mxu0
        %v2274 = vadd.f32 0.0, %v2273
        %v2275 = vpop.f32.mrf.mxu0
        %v2276 = vpop.f32.mrf.mxu0
        %v2277 = vadd.f32 0.0, %v2276
        %v2278 = vpop.f32.mrf.mxu0
        %2279 = vdwg.mxu0
        %v2280 = vadd.f32 %v2150, %v2250
        %v2281 = vadd.f32 %v2151, %v2253
        %v2282 = vadd.f32 %v2152, %v2258
        %v2283 = vadd.f32 %v2153, %v2261
        %v2284 = vadd.f32 %v2154, %v2266
        %v2285 = vadd.f32 %v2155, %v2269
        %v2286 = vadd.f32 %v2156, %v2274
        %v2287 = vadd.f32 %v2157, %v2277
        %v2288 = vld [vmem:[%s972 + $0x1] sm:$0xff]
        %v2289 = vld [vmem:[%s972 + $0x11] sm:$0xff]
        %v2290 = vld [vmem:[%s972 + $0x21] sm:$0xff]
        %v2291 = vld [vmem:[%s972 + $0x31] sm:$0xff]
        %v2292 = vld [vmem:[%s972 + $0x41] sm:$0xff]
        %v2293 = vld [vmem:[%s972 + $0x51] sm:$0xff]
        %v2294 = vld [vmem:[%s972 + $0x61] sm:$0xff]
        %v2295 = vld [vmem:[%s972 + $0x71] sm:$0xff]
        %v2296 = vpack.c.bf16 %v2289, %v2288
        %v2297 = vpack.c.bf16 %v2291, %v2290
        %v2298 = vpack.c.bf16 %v2293, %v2292
        %v2299 = vpack.c.bf16 %v2295, %v2294
        %s2300 = scalar_lea.vmem %s1, 512
        %v2301 = vld [vmem:[%s2300] sm:$0xf]
        %v2302 = vld [vmem:[%s2300 + $0x4] sm:$0xf]
        %v2303 = vld [vmem:[%s2300 + $0x8] sm:$0xf]
        %v2304 = vld [vmem:[%s2300 + $0xc] sm:$0xf]
        %v2305 = vld [vmem:[%s2300 + $0x10] sm:$0xf]
        %v2306 = vld [vmem:[%s2300 + $0x14] sm:$0xf]
        %v2307 = vld [vmem:[%s2300 + $0x18] sm:$0xf]
        %v2308 = vld [vmem:[%s2300 + $0x1c] sm:$0xf]
        %v2317 = vunpack.c.l.b16 %v2301
        %v2318 = vunpack.c.l.b16 %v2302
        %v2319 = vunpack.c.l.b16 %v2303
        %v2320 = vunpack.c.l.b16 %v2304
        %v2321 = vunpack.c.l.b16 %v2305
        %v2322 = vunpack.c.l.b16 %v2306
        %v2323 = vunpack.c.l.b16 %v2307
        %v2324 = vunpack.c.l.b16 %v2308
        %v2325 = vpack.c.b16 %v2318, %v2317
        %v2326 = vpack.c.b16 %v2320, %v2319
        %v2327 = vpack.c.b16 %v2322, %v2321
        %v2328 = vpack.c.b16 %v2324, %v2323
        %v2334 = vsel %vm170, %v2296, 0
        %v2337 = vsel %vm170, %v2297, 0
        %v2340 = vsel %vm170, %v2298, 0
        %v2343 = vsel %vm170, %v2299, 0
        %2345 = vmatprep.subr.bf16.mxu0 0
        %2346 = vmatpush1.bf16.msra.mxu0 0
        %2347 = vmatprep.subr.bf16.mxu0 0
        %2348 = vmatpush1.bf16.msra.mxu0 0
        %2349 = vmatprep.subr.bf16.mxu0 0
        %2350 = vmatpush1.bf16.msra.mxu0 0
        %2351 = vmatprep.subr.bf16.mxu0 0
        %2352 = vmatpush1.bf16.msra.mxu0 0
        %2353 = vmatprep.subr.bf16.mxu0 0
        %2354 = vmatpush1.bf16.msra.mxu0 %v2328
        %2355 = vmatprep.subr.bf16.mxu0 0
        %2356 = vmatpush1.bf16.msra.mxu0 %v2327
        %2357 = vmatprep.subr.bf16.mxu0 0
        %2358 = vmatpush1.bf16.msra.mxu0 %v2326
        %2359 = vmatprep.subr.bf16.mxu0 0
        %2360 = vmatpush1.bf16.msra.mxu0 %v2325
        %2361 = vmatprep.subr.bf16.mxu0 0
        %2362 = vmatpush2.bf16.msra.mxu0 0
        %2363 = vmatprep.subr.bf16.mxu0 0
        %2364 = vmatpush2.bf16.msra.mxu0 0
        %2365 = vmatprep.subr.bf16.mxu0 0
        %2366 = vmatpush2.bf16.msra.mxu0 0
        %2367 = vmatprep.subr.bf16.mxu0 0
        %2368 = vmatpush2.bf16.msra.mxu0 0
        %2369 = vmatprep.subr.bf16.mxu0 0
        %2370 = vmatpush2.bf16.msra.mxu0 0
        %2371 = vmatprep.subr.bf16.mxu0 0
        %2372 = vmatpush2.bf16.msra.mxu0 0
        %2373 = vmatprep.subr.bf16.mxu0 0
        %2374 = vmatpush2.bf16.msra.mxu0 0
        %2375 = vmatprep.subr.bf16.mxu0 0
        %2376 = vmatpush2.bf16.msra.mxu0 0
        %2377 = vmatprep.mubr.bf16.mxu0 0
        %2378 = vmatmul.mubr.bf16.gmra.mxu0 %v2334
        %v2379 = vpop.f32.mrf.mxu0
        %v2380 = vadd.f32 0.0, %v2379
        %v2381 = vpop.f32.mrf.mxu0
        %v2382 = vpop.f32.mrf.mxu0
        %v2383 = vadd.f32 0.0, %v2382
        %v2384 = vpop.f32.mrf.mxu0
        %2385 = vmatprep.mubr.bf16.mxu0 0
        %2386 = vmatmul.mubr.bf16.gmra.mxu0 %v2337
        %v2387 = vpop.f32.mrf.mxu0
        %v2388 = vadd.f32 0.0, %v2387
        %v2389 = vpop.f32.mrf.mxu0
        %v2390 = vpop.f32.mrf.mxu0
        %v2391 = vadd.f32 0.0, %v2390
        %v2392 = vpop.f32.mrf.mxu0
        %2393 = vmatprep.mubr.bf16.mxu0 0
        %2394 = vmatmul.mubr.bf16.gmra.mxu0 %v2340
        %v2395 = vpop.f32.mrf.mxu0
        %v2396 = vadd.f32 0.0, %v2395
        %v2397 = vpop.f32.mrf.mxu0
        %v2398 = vpop.f32.mrf.mxu0
        %v2399 = vadd.f32 0.0, %v2398
        %v2400 = vpop.f32.mrf.mxu0
        %2401 = vmatprep.mubr.bf16.mxu0 0
        %2402 = vmatmul.mubr.bf16.gmra.mxu0 %v2343
        %v2403 = vpop.f32.mrf.mxu0
        %v2404 = vadd.f32 0.0, %v2403
        %v2405 = vpop.f32.mrf.mxu0
        %v2406 = vpop.f32.mrf.mxu0
        %v2407 = vadd.f32 0.0, %v2406
        %v2408 = vpop.f32.mrf.mxu0
        %2409 = vdwg.mxu0
        %v2410 = vadd.f32 %v2280, %v2380
        %v2411 = vadd.f32 %v2281, %v2383
        %v2412 = vadd.f32 %v2282, %v2388
        %v2413 = vadd.f32 %v2283, %v2391
        %v2414 = vadd.f32 %v2284, %v2396
        %v2415 = vadd.f32 %v2285, %v2399
        %v2416 = vadd.f32 %v2286, %v2404
        %v2417 = vadd.f32 %v2287, %v2407
        %v2418 = vld [vmem:[%s972 + $0x2] sm:$0xff]
        %v2419 = vld [vmem:[%s972 + $0x12] sm:$0xff]
        %v2420 = vld [vmem:[%s972 + $0x22] sm:$0xff]
        %v2421 = vld [vmem:[%s972 + $0x32] sm:$0xff]
        %v2422 = vld [vmem:[%s972 + $0x42] sm:$0xff]
        %v2423 = vld [vmem:[%s972 + $0x52] sm:$0xff]
        %v2424 = vld [vmem:[%s972 + $0x62] sm:$0xff]
        %v2425 = vld [vmem:[%s972 + $0x72] sm:$0xff]
        %v2426 = vpack.c.bf16 %v2419, %v2418
        %v2427 = vpack.c.bf16 %v2421, %v2420
        %v2428 = vpack.c.bf16 %v2423, %v2422
        %v2429 = vpack.c.bf16 %v2425, %v2424
        %s2430 = scalar_lea.vmem %s1, 544
        %v2431 = vld [vmem:[%s2430] sm:$0xf]
        %v2432 = vld [vmem:[%s2430 + $0x4] sm:$0xf]
        %v2433 = vld [vmem:[%s2430 + $0x8] sm:$0xf]
        %v2434 = vld [vmem:[%s2430 + $0xc] sm:$0xf]
        %v2435 = vld [vmem:[%s2430 + $0x10] sm:$0xf]
        %v2436 = vld [vmem:[%s2430 + $0x14] sm:$0xf]
        %v2437 = vld [vmem:[%s2430 + $0x18] sm:$0xf]
        %v2438 = vld [vmem:[%s2430 + $0x1c] sm:$0xf]
        %v2447 = vunpack.c.l.b16 %v2431
        %v2448 = vunpack.c.l.b16 %v2432
        %v2449 = vunpack.c.l.b16 %v2433
        %v2450 = vunpack.c.l.b16 %v2434
        %v2451 = vunpack.c.l.b16 %v2435
        %v2452 = vunpack.c.l.b16 %v2436
        %v2453 = vunpack.c.l.b16 %v2437
        %v2454 = vunpack.c.l.b16 %v2438
        %v2455 = vpack.c.b16 %v2448, %v2447
        %v2456 = vpack.c.b16 %v2450, %v2449
        %v2457 = vpack.c.b16 %v2452, %v2451
        %v2458 = vpack.c.b16 %v2454, %v2453
        %v2464 = vsel %vm170, %v2426, 0
        %v2467 = vsel %vm170, %v2427, 0
        %v2470 = vsel %vm170, %v2428, 0
        %v2473 = vsel %vm170, %v2429, 0
        %2475 = vmatprep.subr.bf16.mxu0 0
        %2476 = vmatpush1.bf16.msra.mxu0 0
        %2477 = vmatprep.subr.bf16.mxu0 0
        %2478 = vmatpush1.bf16.msra.mxu0 0
        %2479 = vmatprep.subr.bf16.mxu0 0
        %2480 = vmatpush1.bf16.msra.mxu0 0
        %2481 = vmatprep.subr.bf16.mxu0 0
        %2482 = vmatpush1.bf16.msra.mxu0 0
        %2483 = vmatprep.subr.bf16.mxu0 0
        %2484 = vmatpush1.bf16.msra.mxu0 %v2458
        %2485 = vmatprep.subr.bf16.mxu0 0
        %2486 = vmatpush1.bf16.msra.mxu0 %v2457
        %2487 = vmatprep.subr.bf16.mxu0 0
        %2488 = vmatpush1.bf16.msra.mxu0 %v2456
        %2489 = vmatprep.subr.bf16.mxu0 0
        %2490 = vmatpush1.bf16.msra.mxu0 %v2455
        %2491 = vmatprep.subr.bf16.mxu0 0
        %2492 = vmatpush2.bf16.msra.mxu0 0
        %2493 = vmatprep.subr.bf16.mxu0 0
        %2494 = vmatpush2.bf16.msra.mxu0 0
        %2495 = vmatprep.subr.bf16.mxu0 0
        %2496 = vmatpush2.bf16.msra.mxu0 0
        %2497 = vmatprep.subr.bf16.mxu0 0
        %2498 = vmatpush2.bf16.msra.mxu0 0
        %2499 = vmatprep.subr.bf16.mxu0 0
        %2500 = vmatpush2.bf16.msra.mxu0 0
        %2501 = vmatprep.subr.bf16.mxu0 0
        %2502 = vmatpush2.bf16.msra.mxu0 0
        %2503 = vmatprep.subr.bf16.mxu0 0
        %2504 = vmatpush2.bf16.msra.mxu0 0
        %2505 = vmatprep.subr.bf16.mxu0 0
        %2506 = vmatpush2.bf16.msra.mxu0 0
        %2507 = vmatprep.mubr.bf16.mxu0 0
        %2508 = vmatmul.mubr.bf16.gmra.mxu0 %v2464
        %v2509 = vpop.f32.mrf.mxu0
        %v2510 = vadd.f32 0.0, %v2509
        %v2511 = vpop.f32.mrf.mxu0
        %v2512 = vpop.f32.mrf.mxu0
        %v2513 = vadd.f32 0.0, %v2512
        %v2514 = vpop.f32.mrf.mxu0
        %2515 = vmatprep.mubr.bf16.mxu0 0
        %2516 = vmatmul.mubr.bf16.gmra.mxu0 %v2467
        %v2517 = vpop.f32.mrf.mxu0
        %v2518 = vadd.f32 0.0, %v2517
        %v2519 = vpop.f32.mrf.mxu0
        %v2520 = vpop.f32.mrf.mxu0
        %v2521 = vadd.f32 0.0, %v2520
        %v2522 = vpop.f32.mrf.mxu0
        %2523 = vmatprep.mubr.bf16.mxu0 0
        %2524 = vmatmul.mubr.bf16.gmra.mxu0 %v2470
        %v2525 = vpop.f32.mrf.mxu0
        %v2526 = vadd.f32 0.0, %v2525
        %v2527 = vpop.f32.mrf.mxu0
        %v2528 = vpop.f32.mrf.mxu0
        %v2529 = vadd.f32 0.0, %v2528
        %v2530 = vpop.f32.mrf.mxu0
        %2531 = vmatprep.mubr.bf16.mxu0 0
        %2532 = vmatmul.mubr.bf16.gmra.mxu0 %v2473
        %v2533 = vpop.f32.mrf.mxu0
        %v2534 = vadd.f32 0.0, %v2533
        %v2535 = vpop.f32.mrf.mxu0
        %v2536 = vpop.f32.mrf.mxu0
        %v2537 = vadd.f32 0.0, %v2536
        %v2538 = vpop.f32.mrf.mxu0
        %2539 = vdwg.mxu0
        %v2540 = vadd.f32 %v2410, %v2510
        %v2541 = vadd.f32 %v2411, %v2513
        %v2542 = vadd.f32 %v2412, %v2518
        %v2543 = vadd.f32 %v2413, %v2521
        %v2544 = vadd.f32 %v2414, %v2526
        %v2545 = vadd.f32 %v2415, %v2529
        %v2546 = vadd.f32 %v2416, %v2534
        %v2547 = vadd.f32 %v2417, %v2537
        %s2548 = scalar_lea.vmem %s2, 1
        %v2549 = vld [vmem:[%s2548] sm:$0x1]
        %v2551 = vlaneseq
        %v2552 = vshrl.u32 %v2551, 7
        %v2553 = vsub.s32 0, %v2552
        %v2554 = vrot.slane %v2549, %v2553
        %v2556 = vadd.f32 %v2540, %v2554
        %v2557 = vadd.f32 %v2541, %v2554
        %v2558 = vadd.f32 %v2542, %v2554
        %v2559 = vadd.f32 %v2543, %v2554
        %v2560 = vadd.f32 %v2544, %v2554
        %v2561 = vadd.f32 %v2545, %v2554
        %v2562 = vadd.f32 %v2546, %v2554
        %v2563 = vadd.f32 %v2547, %v2554
        %v2564 = vadd.f32 %v2556, %v192
        %v2565 = vadd.f32 %v2557, %v193
        %v2566 = vadd.f32 %v2558, %v194
        %v2567 = vadd.f32 %v2559, %v195
        %v2568 = vadd.f32 %v2560, %v196
        %v2569 = vadd.f32 %v2561, %v197
        %v2570 = vadd.f32 %v2562, %v198
        %v2571 = vadd.f32 %v2563, %v199
        %v2572 = vmax.f32 %v2564, 0.0
        %v2573 = vmax.f32 %v2565, 0.0
        %v2574 = vmax.f32 %v2566, 0.0
        %v2575 = vmax.f32 %v2567, 0.0
        %v2576 = vmax.f32 %v2568, 0.0
        %v2577 = vmax.f32 %v2569, 0.0
        %v2578 = vmax.f32 %v2570, 0.0
        %v2579 = vmax.f32 %v2571, 0.0
        %2580 = vst.msk [vmem:[%s200 + $0x1] sm:$0xff] %vm170, %v2572
        %2581 = vst.msk [vmem:[%s200 + $0x11] sm:$0xff] %vm170, %v2573
        %2582 = vst.msk [vmem:[%s200 + $0x21] sm:$0xff] %vm170, %v2574
        %2583 = vst.msk [vmem:[%s200 + $0x31] sm:$0xff] %vm170, %v2575
        %2584 = vst.msk [vmem:[%s200 + $0x41] sm:$0xff] %vm170, %v2576
        %2585 = vst.msk [vmem:[%s200 + $0x51] sm:$0xff] %vm170, %v2577
        %2586 = vst.msk [vmem:[%s200 + $0x61] sm:$0xff] %vm170, %v2578
        %2587 = vst.msk [vmem:[%s200 + $0x71] sm:$0xff] %vm170, %v2579
        %v2588 = vld [vmem:[#allocation2] sm:$0xff]
        %v2589 = vld [vmem:[#allocation2 + $0x10] sm:$0xff]
        %v2590 = vld [vmem:[#allocation2 + $0x20] sm:$0xff]
        %v2591 = vld [vmem:[#allocation2 + $0x30] sm:$0xff]
        %v2592 = vld [vmem:[#allocation2 + $0x40] sm:$0xff]
        %v2593 = vld [vmem:[#allocation2 + $0x50] sm:$0xff]
        %v2594 = vld [vmem:[#allocation2 + $0x60] sm:$0xff]
        %v2595 = vld [vmem:[#allocation2 + $0x70] sm:$0xff]
        %v2596 = vpack.c.bf16 %v2589, %v2588
        %v2597 = vpack.c.bf16 %v2591, %v2590
        %v2598 = vpack.c.bf16 %v2593, %v2592
        %v2599 = vpack.c.bf16 %v2595, %v2594
        %s2600 = scalar_lea.vmem %s1, 576
        %v2601 = vld [vmem:[%s2600] sm:$0xf]
        %v2602 = vld [vmem:[%s2600 + $0x4] sm:$0xf]
        %v2603 = vld [vmem:[%s2600 + $0x8] sm:$0xf]
        %v2604 = vld [vmem:[%s2600 + $0xc] sm:$0xf]
        %v2605 = vld [vmem:[%s2600 + $0x10] sm:$0xf]
        %v2606 = vld [vmem:[%s2600 + $0x14] sm:$0xf]
        %v2607 = vld [vmem:[%s2600 + $0x18] sm:$0xf]
        %v2608 = vld [vmem:[%s2600 + $0x1c] sm:$0xf]
        %v2609 = vld [vmem:[#allocation2 + $0x1] sm:$0xff]
        %v2610 = vld [vmem:[#allocation2 + $0x11] sm:$0xff]
        %v2611 = vld [vmem:[#allocation2 + $0x21] sm:$0xff]
        %v2612 = vld [vmem:[#allocation2 + $0x31] sm:$0xff]
        %v2613 = vld [vmem:[#allocation2 + $0x41] sm:$0xff]
        %v2614 = vld [vmem:[#allocation2 + $0x51] sm:$0xff]
        %v2615 = vld [vmem:[#allocation2 + $0x61] sm:$0xff]
        %v2616 = vld [vmem:[#allocation2 + $0x71] sm:$0xff]
        %v2617 = vpack.c.bf16 %v2610, %v2609
        %v2618 = vpack.c.bf16 %v2612, %v2611
        %v2619 = vpack.c.bf16 %v2614, %v2613
        %v2620 = vpack.c.bf16 %v2616, %v2615
        %s2621 = scalar_lea.vmem %s1, 608
        %v2622 = vld [vmem:[%s2621] sm:$0xf]
        %v2623 = vld [vmem:[%s2621 + $0x4] sm:$0xf]
        %v2624 = vld [vmem:[%s2621 + $0x8] sm:$0xf]
        %v2625 = vld [vmem:[%s2621 + $0xc] sm:$0xf]
        %v2626 = vld [vmem:[%s2621 + $0x10] sm:$0xf]
        %v2627 = vld [vmem:[%s2621 + $0x14] sm:$0xf]
        %v2628 = vld [vmem:[%s2621 + $0x18] sm:$0xf]
        %v2629 = vld [vmem:[%s2621 + $0x1c] sm:$0xf]
        %v2638 = vunpack.c.l.b16 %v2622
        %v2639 = vunpack.c.l.b16 %v2623
        %v2640 = vunpack.c.l.b16 %v2624
        %v2641 = vunpack.c.l.b16 %v2625
        %v2642 = vunpack.c.l.b16 %v2626
        %v2643 = vunpack.c.l.b16 %v2627
        %v2644 = vunpack.c.l.b16 %v2628
        %v2645 = vunpack.c.l.b16 %v2629
        %v2646 = vpack.c.b16 %v2639, %v2638
        %v2647 = vpack.c.b16 %v2641, %v2640
        %v2648 = vpack.c.b16 %v2643, %v2642
        %v2649 = vpack.c.b16 %v2645, %v2644
        %v2655 = vsel %vm170, %v2617, 0
        %v2658 = vsel %vm170, %v2618, 0
        %v2661 = vsel %vm170, %v2619, 0
        %v2664 = vsel %vm170, %v2620, 0
        %2666 = vmatprep.subr.bf16.mxu0 0
        %2667 = vmatpush1.bf16.msra.mxu0 0
        %2668 = vmatprep.subr.bf16.mxu0 0
        %2669 = vmatpush1.bf16.msra.mxu0 0
        %2670 = vmatprep.subr.bf16.mxu0 0
        %2671 = vmatpush1.bf16.msra.mxu0 0
        %2672 = vmatprep.subr.bf16.mxu0 0
        %2673 = vmatpush1.bf16.msra.mxu0 0
        %2674 = vmatprep.subr.bf16.mxu0 0
        %2675 = vmatpush1.bf16.msra.mxu0 %v2649
        %2676 = vmatprep.subr.bf16.mxu0 0
        %2677 = vmatpush1.bf16.msra.mxu0 %v2648
        %2678 = vmatprep.subr.bf16.mxu0 0
        %2679 = vmatpush1.bf16.msra.mxu0 %v2647
        %2680 = vmatprep.subr.bf16.mxu0 0
        %2681 = vmatpush1.bf16.msra.mxu0 %v2646
        %2682 = vmatprep.subr.bf16.mxu0 0
        %2683 = vmatpush2.bf16.msra.mxu0 0
        %2684 = vmatprep.subr.bf16.mxu0 0
        %2685 = vmatpush2.bf16.msra.mxu0 0
        %2686 = vmatprep.subr.bf16.mxu0 0
        %2687 = vmatpush2.bf16.msra.mxu0 0
        %2688 = vmatprep.subr.bf16.mxu0 0
        %2689 = vmatpush2.bf16.msra.mxu0 0
        %2690 = vmatprep.subr.bf16.mxu0 0
        %2691 = vmatpush2.bf16.msra.mxu0 0
        %2692 = vmatprep.subr.bf16.mxu0 0
        %2693 = vmatpush2.bf16.msra.mxu0 0
        %2694 = vmatprep.subr.bf16.mxu0 0
        %2695 = vmatpush2.bf16.msra.mxu0 0
        %2696 = vmatprep.subr.bf16.mxu0 0
        %2697 = vmatpush2.bf16.msra.mxu0 0
        %2698 = vmatprep.mubr.bf16.mxu0 0
        %2699 = vmatmul.mubr.bf16.gmra.mxu0 %v2655
        %v2700 = vpop.f32.mrf.mxu0
        %v2701 = vadd.f32 0.0, %v2700
        %v2702 = vpop.f32.mrf.mxu0
        %v2703 = vpop.f32.mrf.mxu0
        %v2704 = vadd.f32 0.0, %v2703
        %v2705 = vpop.f32.mrf.mxu0
        %2706 = vmatprep.mubr.bf16.mxu0 0
        %2707 = vmatmul.mubr.bf16.gmra.mxu0 %v2658
        %v2708 = vpop.f32.mrf.mxu0
        %v2709 = vadd.f32 0.0, %v2708
        %v2710 = vpop.f32.mrf.mxu0
        %v2711 = vpop.f32.mrf.mxu0
        %v2712 = vadd.f32 0.0, %v2711
        %v2713 = vpop.f32.mrf.mxu0
        %2714 = vmatprep.mubr.bf16.mxu0 0
        %2715 = vmatmul.mubr.bf16.gmra.mxu0 %v2661
        %v2716 = vpop.f32.mrf.mxu0
        %v2717 = vadd.f32 0.0, %v2716
        %v2718 = vpop.f32.mrf.mxu0
        %v2719 = vpop.f32.mrf.mxu0
        %v2720 = vadd.f32 0.0, %v2719
        %v2721 = vpop.f32.mrf.mxu0
        %2722 = vmatprep.mubr.bf16.mxu0 0
        %2723 = vmatmul.mubr.bf16.gmra.mxu0 %v2664
        %v2724 = vpop.f32.mrf.mxu0
        %v2725 = vadd.f32 0.0, %v2724
        %v2726 = vpop.f32.mrf.mxu0
        %v2727 = vpop.f32.mrf.mxu0
        %v2728 = vadd.f32 0.0, %v2727
        %v2729 = vpop.f32.mrf.mxu0
        %2730 = vdwg.mxu0
        %v2739 = vunpack.c.l.b16 %v2601
        %v2740 = vunpack.c.l.b16 %v2602
        %v2741 = vunpack.c.l.b16 %v2603
        %v2742 = vunpack.c.l.b16 %v2604
        %v2743 = vunpack.c.l.b16 %v2605
        %v2744 = vunpack.c.l.b16 %v2606
        %v2745 = vunpack.c.l.b16 %v2607
        %v2746 = vunpack.c.l.b16 %v2608
        %v2747 = vpack.c.b16 %v2740, %v2739
        %v2748 = vpack.c.b16 %v2742, %v2741
        %v2749 = vpack.c.b16 %v2744, %v2743
        %v2750 = vpack.c.b16 %v2746, %v2745
        %v2756 = vsel %vm170, %v2596, 0
        %v2759 = vsel %vm170, %v2597, 0
        %v2762 = vsel %vm170, %v2598, 0
        %v2765 = vsel %vm170, %v2599, 0
        %2767 = vmatprep.subr.bf16.mxu0 0
        %2768 = vmatpush1.bf16.msra.mxu0 0
        %2769 = vmatprep.subr.bf16.mxu0 0
        %2770 = vmatpush1.bf16.msra.mxu0 0
        %2771 = vmatprep.subr.bf16.mxu0 0
        %2772 = vmatpush1.bf16.msra.mxu0 0
        %2773 = vmatprep.subr.bf16.mxu0 0
        %2774 = vmatpush1.bf16.msra.mxu0 0
        %2775 = vmatprep.subr.bf16.mxu0 0
        %2776 = vmatpush1.bf16.msra.mxu0 %v2750
        %2777 = vmatprep.subr.bf16.mxu0 0
        %2778 = vmatpush1.bf16.msra.mxu0 %v2749
        %2779 = vmatprep.subr.bf16.mxu0 0
        %2780 = vmatpush1.bf16.msra.mxu0 %v2748
        %2781 = vmatprep.subr.bf16.mxu0 0
        %2782 = vmatpush1.bf16.msra.mxu0 %v2747
        %2783 = vmatprep.subr.bf16.mxu0 0
        %2784 = vmatpush2.bf16.msra.mxu0 0
        %2785 = vmatprep.subr.bf16.mxu0 0
        %2786 = vmatpush2.bf16.msra.mxu0 0
        %2787 = vmatprep.subr.bf16.mxu0 0
        %2788 = vmatpush2.bf16.msra.mxu0 0
        %2789 = vmatprep.subr.bf16.mxu0 0
        %2790 = vmatpush2.bf16.msra.mxu0 0
        %2791 = vmatprep.subr.bf16.mxu0 0
        %2792 = vmatpush2.bf16.msra.mxu0 0
        %2793 = vmatprep.subr.bf16.mxu0 0
        %2794 = vmatpush2.bf16.msra.mxu0 0
        %2795 = vmatprep.subr.bf16.mxu0 0
        %2796 = vmatpush2.bf16.msra.mxu0 0
        %2797 = vmatprep.subr.bf16.mxu0 0
        %2798 = vmatpush2.bf16.msra.mxu0 0
        %2799 = vmatprep.mubr.bf16.mxu0 0
        %2800 = vmatmul.mubr.bf16.gmra.mxu0 %v2756
        %v2801 = vpop.f32.mrf.mxu0
        %v2802 = vadd.f32 %v2701, %v2801
        %v2803 = vpop.f32.mrf.mxu0
        %v2804 = vpop.f32.mrf.mxu0
        %v2805 = vadd.f32 %v2704, %v2804
        %v2806 = vpop.f32.mrf.mxu0
        %2807 = vmatprep.mubr.bf16.mxu0 0
        %2808 = vmatmul.mubr.bf16.gmra.mxu0 %v2759
        %v2809 = vpop.f32.mrf.mxu0
        %v2810 = vadd.f32 %v2709, %v2809
        %v2811 = vpop.f32.mrf.mxu0
        %v2812 = vpop.f32.mrf.mxu0
        %v2813 = vadd.f32 %v2712, %v2812
        %v2814 = vpop.f32.mrf.mxu0
        %2815 = vmatprep.mubr.bf16.mxu0 0
        %2816 = vmatmul.mubr.bf16.gmra.mxu0 %v2762
        %v2817 = vpop.f32.mrf.mxu0
        %v2818 = vadd.f32 %v2717, %v2817
        %v2819 = vpop.f32.mrf.mxu0
        %v2820 = vpop.f32.mrf.mxu0
        %v2821 = vadd.f32 %v2720, %v2820
        %v2822 = vpop.f32.mrf.mxu0
        %2823 = vmatprep.mubr.bf16.mxu0 0
        %2824 = vmatmul.mubr.bf16.gmra.mxu0 %v2765
        %v2825 = vpop.f32.mrf.mxu0
        %v2826 = vadd.f32 %v2725, %v2825
        %v2827 = vpop.f32.mrf.mxu0
        %v2828 = vpop.f32.mrf.mxu0
        %v2829 = vadd.f32 %v2728, %v2828
        %v2830 = vpop.f32.mrf.mxu0
        %2831 = vdwg.mxu0
        %v2832 = vld [vmem:[#allocation2 + $0x2] sm:$0xff]
        %v2833 = vld [vmem:[#allocation2 + $0x12] sm:$0xff]
        %v2834 = vld [vmem:[#allocation2 + $0x22] sm:$0xff]
        %v2835 = vld [vmem:[#allocation2 + $0x32] sm:$0xff]
        %v2836 = vld [vmem:[#allocation2 + $0x42] sm:$0xff]
        %v2837 = vld [vmem:[#allocation2 + $0x52] sm:$0xff]
        %v2838 = vld [vmem:[#allocation2 + $0x62] sm:$0xff]
        %v2839 = vld [vmem:[#allocation2 + $0x72] sm:$0xff]
        %v2840 = vpack.c.bf16 %v2833, %v2832
        %v2841 = vpack.c.bf16 %v2835, %v2834
        %v2842 = vpack.c.bf16 %v2837, %v2836
        %v2843 = vpack.c.bf16 %v2839, %v2838
        %s2844 = scalar_lea.vmem %s1, 640
        %v2845 = vld [vmem:[%s2844] sm:$0xf]
        %v2846 = vld [vmem:[%s2844 + $0x4] sm:$0xf]
        %v2847 = vld [vmem:[%s2844 + $0x8] sm:$0xf]
        %v2848 = vld [vmem:[%s2844 + $0xc] sm:$0xf]
        %v2849 = vld [vmem:[%s2844 + $0x10] sm:$0xf]
        %v2850 = vld [vmem:[%s2844 + $0x14] sm:$0xf]
        %v2851 = vld [vmem:[%s2844 + $0x18] sm:$0xf]
        %v2852 = vld [vmem:[%s2844 + $0x1c] sm:$0xf]
        %v2861 = vunpack.c.l.b16 %v2845
        %v2862 = vunpack.c.l.b16 %v2846
        %v2863 = vunpack.c.l.b16 %v2847
        %v2864 = vunpack.c.l.b16 %v2848
        %v2865 = vunpack.c.l.b16 %v2849
        %v2866 = vunpack.c.l.b16 %v2850
        %v2867 = vunpack.c.l.b16 %v2851
        %v2868 = vunpack.c.l.b16 %v2852
        %v2869 = vpack.c.b16 %v2862, %v2861
        %v2870 = vpack.c.b16 %v2864, %v2863
        %v2871 = vpack.c.b16 %v2866, %v2865
        %v2872 = vpack.c.b16 %v2868, %v2867
        %v2878 = vsel %vm170, %v2840, 0
        %v2881 = vsel %vm170, %v2841, 0
        %v2884 = vsel %vm170, %v2842, 0
        %v2887 = vsel %vm170, %v2843, 0
        %2889 = vmatprep.subr.bf16.mxu0 0
        %2890 = vmatpush1.bf16.msra.mxu0 0
        %2891 = vmatprep.subr.bf16.mxu0 0
        %2892 = vmatpush1.bf16.msra.mxu0 0
        %2893 = vmatprep.subr.bf16.mxu0 0
        %2894 = vmatpush1.bf16.msra.mxu0 0
        %2895 = vmatprep.subr.bf16.mxu0 0
        %2896 = vmatpush1.bf16.msra.mxu0 0
        %2897 = vmatprep.subr.bf16.mxu0 0
        %2898 = vmatpush1.bf16.msra.mxu0 %v2872
        %2899 = vmatprep.subr.bf16.mxu0 0
        %2900 = vmatpush1.bf16.msra.mxu0 %v2871
        %2901 = vmatprep.subr.bf16.mxu0 0
        %2902 = vmatpush1.bf16.msra.mxu0 %v2870
        %2903 = vmatprep.subr.bf16.mxu0 0
        %2904 = vmatpush1.bf16.msra.mxu0 %v2869
        %2905 = vmatprep.subr.bf16.mxu0 0
        %2906 = vmatpush2.bf16.msra.mxu0 0
        %2907 = vmatprep.subr.bf16.mxu0 0
        %2908 = vmatpush2.bf16.msra.mxu0 0
        %2909 = vmatprep.subr.bf16.mxu0 0
        %2910 = vmatpush2.bf16.msra.mxu0 0
        %2911 = vmatprep.subr.bf16.mxu0 0
        %2912 = vmatpush2.bf16.msra.mxu0 0
        %2913 = vmatprep.subr.bf16.mxu0 0
        %2914 = vmatpush2.bf16.msra.mxu0 0
        %2915 = vmatprep.subr.bf16.mxu0 0
        %2916 = vmatpush2.bf16.msra.mxu0 0
        %2917 = vmatprep.subr.bf16.mxu0 0
        %2918 = vmatpush2.bf16.msra.mxu0 0
        %2919 = vmatprep.subr.bf16.mxu0 0
        %2920 = vmatpush2.bf16.msra.mxu0 0
        %2921 = vmatprep.mubr.bf16.mxu0 0
        %2922 = vmatmul.mubr.bf16.gmra.mxu0 %v2878
        %v2923 = vpop.f32.mrf.mxu0
        %v2924 = vadd.f32 0.0, %v2923
        %v2925 = vpop.f32.mrf.mxu0
        %v2926 = vpop.f32.mrf.mxu0
        %v2927 = vadd.f32 0.0, %v2926
        %v2928 = vpop.f32.mrf.mxu0
        %2929 = vmatprep.mubr.bf16.mxu0 0
        %2930 = vmatmul.mubr.bf16.gmra.mxu0 %v2881
        %v2931 = vpop.f32.mrf.mxu0
        %v2932 = vadd.f32 0.0, %v2931
        %v2933 = vpop.f32.mrf.mxu0
        %v2934 = vpop.f32.mrf.mxu0
        %v2935 = vadd.f32 0.0, %v2934
        %v2936 = vpop.f32.mrf.mxu0
        %2937 = vmatprep.mubr.bf16.mxu0 0
        %2938 = vmatmul.mubr.bf16.gmra.mxu0 %v2884
        %v2939 = vpop.f32.mrf.mxu0
        %v2940 = vadd.f32 0.0, %v2939
        %v2941 = vpop.f32.mrf.mxu0
        %v2942 = vpop.f32.mrf.mxu0
        %v2943 = vadd.f32 0.0, %v2942
        %v2944 = vpop.f32.mrf.mxu0
        %2945 = vmatprep.mubr.bf16.mxu0 0
        %2946 = vmatmul.mubr.bf16.gmra.mxu0 %v2887
        %v2947 = vpop.f32.mrf.mxu0
        %v2948 = vadd.f32 0.0, %v2947
        %v2949 = vpop.f32.mrf.mxu0
        %v2950 = vpop.f32.mrf.mxu0
        %v2951 = vadd.f32 0.0, %v2950
        %v2952 = vpop.f32.mrf.mxu0
        %2953 = vdwg.mxu0
        %v2954 = vadd.f32 %v2802, %v2924
        %v2955 = vadd.f32 %v2805, %v2927
        %v2956 = vadd.f32 %v2810, %v2932
        %v2957 = vadd.f32 %v2813, %v2935
        %v2958 = vadd.f32 %v2818, %v2940
        %v2959 = vadd.f32 %v2821, %v2943
        %v2960 = vadd.f32 %v2826, %v2948
        %v2961 = vadd.f32 %v2829, %v2951
        %v2962 = vld [vmem:[%s200] sm:$0xff]
        %v2963 = vld [vmem:[%s200 + $0x10] sm:$0xff]
        %v2964 = vld [vmem:[%s200 + $0x20] sm:$0xff]
        %v2965 = vld [vmem:[%s200 + $0x30] sm:$0xff]
        %v2966 = vld [vmem:[%s200 + $0x40] sm:$0xff]
        %v2967 = vld [vmem:[%s200 + $0x50] sm:$0xff]
        %v2968 = vld [vmem:[%s200 + $0x60] sm:$0xff]
        %v2969 = vld [vmem:[%s200 + $0x70] sm:$0xff]
        %v2970 = vpack.c.bf16 %v2963, %v2962
        %v2971 = vpack.c.bf16 %v2965, %v2964
        %v2972 = vpack.c.bf16 %v2967, %v2966
        %v2973 = vpack.c.bf16 %v2969, %v2968
        %s2974 = scalar_lea.vmem %s1, 672
        %v2975 = vld [vmem:[%s2974] sm:$0xf]
        %v2976 = vld [vmem:[%s2974 + $0x4] sm:$0xf]
        %v2977 = vld [vmem:[%s2974 + $0x8] sm:$0xf]
        %v2978 = vld [vmem:[%s2974 + $0xc] sm:$0xf]
        %v2979 = vld [vmem:[%s2974 + $0x10] sm:$0xf]
        %v2980 = vld [vmem:[%s2974 + $0x14] sm:$0xf]
        %v2981 = vld [vmem:[%s2974 + $0x18] sm:$0xf]
        %v2982 = vld [vmem:[%s2974 + $0x1c] sm:$0xf]
        %v2991 = vunpack.c.l.b16 %v2975
        %v2992 = vunpack.c.l.b16 %v2976
        %v2993 = vunpack.c.l.b16 %v2977
        %v2994 = vunpack.c.l.b16 %v2978
        %v2995 = vunpack.c.l.b16 %v2979
        %v2996 = vunpack.c.l.b16 %v2980
        %v2997 = vunpack.c.l.b16 %v2981
        %v2998 = vunpack.c.l.b16 %v2982
        %v2999 = vpack.c.b16 %v2992, %v2991
        %v3000 = vpack.c.b16 %v2994, %v2993
        %v3001 = vpack.c.b16 %v2996, %v2995
        %v3002 = vpack.c.b16 %v2998, %v2997
        %v3008 = vsel %vm170, %v2970, 0
        %v3011 = vsel %vm170, %v2971, 0
        %v3014 = vsel %vm170, %v2972, 0
        %v3017 = vsel %vm170, %v2973, 0
        %3019 = vmatprep.subr.bf16.mxu0 0
        %3020 = vmatpush1.bf16.msra.mxu0 0
        %3021 = vmatprep.subr.bf16.mxu0 0
        %3022 = vmatpush1.bf16.msra.mxu0 0
        %3023 = vmatprep.subr.bf16.mxu0 0
        %3024 = vmatpush1.bf16.msra.mxu0 0
        %3025 = vmatprep.subr.bf16.mxu0 0
        %3026 = vmatpush1.bf16.msra.mxu0 0
        %3027 = vmatprep.subr.bf16.mxu0 0
        %3028 = vmatpush1.bf16.msra.mxu0 %v3002
        %3029 = vmatprep.subr.bf16.mxu0 0
        %3030 = vmatpush1.bf16.msra.mxu0 %v3001
        %3031 = vmatprep.subr.bf16.mxu0 0
        %3032 = vmatpush1.bf16.msra.mxu0 %v3000
        %3033 = vmatprep.subr.bf16.mxu0 0
        %3034 = vmatpush1.bf16.msra.mxu0 %v2999
        %3035 = vmatprep.subr.bf16.mxu0 0
        %3036 = vmatpush2.bf16.msra.mxu0 0
        %3037 = vmatprep.subr.bf16.mxu0 0
        %3038 = vmatpush2.bf16.msra.mxu0 0
        %3039 = vmatprep.subr.bf16.mxu0 0
        %3040 = vmatpush2.bf16.msra.mxu0 0
        %3041 = vmatprep.subr.bf16.mxu0 0
        %3042 = vmatpush2.bf16.msra.mxu0 0
        %3043 = vmatprep.subr.bf16.mxu0 0
        %3044 = vmatpush2.bf16.msra.mxu0 0
        %3045 = vmatprep.subr.bf16.mxu0 0
        %3046 = vmatpush2.bf16.msra.mxu0 0
        %3047 = vmatprep.subr.bf16.mxu0 0
        %3048 = vmatpush2.bf16.msra.mxu0 0
        %3049 = vmatprep.subr.bf16.mxu0 0
        %3050 = vmatpush2.bf16.msra.mxu0 0
        %3051 = vmatprep.mubr.bf16.mxu0 0
        %3052 = vmatmul.mubr.bf16.gmra.mxu0 %v3008
        %v3053 = vpop.f32.mrf.mxu0
        %v3054 = vadd.f32 0.0, %v3053
        %v3055 = vpop.f32.mrf.mxu0
        %v3056 = vpop.f32.mrf.mxu0
        %v3057 = vadd.f32 0.0, %v3056
        %v3058 = vpop.f32.mrf.mxu0
        %3059 = vmatprep.mubr.bf16.mxu0 0
        %3060 = vmatmul.mubr.bf16.gmra.mxu0 %v3011
        %v3061 = vpop.f32.mrf.mxu0
        %v3062 = vadd.f32 0.0, %v3061
        %v3063 = vpop.f32.mrf.mxu0
        %v3064 = vpop.f32.mrf.mxu0
        %v3065 = vadd.f32 0.0, %v3064
        %v3066 = vpop.f32.mrf.mxu0
        %3067 = vmatprep.mubr.bf16.mxu0 0
        %3068 = vmatmul.mubr.bf16.gmra.mxu0 %v3014
        %v3069 = vpop.f32.mrf.mxu0
        %v3070 = vadd.f32 0.0, %v3069
        %v3071 = vpop.f32.mrf.mxu0
        %v3072 = vpop.f32.mrf.mxu0
        %v3073 = vadd.f32 0.0, %v3072
        %v3074 = vpop.f32.mrf.mxu0
        %3075 = vmatprep.mubr.bf16.mxu0 0
        %3076 = vmatmul.mubr.bf16.gmra.mxu0 %v3017
        %v3077 = vpop.f32.mrf.mxu0
        %v3078 = vadd.f32 0.0, %v3077
        %v3079 = vpop.f32.mrf.mxu0
        %v3080 = vpop.f32.mrf.mxu0
        %v3081 = vadd.f32 0.0, %v3080
        %v3082 = vpop.f32.mrf.mxu0
        %3083 = vdwg.mxu0
        %v3084 = vadd.f32 %v2954, %v3054
        %v3085 = vadd.f32 %v2955, %v3057
        %v3086 = vadd.f32 %v2956, %v3062
        %v3087 = vadd.f32 %v2957, %v3065
        %v3088 = vadd.f32 %v2958, %v3070
        %v3089 = vadd.f32 %v2959, %v3073
        %v3090 = vadd.f32 %v2960, %v3078
        %v3091 = vadd.f32 %v2961, %v3081
        %v3092 = vld [vmem:[%s200 + $0x1] sm:$0xff]
        %v3093 = vld [vmem:[%s200 + $0x11] sm:$0xff]
        %v3094 = vld [vmem:[%s200 + $0x21] sm:$0xff]
        %v3095 = vld [vmem:[%s200 + $0x31] sm:$0xff]
        %v3096 = vld [vmem:[%s200 + $0x41] sm:$0xff]
        %v3097 = vld [vmem:[%s200 + $0x51] sm:$0xff]
        %v3098 = vld [vmem:[%s200 + $0x61] sm:$0xff]
        %v3099 = vld [vmem:[%s200 + $0x71] sm:$0xff]
        %v3100 = vpack.c.bf16 %v3093, %v3092
        %v3101 = vpack.c.bf16 %v3095, %v3094
        %v3102 = vpack.c.bf16 %v3097, %v3096
        %v3103 = vpack.c.bf16 %v3099, %v3098
        %s3104 = scalar_lea.vmem %s1, 704
        %v3105 = vld [vmem:[%s3104] sm:$0xf]
        %v3106 = vld [vmem:[%s3104 + $0x4] sm:$0xf]
        %v3107 = vld [vmem:[%s3104 + $0x8] sm:$0xf]
        %v3108 = vld [vmem:[%s3104 + $0xc] sm:$0xf]
        %v3109 = vld [vmem:[%s3104 + $0x10] sm:$0xf]
        %v3110 = vld [vmem:[%s3104 + $0x14] sm:$0xf]
        %v3111 = vld [vmem:[%s3104 + $0x18] sm:$0xf]
        %v3112 = vld [vmem:[%s3104 + $0x1c] sm:$0xf]
        %v3121 = vunpack.c.l.b16 %v3105
        %v3122 = vunpack.c.l.b16 %v3106
        %v3123 = vunpack.c.l.b16 %v3107
        %v3124 = vunpack.c.l.b16 %v3108
        %v3125 = vunpack.c.l.b16 %v3109
        %v3126 = vunpack.c.l.b16 %v3110
        %v3127 = vunpack.c.l.b16 %v3111
        %v3128 = vunpack.c.l.b16 %v3112
        %v3129 = vpack.c.b16 %v3122, %v3121
        %v3130 = vpack.c.b16 %v3124, %v3123
        %v3131 = vpack.c.b16 %v3126, %v3125
        %v3132 = vpack.c.b16 %v3128, %v3127
        %v3138 = vsel %vm170, %v3100, 0
        %v3141 = vsel %vm170, %v3101, 0
        %v3144 = vsel %vm170, %v3102, 0
        %v3147 = vsel %vm170, %v3103, 0
        %3149 = vmatprep.subr.bf16.mxu0 0
        %3150 = vmatpush1.bf16.msra.mxu0 0
        %3151 = vmatprep.subr.bf16.mxu0 0
        %3152 = vmatpush1.bf16.msra.mxu0 0
        %3153 = vmatprep.subr.bf16.mxu0 0
        %3154 = vmatpush1.bf16.msra.mxu0 0
        %3155 = vmatprep.subr.bf16.mxu0 0
        %3156 = vmatpush1.bf16.msra.mxu0 0
        %3157 = vmatprep.subr.bf16.mxu0 0
        %3158 = vmatpush1.bf16.msra.mxu0 %v3132
        %3159 = vmatprep.subr.bf16.mxu0 0
        %3160 = vmatpush1.bf16.msra.mxu0 %v3131
        %3161 = vmatprep.subr.bf16.mxu0 0
        %3162 = vmatpush1.bf16.msra.mxu0 %v3130
        %3163 = vmatprep.subr.bf16.mxu0 0
        %3164 = vmatpush1.bf16.msra.mxu0 %v3129
        %3165 = vmatprep.subr.bf16.mxu0 0
        %3166 = vmatpush2.bf16.msra.mxu0 0
        %3167 = vmatprep.subr.bf16.mxu0 0
        %3168 = vmatpush2.bf16.msra.mxu0 0
        %3169 = vmatprep.subr.bf16.mxu0 0
        %3170 = vmatpush2.bf16.msra.mxu0 0
        %3171 = vmatprep.subr.bf16.mxu0 0
        %3172 = vmatpush2.bf16.msra.mxu0 0
        %3173 = vmatprep.subr.bf16.mxu0 0
        %3174 = vmatpush2.bf16.msra.mxu0 0
        %3175 = vmatprep.subr.bf16.mxu0 0
        %3176 = vmatpush2.bf16.msra.mxu0 0
        %3177 = vmatprep.subr.bf16.mxu0 0
        %3178 = vmatpush2.bf16.msra.mxu0 0
        %3179 = vmatprep.subr.bf16.mxu0 0
        %3180 = vmatpush2.bf16.msra.mxu0 0
        %3181 = vmatprep.mubr.bf16.mxu0 0
        %3182 = vmatmul.mubr.bf16.gmra.mxu0 %v3138
        %v3183 = vpop.f32.mrf.mxu0
        %v3184 = vadd.f32 0.0, %v3183
        %v3185 = vpop.f32.mrf.mxu0
        %v3186 = vpop.f32.mrf.mxu0
        %v3187 = vadd.f32 0.0, %v3186
        %v3188 = vpop.f32.mrf.mxu0
        %3189 = vmatprep.mubr.bf16.mxu0 0
        %3190 = vmatmul.mubr.bf16.gmra.mxu0 %v3141
        %v3191 = vpop.f32.mrf.mxu0
        %v3192 = vadd.f32 0.0, %v3191
        %v3193 = vpop.f32.mrf.mxu0
        %v3194 = vpop.f32.mrf.mxu0
        %v3195 = vadd.f32 0.0, %v3194
        %v3196 = vpop.f32.mrf.mxu0
        %3197 = vmatprep.mubr.bf16.mxu0 0
        %3198 = vmatmul.mubr.bf16.gmra.mxu0 %v3144
        %v3199 = vpop.f32.mrf.mxu0
        %v3200 = vadd.f32 0.0, %v3199
        %v3201 = vpop.f32.mrf.mxu0
        %v3202 = vpop.f32.mrf.mxu0
        %v3203 = vadd.f32 0.0, %v3202
        %v3204 = vpop.f32.mrf.mxu0
        %3205 = vmatprep.mubr.bf16.mxu0 0
        %3206 = vmatmul.mubr.bf16.gmra.mxu0 %v3147
        %v3207 = vpop.f32.mrf.mxu0
        %v3208 = vadd.f32 0.0, %v3207
        %v3209 = vpop.f32.mrf.mxu0
        %v3210 = vpop.f32.mrf.mxu0
        %v3211 = vadd.f32 0.0, %v3210
        %v3212 = vpop.f32.mrf.mxu0
        %3213 = vdwg.mxu0
        %v3214 = vadd.f32 %v3084, %v3184
        %v3215 = vadd.f32 %v3085, %v3187
        %v3216 = vadd.f32 %v3086, %v3192
        %v3217 = vadd.f32 %v3087, %v3195
        %v3218 = vadd.f32 %v3088, %v3200
        %v3219 = vadd.f32 %v3089, %v3203
        %v3220 = vadd.f32 %v3090, %v3208
        %v3221 = vadd.f32 %v3091, %v3211
        %v3222 = vld [vmem:[%s200 + $0x2] sm:$0xff]
        %v3223 = vld [vmem:[%s200 + $0x12] sm:$0xff]
        %v3224 = vld [vmem:[%s200 + $0x22] sm:$0xff]
        %v3225 = vld [vmem:[%s200 + $0x32] sm:$0xff]
        %v3226 = vld [vmem:[%s200 + $0x42] sm:$0xff]
        %v3227 = vld [vmem:[%s200 + $0x52] sm:$0xff]
        %v3228 = vld [vmem:[%s200 + $0x62] sm:$0xff]
        %v3229 = vld [vmem:[%s200 + $0x72] sm:$0xff]
        %v3230 = vpack.c.bf16 %v3223, %v3222
        %v3231 = vpack.c.bf16 %v3225, %v3224
        %v3232 = vpack.c.bf16 %v3227, %v3226
        %v3233 = vpack.c.bf16 %v3229, %v3228
        %s3234 = scalar_lea.vmem %s1, 736
        %v3235 = vld [vmem:[%s3234] sm:$0xf]
        %v3236 = vld [vmem:[%s3234 + $0x4] sm:$0xf]
        %v3237 = vld [vmem:[%s3234 + $0x8] sm:$0xf]
        %v3238 = vld [vmem:[%s3234 + $0xc] sm:$0xf]
        %v3239 = vld [vmem:[%s3234 + $0x10] sm:$0xf]
        %v3240 = vld [vmem:[%s3234 + $0x14] sm:$0xf]
        %v3241 = vld [vmem:[%s3234 + $0x18] sm:$0xf]
        %v3242 = vld [vmem:[%s3234 + $0x1c] sm:$0xf]
        %v3251 = vunpack.c.l.b16 %v3235
        %v3252 = vunpack.c.l.b16 %v3236
        %v3253 = vunpack.c.l.b16 %v3237
        %v3254 = vunpack.c.l.b16 %v3238
        %v3255 = vunpack.c.l.b16 %v3239
        %v3256 = vunpack.c.l.b16 %v3240
        %v3257 = vunpack.c.l.b16 %v3241
        %v3258 = vunpack.c.l.b16 %v3242
        %v3259 = vpack.c.b16 %v3252, %v3251
        %v3260 = vpack.c.b16 %v3254, %v3253
        %v3261 = vpack.c.b16 %v3256, %v3255
        %v3262 = vpack.c.b16 %v3258, %v3257
        %v3268 = vsel %vm170, %v3230, 0
        %v3271 = vsel %vm170, %v3231, 0
        %v3274 = vsel %vm170, %v3232, 0
        %v3277 = vsel %vm170, %v3233, 0
        %3279 = vmatprep.subr.bf16.mxu0 0
        %3280 = vmatpush1.bf16.msra.mxu0 0
        %3281 = vmatprep.subr.bf16.mxu0 0
        %3282 = vmatpush1.bf16.msra.mxu0 0
        %3283 = vmatprep.subr.bf16.mxu0 0
        %3284 = vmatpush1.bf16.msra.mxu0 0
        %3285 = vmatprep.subr.bf16.mxu0 0
        %3286 = vmatpush1.bf16.msra.mxu0 0
        %3287 = vmatprep.subr.bf16.mxu0 0
        %3288 = vmatpush1.bf16.msra.mxu0 %v3262
        %3289 = vmatprep.subr.bf16.mxu0 0
        %3290 = vmatpush1.bf16.msra.mxu0 %v3261
        %3291 = vmatprep.subr.bf16.mxu0 0
        %3292 = vmatpush1.bf16.msra.mxu0 %v3260
        %3293 = vmatprep.subr.bf16.mxu0 0
        %3294 = vmatpush1.bf16.msra.mxu0 %v3259
        %3295 = vmatprep.subr.bf16.mxu0 0
        %3296 = vmatpush2.bf16.msra.mxu0 0
        %3297 = vmatprep.subr.bf16.mxu0 0
        %3298 = vmatpush2.bf16.msra.mxu0 0
        %3299 = vmatprep.subr.bf16.mxu0 0
        %3300 = vmatpush2.bf16.msra.mxu0 0
        %3301 = vmatprep.subr.bf16.mxu0 0
        %3302 = vmatpush2.bf16.msra.mxu0 0
        %3303 = vmatprep.subr.bf16.mxu0 0
        %3304 = vmatpush2.bf16.msra.mxu0 0
        %3305 = vmatprep.subr.bf16.mxu0 0
        %3306 = vmatpush2.bf16.msra.mxu0 0
        %3307 = vmatprep.subr.bf16.mxu0 0
        %3308 = vmatpush2.bf16.msra.mxu0 0
        %3309 = vmatprep.subr.bf16.mxu0 0
        %3310 = vmatpush2.bf16.msra.mxu0 0
        %3311 = vmatprep.mubr.bf16.mxu0 0
        %3312 = vmatmul.mubr.bf16.gmra.mxu0 %v3268
        %v3313 = vpop.f32.mrf.mxu0
        %v3314 = vadd.f32 0.0, %v3313
        %v3315 = vpop.f32.mrf.mxu0
        %v3316 = vpop.f32.mrf.mxu0
        %v3317 = vadd.f32 0.0, %v3316
        %v3318 = vpop.f32.mrf.mxu0
        %3319 = vmatprep.mubr.bf16.mxu0 0
        %3320 = vmatmul.mubr.bf16.gmra.mxu0 %v3271
        %v3321 = vpop.f32.mrf.mxu0
        %v3322 = vadd.f32 0.0, %v3321
        %v3323 = vpop.f32.mrf.mxu0
        %v3324 = vpop.f32.mrf.mxu0
        %v3325 = vadd.f32 0.0, %v3324
        %v3326 = vpop.f32.mrf.mxu0
        %3327 = vmatprep.mubr.bf16.mxu0 0
        %3328 = vmatmul.mubr.bf16.gmra.mxu0 %v3274
        %v3329 = vpop.f32.mrf.mxu0
        %v3330 = vadd.f32 0.0, %v3329
        %v3331 = vpop.f32.mrf.mxu0
        %v3332 = vpop.f32.mrf.mxu0
        %v3333 = vadd.f32 0.0, %v3332
        %v3334 = vpop.f32.mrf.mxu0
        %3335 = vmatprep.mubr.bf16.mxu0 0
        %3336 = vmatmul.mubr.bf16.gmra.mxu0 %v3277
        %v3337 = vpop.f32.mrf.mxu0
        %v3338 = vadd.f32 0.0, %v3337
        %v3339 = vpop.f32.mrf.mxu0
        %v3340 = vpop.f32.mrf.mxu0
        %v3341 = vadd.f32 0.0, %v3340
        %v3342 = vpop.f32.mrf.mxu0
        %3343 = vdwg.mxu0
        %v3344 = vadd.f32 %v3214, %v3314
        %v3345 = vadd.f32 %v3215, %v3317
        %v3346 = vadd.f32 %v3216, %v3322
        %v3347 = vadd.f32 %v3217, %v3325
        %v3348 = vadd.f32 %v3218, %v3330
        %v3349 = vadd.f32 %v3219, %v3333
        %v3350 = vadd.f32 %v3220, %v3338
        %v3351 = vadd.f32 %v3221, %v3341
        %v3352 = vld [vmem:[%s972] sm:$0xff]
        %v3353 = vld [vmem:[%s972 + $0x10] sm:$0xff]
        %v3354 = vld [vmem:[%s972 + $0x20] sm:$0xff]
        %v3355 = vld [vmem:[%s972 + $0x30] sm:$0xff]
        %v3356 = vld [vmem:[%s972 + $0x40] sm:$0xff]
        %v3357 = vld [vmem:[%s972 + $0x50] sm:$0xff]
        %v3358 = vld [vmem:[%s972 + $0x60] sm:$0xff]
        %v3359 = vld [vmem:[%s972 + $0x70] sm:$0xff]
        %v3360 = vpack.c.bf16 %v3353, %v3352
        %v3361 = vpack.c.bf16 %v3355, %v3354
        %v3362 = vpack.c.bf16 %v3357, %v3356
        %v3363 = vpack.c.bf16 %v3359, %v3358
        %s3364 = scalar_lea.vmem %s1, 768
        %v3365 = vld [vmem:[%s3364] sm:$0xf]
        %v3366 = vld [vmem:[%s3364 + $0x4] sm:$0xf]
        %v3367 = vld [vmem:[%s3364 + $0x8] sm:$0xf]
        %v3368 = vld [vmem:[%s3364 + $0xc] sm:$0xf]
        %v3369 = vld [vmem:[%s3364 + $0x10] sm:$0xf]
        %v3370 = vld [vmem:[%s3364 + $0x14] sm:$0xf]
        %v3371 = vld [vmem:[%s3364 + $0x18] sm:$0xf]
        %v3372 = vld [vmem:[%s3364 + $0x1c] sm:$0xf]
        %v3381 = vunpack.c.l.b16 %v3365
        %v3382 = vunpack.c.l.b16 %v3366
        %v3383 = vunpack.c.l.b16 %v3367
        %v3384 = vunpack.c.l.b16 %v3368
        %v3385 = vunpack.c.l.b16 %v3369
        %v3386 = vunpack.c.l.b16 %v3370
        %v3387 = vunpack.c.l.b16 %v3371
        %v3388 = vunpack.c.l.b16 %v3372
        %v3389 = vpack.c.b16 %v3382, %v3381
        %v3390 = vpack.c.b16 %v3384, %v3383
        %v3391 = vpack.c.b16 %v3386, %v3385
        %v3392 = vpack.c.b16 %v3388, %v3387
        %v3398 = vsel %vm170, %v3360, 0
        %v3401 = vsel %vm170, %v3361, 0
        %v3404 = vsel %vm170, %v3362, 0
        %v3407 = vsel %vm170, %v3363, 0
        %3409 = vmatprep.subr.bf16.mxu0 0
        %3410 = vmatpush1.bf16.msra.mxu0 0
        %3411 = vmatprep.subr.bf16.mxu0 0
        %3412 = vmatpush1.bf16.msra.mxu0 0
        %3413 = vmatprep.subr.bf16.mxu0 0
        %3414 = vmatpush1.bf16.msra.mxu0 0
        %3415 = vmatprep.subr.bf16.mxu0 0
        %3416 = vmatpush1.bf16.msra.mxu0 0
        %3417 = vmatprep.subr.bf16.mxu0 0
        %3418 = vmatpush1.bf16.msra.mxu0 %v3392
        %3419 = vmatprep.subr.bf16.mxu0 0
        %3420 = vmatpush1.bf16.msra.mxu0 %v3391
        %3421 = vmatprep.subr.bf16.mxu0 0
        %3422 = vmatpush1.bf16.msra.mxu0 %v3390
        %3423 = vmatprep.subr.bf16.mxu0 0
        %3424 = vmatpush1.bf16.msra.mxu0 %v3389
        %3425 = vmatprep.subr.bf16.mxu0 0
        %3426 = vmatpush2.bf16.msra.mxu0 0
        %3427 = vmatprep.subr.bf16.mxu0 0
        %3428 = vmatpush2.bf16.msra.mxu0 0
        %3429 = vmatprep.subr.bf16.mxu0 0
        %3430 = vmatpush2.bf16.msra.mxu0 0
        %3431 = vmatprep.subr.bf16.mxu0 0
        %3432 = vmatpush2.bf16.msra.mxu0 0
        %3433 = vmatprep.subr.bf16.mxu0 0
        %3434 = vmatpush2.bf16.msra.mxu0 0
        %3435 = vmatprep.subr.bf16.mxu0 0
        %3436 = vmatpush2.bf16.msra.mxu0 0
        %3437 = vmatprep.subr.bf16.mxu0 0
        %3438 = vmatpush2.bf16.msra.mxu0 0
        %3439 = vmatprep.subr.bf16.mxu0 0
        %3440 = vmatpush2.bf16.msra.mxu0 0
        %3441 = vmatprep.mubr.bf16.mxu0 0
        %3442 = vmatmul.mubr.bf16.gmra.mxu0 %v3398
        %v3443 = vpop.f32.mrf.mxu0
        %v3444 = vadd.f32 0.0, %v3443
        %v3445 = vpop.f32.mrf.mxu0
        %v3446 = vpop.f32.mrf.mxu0
        %v3447 = vadd.f32 0.0, %v3446
        %v3448 = vpop.f32.mrf.mxu0
        %3449 = vmatprep.mubr.bf16.mxu0 0
        %3450 = vmatmul.mubr.bf16.gmra.mxu0 %v3401
        %v3451 = vpop.f32.mrf.mxu0
        %v3452 = vadd.f32 0.0, %v3451
        %v3453 = vpop.f32.mrf.mxu0
        %v3454 = vpop.f32.mrf.mxu0
        %v3455 = vadd.f32 0.0, %v3454
        %v3456 = vpop.f32.mrf.mxu0
        %3457 = vmatprep.mubr.bf16.mxu0 0
        %3458 = vmatmul.mubr.bf16.gmra.mxu0 %v3404
        %v3459 = vpop.f32.mrf.mxu0
        %v3460 = vadd.f32 0.0, %v3459
        %v3461 = vpop.f32.mrf.mxu0
        %v3462 = vpop.f32.mrf.mxu0
        %v3463 = vadd.f32 0.0, %v3462
        %v3464 = vpop.f32.mrf.mxu0
        %3465 = vmatprep.mubr.bf16.mxu0 0
        %3466 = vmatmul.mubr.bf16.gmra.mxu0 %v3407
        %v3467 = vpop.f32.mrf.mxu0
        %v3468 = vadd.f32 0.0, %v3467
        %v3469 = vpop.f32.mrf.mxu0
        %v3470 = vpop.f32.mrf.mxu0
        %v3471 = vadd.f32 0.0, %v3470
        %v3472 = vpop.f32.mrf.mxu0
        %3473 = vdwg.mxu0
        %v3474 = vadd.f32 %v3344, %v3444
        %v3475 = vadd.f32 %v3345, %v3447
        %v3476 = vadd.f32 %v3346, %v3452
        %v3477 = vadd.f32 %v3347, %v3455
        %v3478 = vadd.f32 %v3348, %v3460
        %v3479 = vadd.f32 %v3349, %v3463
        %v3480 = vadd.f32 %v3350, %v3468
        %v3481 = vadd.f32 %v3351, %v3471
        %v3482 = vld [vmem:[%s972 + $0x1] sm:$0xff]
        %v3483 = vld [vmem:[%s972 + $0x11] sm:$0xff]
        %v3484 = vld [vmem:[%s972 + $0x21] sm:$0xff]
        %v3485 = vld [vmem:[%s972 + $0x31] sm:$0xff]
        %v3486 = vld [vmem:[%s972 + $0x41] sm:$0xff]
        %v3487 = vld [vmem:[%s972 + $0x51] sm:$0xff]
        %v3488 = vld [vmem:[%s972 + $0x61] sm:$0xff]
        %v3489 = vld [vmem:[%s972 + $0x71] sm:$0xff]
        %v3490 = vpack.c.bf16 %v3483, %v3482
        %v3491 = vpack.c.bf16 %v3485, %v3484
        %v3492 = vpack.c.bf16 %v3487, %v3486
        %v3493 = vpack.c.bf16 %v3489, %v3488
        %s3494 = scalar_lea.vmem %s1, 800
        %v3495 = vld [vmem:[%s3494] sm:$0xf]
        %v3496 = vld [vmem:[%s3494 + $0x4] sm:$0xf]
        %v3497 = vld [vmem:[%s3494 + $0x8] sm:$0xf]
        %v3498 = vld [vmem:[%s3494 + $0xc] sm:$0xf]
        %v3499 = vld [vmem:[%s3494 + $0x10] sm:$0xf]
        %v3500 = vld [vmem:[%s3494 + $0x14] sm:$0xf]
        %v3501 = vld [vmem:[%s3494 + $0x18] sm:$0xf]
        %v3502 = vld [vmem:[%s3494 + $0x1c] sm:$0xf]
        %v3511 = vunpack.c.l.b16 %v3495
        %v3512 = vunpack.c.l.b16 %v3496
        %v3513 = vunpack.c.l.b16 %v3497
        %v3514 = vunpack.c.l.b16 %v3498
        %v3515 = vunpack.c.l.b16 %v3499
        %v3516 = vunpack.c.l.b16 %v3500
        %v3517 = vunpack.c.l.b16 %v3501
        %v3518 = vunpack.c.l.b16 %v3502
        %v3519 = vpack.c.b16 %v3512, %v3511
        %v3520 = vpack.c.b16 %v3514, %v3513
        %v3521 = vpack.c.b16 %v3516, %v3515
        %v3522 = vpack.c.b16 %v3518, %v3517
        %v3528 = vsel %vm170, %v3490, 0
        %v3531 = vsel %vm170, %v3491, 0
        %v3534 = vsel %vm170, %v3492, 0
        %v3537 = vsel %vm170, %v3493, 0
        %3539 = vmatprep.subr.bf16.mxu0 0
        %3540 = vmatpush1.bf16.msra.mxu0 0
        %3541 = vmatprep.subr.bf16.mxu0 0
        %3542 = vmatpush1.bf16.msra.mxu0 0
        %3543 = vmatprep.subr.bf16.mxu0 0
        %3544 = vmatpush1.bf16.msra.mxu0 0
        %3545 = vmatprep.subr.bf16.mxu0 0
        %3546 = vmatpush1.bf16.msra.mxu0 0
        %3547 = vmatprep.subr.bf16.mxu0 0
        %3548 = vmatpush1.bf16.msra.mxu0 %v3522
        %3549 = vmatprep.subr.bf16.mxu0 0
        %3550 = vmatpush1.bf16.msra.mxu0 %v3521
        %3551 = vmatprep.subr.bf16.mxu0 0
        %3552 = vmatpush1.bf16.msra.mxu0 %v3520
        %3553 = vmatprep.subr.bf16.mxu0 0
        %3554 = vmatpush1.bf16.msra.mxu0 %v3519
        %3555 = vmatprep.subr.bf16.mxu0 0
        %3556 = vmatpush2.bf16.msra.mxu0 0
        %3557 = vmatprep.subr.bf16.mxu0 0
        %3558 = vmatpush2.bf16.msra.mxu0 0
        %3559 = vmatprep.subr.bf16.mxu0 0
        %3560 = vmatpush2.bf16.msra.mxu0 0
        %3561 = vmatprep.subr.bf16.mxu0 0
        %3562 = vmatpush2.bf16.msra.mxu0 0
        %3563 = vmatprep.subr.bf16.mxu0 0
        %3564 = vmatpush2.bf16.msra.mxu0 0
        %3565 = vmatprep.subr.bf16.mxu0 0
        %3566 = vmatpush2.bf16.msra.mxu0 0
        %3567 = vmatprep.subr.bf16.mxu0 0
        %3568 = vmatpush2.bf16.msra.mxu0 0
        %3569 = vmatprep.subr.bf16.mxu0 0
        %3570 = vmatpush2.bf16.msra.mxu0 0
        %3571 = vmatprep.mubr.bf16.mxu0 0
        %3572 = vmatmul.mubr.bf16.gmra.mxu0 %v3528
        %v3573 = vpop.f32.mrf.mxu0
        %v3574 = vadd.f32 0.0, %v3573
        %v3575 = vpop.f32.mrf.mxu0
        %v3576 = vpop.f32.mrf.mxu0
        %v3577 = vadd.f32 0.0, %v3576
        %v3578 = vpop.f32.mrf.mxu0
        %3579 = vmatprep.mubr.bf16.mxu0 0
        %3580 = vmatmul.mubr.bf16.gmra.mxu0 %v3531
        %v3581 = vpop.f32.mrf.mxu0
        %v3582 = vadd.f32 0.0, %v3581
        %v3583 = vpop.f32.mrf.mxu0
        %v3584 = vpop.f32.mrf.mxu0
        %v3585 = vadd.f32 0.0, %v3584
        %v3586 = vpop.f32.mrf.mxu0
        %3587 = vmatprep.mubr.bf16.mxu0 0
        %3588 = vmatmul.mubr.bf16.gmra.mxu0 %v3534
        %v3589 = vpop.f32.mrf.mxu0
        %v3590 = vadd.f32 0.0, %v3589
        %v3591 = vpop.f32.mrf.mxu0
        %v3592 = vpop.f32.mrf.mxu0
        %v3593 = vadd.f32 0.0, %v3592
        %v3594 = vpop.f32.mrf.mxu0
        %3595 = vmatprep.mubr.bf16.mxu0 0
        %3596 = vmatmul.mubr.bf16.gmra.mxu0 %v3537
        %v3597 = vpop.f32.mrf.mxu0
        %v3598 = vadd.f32 0.0, %v3597
        %v3599 = vpop.f32.mrf.mxu0
        %v3600 = vpop.f32.mrf.mxu0
        %v3601 = vadd.f32 0.0, %v3600
        %v3602 = vpop.f32.mrf.mxu0
        %3603 = vdwg.mxu0
        %v3604 = vadd.f32 %v3474, %v3574
        %v3605 = vadd.f32 %v3475, %v3577
        %v3606 = vadd.f32 %v3476, %v3582
        %v3607 = vadd.f32 %v3477, %v3585
        %v3608 = vadd.f32 %v3478, %v3590
        %v3609 = vadd.f32 %v3479, %v3593
        %v3610 = vadd.f32 %v3480, %v3598
        %v3611 = vadd.f32 %v3481, %v3601
        %v3612 = vld [vmem:[%s972 + $0x2] sm:$0xff]
        %v3613 = vld [vmem:[%s972 + $0x12] sm:$0xff]
        %v3614 = vld [vmem:[%s972 + $0x22] sm:$0xff]
        %v3615 = vld [vmem:[%s972 + $0x32] sm:$0xff]
        %v3616 = vld [vmem:[%s972 + $0x42] sm:$0xff]
        %v3617 = vld [vmem:[%s972 + $0x52] sm:$0xff]
        %v3618 = vld [vmem:[%s972 + $0x62] sm:$0xff]
        %v3619 = vld [vmem:[%s972 + $0x72] sm:$0xff]
        %v3620 = vpack.c.bf16 %v3613, %v3612
        %v3621 = vpack.c.bf16 %v3615, %v3614
        %v3622 = vpack.c.bf16 %v3617, %v3616
        %v3623 = vpack.c.bf16 %v3619, %v3618
        %s3624 = scalar_lea.vmem %s1, 832
        %v3625 = vld [vmem:[%s3624] sm:$0xf]
        %v3626 = vld [vmem:[%s3624 + $0x4] sm:$0xf]
        %v3627 = vld [vmem:[%s3624 + $0x8] sm:$0xf]
        %v3628 = vld [vmem:[%s3624 + $0xc] sm:$0xf]
        %v3629 = vld [vmem:[%s3624 + $0x10] sm:$0xf]
        %v3630 = vld [vmem:[%s3624 + $0x14] sm:$0xf]
        %v3631 = vld [vmem:[%s3624 + $0x18] sm:$0xf]
        %v3632 = vld [vmem:[%s3624 + $0x1c] sm:$0xf]
        %v3641 = vunpack.c.l.b16 %v3625
        %v3642 = vunpack.c.l.b16 %v3626
        %v3643 = vunpack.c.l.b16 %v3627
        %v3644 = vunpack.c.l.b16 %v3628
        %v3645 = vunpack.c.l.b16 %v3629
        %v3646 = vunpack.c.l.b16 %v3630
        %v3647 = vunpack.c.l.b16 %v3631
        %v3648 = vunpack.c.l.b16 %v3632
        %v3649 = vpack.c.b16 %v3642, %v3641
        %v3650 = vpack.c.b16 %v3644, %v3643
        %v3651 = vpack.c.b16 %v3646, %v3645
        %v3652 = vpack.c.b16 %v3648, %v3647
        %v3658 = vsel %vm170, %v3620, 0
        %v3661 = vsel %vm170, %v3621, 0
        %v3664 = vsel %vm170, %v3622, 0
        %v3667 = vsel %vm170, %v3623, 0
        %3669 = vmatprep.subr.bf16.mxu0 0
        %3670 = vmatpush1.bf16.msra.mxu0 0
        %3671 = vmatprep.subr.bf16.mxu0 0
        %3672 = vmatpush1.bf16.msra.mxu0 0
        %3673 = vmatprep.subr.bf16.mxu0 0
        %3674 = vmatpush1.bf16.msra.mxu0 0
        %3675 = vmatprep.subr.bf16.mxu0 0
        %3676 = vmatpush1.bf16.msra.mxu0 0
        %3677 = vmatprep.subr.bf16.mxu0 0
        %3678 = vmatpush1.bf16.msra.mxu0 %v3652
        %3679 = vmatprep.subr.bf16.mxu0 0
        %3680 = vmatpush1.bf16.msra.mxu0 %v3651
        %3681 = vmatprep.subr.bf16.mxu0 0
        %3682 = vmatpush1.bf16.msra.mxu0 %v3650
        %3683 = vmatprep.subr.bf16.mxu0 0
        %3684 = vmatpush1.bf16.msra.mxu0 %v3649
        %3685 = vmatprep.subr.bf16.mxu0 0
        %3686 = vmatpush2.bf16.msra.mxu0 0
        %3687 = vmatprep.subr.bf16.mxu0 0
        %3688 = vmatpush2.bf16.msra.mxu0 0
        %3689 = vmatprep.subr.bf16.mxu0 0
        %3690 = vmatpush2.bf16.msra.mxu0 0
        %3691 = vmatprep.subr.bf16.mxu0 0
        %3692 = vmatpush2.bf16.msra.mxu0 0
        %3693 = vmatprep.subr.bf16.mxu0 0
        %3694 = vmatpush2.bf16.msra.mxu0 0
        %3695 = vmatprep.subr.bf16.mxu0 0
        %3696 = vmatpush2.bf16.msra.mxu0 0
        %3697 = vmatprep.subr.bf16.mxu0 0
        %3698 = vmatpush2.bf16.msra.mxu0 0
        %3699 = vmatprep.subr.bf16.mxu0 0
        %3700 = vmatpush2.bf16.msra.mxu0 0
        %3701 = vmatprep.mubr.bf16.mxu0 0
        %3702 = vmatmul.mubr.bf16.gmra.mxu0 %v3658
        %v3703 = vpop.f32.mrf.mxu0
        %v3704 = vadd.f32 0.0, %v3703
        %v3705 = vpop.f32.mrf.mxu0
        %v3706 = vpop.f32.mrf.mxu0
        %v3707 = vadd.f32 0.0, %v3706
        %v3708 = vpop.f32.mrf.mxu0
        %3709 = vmatprep.mubr.bf16.mxu0 0
        %3710 = vmatmul.mubr.bf16.gmra.mxu0 %v3661
        %v3711 = vpop.f32.mrf.mxu0
        %v3712 = vadd.f32 0.0, %v3711
        %v3713 = vpop.f32.mrf.mxu0
        %v3714 = vpop.f32.mrf.mxu0
        %v3715 = vadd.f32 0.0, %v3714
        %v3716 = vpop.f32.mrf.mxu0
        %3717 = vmatprep.mubr.bf16.mxu0 0
        %3718 = vmatmul.mubr.bf16.gmra.mxu0 %v3664
        %v3719 = vpop.f32.mrf.mxu0
        %v3720 = vadd.f32 0.0, %v3719
        %v3721 = vpop.f32.mrf.mxu0
        %v3722 = vpop.f32.mrf.mxu0
        %v3723 = vadd.f32 0.0, %v3722
        %v3724 = vpop.f32.mrf.mxu0
        %3725 = vmatprep.mubr.bf16.mxu0 0
        %3726 = vmatmul.mubr.bf16.gmra.mxu0 %v3667
        %v3727 = vpop.f32.mrf.mxu0
        %v3728 = vadd.f32 0.0, %v3727
        %v3729 = vpop.f32.mrf.mxu0
        %v3730 = vpop.f32.mrf.mxu0
        %v3731 = vadd.f32 0.0, %v3730
        %v3732 = vpop.f32.mrf.mxu0
        %3733 = vdwg.mxu0
        %v3734 = vadd.f32 %v3604, %v3704
        %v3735 = vadd.f32 %v3605, %v3707
        %v3736 = vadd.f32 %v3606, %v3712
        %v3737 = vadd.f32 %v3607, %v3715
        %v3738 = vadd.f32 %v3608, %v3720
        %v3739 = vadd.f32 %v3609, %v3723
        %v3740 = vadd.f32 %v3610, %v3728
        %v3741 = vadd.f32 %v3611, %v3731
        %s3742 = scalar_lea.vmem %s2, 2
        %v3743 = vld [vmem:[%s3742] sm:$0x1]
        %v3745 = vlaneseq
        %v3746 = vshrl.u32 %v3745, 7
        %v3747 = vsub.s32 0, %v3746
        %v3748 = vrot.slane %v3743, %v3747
        %v3750 = vadd.f32 %v3734, %v3748
        %v3751 = vadd.f32 %v3735, %v3748
        %v3752 = vadd.f32 %v3736, %v3748
        %v3753 = vadd.f32 %v3737, %v3748
        %v3754 = vadd.f32 %v3738, %v3748
        %v3755 = vadd.f32 %v3739, %v3748
        %v3756 = vadd.f32 %v3740, %v3748
        %v3757 = vadd.f32 %v3741, %v3748
        %v3758 = vmax.f32 %v3750, 0.0
        %v3759 = vmax.f32 %v3751, 0.0
        %v3760 = vmax.f32 %v3752, 0.0
        %v3761 = vmax.f32 %v3753, 0.0
        %v3762 = vmax.f32 %v3754, 0.0
        %v3763 = vmax.f32 %v3755, 0.0
        %v3764 = vmax.f32 %v3756, 0.0
        %v3765 = vmax.f32 %v3757, 0.0
        %3766 = vst.msk [vmem:[%s200 + $0x1] sm:$0xff] %vm170, %v3758
        %3767 = vst.msk [vmem:[%s200 + $0x11] sm:$0xff] %vm170, %v3759
        %3768 = vst.msk [vmem:[%s200 + $0x21] sm:$0xff] %vm170, %v3760
        %3769 = vst.msk [vmem:[%s200 + $0x31] sm:$0xff] %vm170, %v3761
        %3770 = vst.msk [vmem:[%s200 + $0x41] sm:$0xff] %vm170, %v3762
        %3771 = vst.msk [vmem:[%s200 + $0x51] sm:$0xff] %vm170, %v3763
        %3772 = vst.msk [vmem:[%s200 + $0x61] sm:$0xff] %vm170, %v3764
        %3773 = vst.msk [vmem:[%s200 + $0x71] sm:$0xff] %vm170, %v3765
        %v3774 = vld [vmem:[#allocation2] sm:$0xff]
        %v3775 = vld [vmem:[#allocation2 + $0x10] sm:$0xff]
        %v3776 = vld [vmem:[#allocation2 + $0x20] sm:$0xff]
        %v3777 = vld [vmem:[#allocation2 + $0x30] sm:$0xff]
        %v3778 = vld [vmem:[#allocation2 + $0x40] sm:$0xff]
        %v3779 = vld [vmem:[#allocation2 + $0x50] sm:$0xff]
        %v3780 = vld [vmem:[#allocation2 + $0x60] sm:$0xff]
        %v3781 = vld [vmem:[#allocation2 + $0x70] sm:$0xff]
        %v3782 = vpack.c.bf16 %v3775, %v3774
        %v3783 = vpack.c.bf16 %v3777, %v3776
        %v3784 = vpack.c.bf16 %v3779, %v3778
        %v3785 = vpack.c.bf16 %v3781, %v3780
        %s3786 = scalar_lea.vmem %s1, 864
        %v3787 = vld [vmem:[%s3786] sm:$0xf]
        %v3788 = vld [vmem:[%s3786 + $0x4] sm:$0xf]
        %v3789 = vld [vmem:[%s3786 + $0x8] sm:$0xf]
        %v3790 = vld [vmem:[%s3786 + $0xc] sm:$0xf]
        %v3791 = vld [vmem:[%s3786 + $0x10] sm:$0xf]
        %v3792 = vld [vmem:[%s3786 + $0x14] sm:$0xf]
        %v3793 = vld [vmem:[%s3786 + $0x18] sm:$0xf]
        %v3794 = vld [vmem:[%s3786 + $0x1c] sm:$0xf]
        %v3795 = vld [vmem:[#allocation2 + $0x1] sm:$0xff]
        %v3796 = vld [vmem:[#allocation2 + $0x11] sm:$0xff]
        %v3797 = vld [vmem:[#allocation2 + $0x21] sm:$0xff]
        %v3798 = vld [vmem:[#allocation2 + $0x31] sm:$0xff]
        %v3799 = vld [vmem:[#allocation2 + $0x41] sm:$0xff]
        %v3800 = vld [vmem:[#allocation2 + $0x51] sm:$0xff]
        %v3801 = vld [vmem:[#allocation2 + $0x61] sm:$0xff]
        %v3802 = vld [vmem:[#allocation2 + $0x71] sm:$0xff]
        %v3803 = vpack.c.bf16 %v3796, %v3795
        %v3804 = vpack.c.bf16 %v3798, %v3797
        %v3805 = vpack.c.bf16 %v3800, %v3799
        %v3806 = vpack.c.bf16 %v3802, %v3801
        %s3807 = scalar_lea.vmem %s1, 896
        %v3808 = vld [vmem:[%s3807] sm:$0xf]
        %v3809 = vld [vmem:[%s3807 + $0x4] sm:$0xf]
        %v3810 = vld [vmem:[%s3807 + $0x8] sm:$0xf]
        %v3811 = vld [vmem:[%s3807 + $0xc] sm:$0xf]
        %v3812 = vld [vmem:[%s3807 + $0x10] sm:$0xf]
        %v3813 = vld [vmem:[%s3807 + $0x14] sm:$0xf]
        %v3814 = vld [vmem:[%s3807 + $0x18] sm:$0xf]
        %v3815 = vld [vmem:[%s3807 + $0x1c] sm:$0xf]
        %v3824 = vunpack.c.l.b16 %v3808
        %v3825 = vunpack.c.l.b16 %v3809
        %v3826 = vunpack.c.l.b16 %v3810
        %v3827 = vunpack.c.l.b16 %v3811
        %v3828 = vunpack.c.l.b16 %v3812
        %v3829 = vunpack.c.l.b16 %v3813
        %v3830 = vunpack.c.l.b16 %v3814
        %v3831 = vunpack.c.l.b16 %v3815
        %v3832 = vpack.c.b16 %v3825, %v3824
        %v3833 = vpack.c.b16 %v3827, %v3826
        %v3834 = vpack.c.b16 %v3829, %v3828
        %v3835 = vpack.c.b16 %v3831, %v3830
        %v3841 = vsel %vm170, %v3803, 0
        %v3844 = vsel %vm170, %v3804, 0
        %v3847 = vsel %vm170, %v3805, 0
        %v3850 = vsel %vm170, %v3806, 0
        %3852 = vmatprep.subr.bf16.mxu0 0
        %3853 = vmatpush1.bf16.msra.mxu0 0
        %3854 = vmatprep.subr.bf16.mxu0 0
        %3855 = vmatpush1.bf16.msra.mxu0 0
        %3856 = vmatprep.subr.bf16.mxu0 0
        %3857 = vmatpush1.bf16.msra.mxu0 0
        %3858 = vmatprep.subr.bf16.mxu0 0
        %3859 = vmatpush1.bf16.msra.mxu0 0
        %3860 = vmatprep.subr.bf16.mxu0 0
        %3861 = vmatpush1.bf16.msra.mxu0 %v3835
        %3862 = vmatprep.subr.bf16.mxu0 0
        %3863 = vmatpush1.bf16.msra.mxu0 %v3834
        %3864 = vmatprep.subr.bf16.mxu0 0
        %3865 = vmatpush1.bf16.msra.mxu0 %v3833
        %3866 = vmatprep.subr.bf16.mxu0 0
        %3867 = vmatpush1.bf16.msra.mxu0 %v3832
        %3868 = vmatprep.subr.bf16.mxu0 0
        %3869 = vmatpush2.bf16.msra.mxu0 0
        %3870 = vmatprep.subr.bf16.mxu0 0
        %3871 = vmatpush2.bf16.msra.mxu0 0
        %3872 = vmatprep.subr.bf16.mxu0 0
        %3873 = vmatpush2.bf16.msra.mxu0 0
        %3874 = vmatprep.subr.bf16.mxu0 0
        %3875 = vmatpush2.bf16.msra.mxu0 0
        %3876 = vmatprep.subr.bf16.mxu0 0
        %3877 = vmatpush2.bf16.msra.mxu0 0
        %3878 = vmatprep.subr.bf16.mxu0 0
        %3879 = vmatpush2.bf16.msra.mxu0 0
        %3880 = vmatprep.subr.bf16.mxu0 0
        %3881 = vmatpush2.bf16.msra.mxu0 0
        %3882 = vmatprep.subr.bf16.mxu0 0
        %3883 = vmatpush2.bf16.msra.mxu0 0
        %3884 = vmatprep.mubr.bf16.mxu0 0
        %3885 = vmatmul.mubr.bf16.gmra.mxu0 %v3841
        %v3886 = vpop.f32.mrf.mxu0
        %v3887 = vadd.f32 0.0, %v3886
        %v3888 = vpop.f32.mrf.mxu0
        %v3889 = vpop.f32.mrf.mxu0
        %v3890 = vadd.f32 0.0, %v3889
        %v3891 = vpop.f32.mrf.mxu0
        %3892 = vmatprep.mubr.bf16.mxu0 0
        %3893 = vmatmul.mubr.bf16.gmra.mxu0 %v3844
        %v3894 = vpop.f32.mrf.mxu0
        %v3895 = vadd.f32 0.0, %v3894
        %v3896 = vpop.f32.mrf.mxu0
        %v3897 = vpop.f32.mrf.mxu0
        %v3898 = vadd.f32 0.0, %v3897
        %v3899 = vpop.f32.mrf.mxu0
        %3900 = vmatprep.mubr.bf16.mxu0 0
        %3901 = vmatmul.mubr.bf16.gmra.mxu0 %v3847
        %v3902 = vpop.f32.mrf.mxu0
        %v3903 = vadd.f32 0.0, %v3902
        %v3904 = vpop.f32.mrf.mxu0
        %v3905 = vpop.f32.mrf.mxu0
        %v3906 = vadd.f32 0.0, %v3905
        %v3907 = vpop.f32.mrf.mxu0
        %3908 = vmatprep.mubr.bf16.mxu0 0
        %3909 = vmatmul.mubr.bf16.gmra.mxu0 %v3850
        %v3910 = vpop.f32.mrf.mxu0
        %v3911 = vadd.f32 0.0, %v3910
        %v3912 = vpop.f32.mrf.mxu0
        %v3913 = vpop.f32.mrf.mxu0
        %v3914 = vadd.f32 0.0, %v3913
        %v3915 = vpop.f32.mrf.mxu0
        %3916 = vdwg.mxu0
        %v3925 = vunpack.c.l.b16 %v3787
        %v3926 = vunpack.c.l.b16 %v3788
        %v3927 = vunpack.c.l.b16 %v3789
        %v3928 = vunpack.c.l.b16 %v3790
        %v3929 = vunpack.c.l.b16 %v3791
        %v3930 = vunpack.c.l.b16 %v3792
        %v3931 = vunpack.c.l.b16 %v3793
        %v3932 = vunpack.c.l.b16 %v3794
        %v3933 = vpack.c.b16 %v3926, %v3925
        %v3934 = vpack.c.b16 %v3928, %v3927
        %v3935 = vpack.c.b16 %v3930, %v3929
        %v3936 = vpack.c.b16 %v3932, %v3931
        %v3942 = vsel %vm170, %v3782, 0
        %v3945 = vsel %vm170, %v3783, 0
        %v3948 = vsel %vm170, %v3784, 0
        %v3951 = vsel %vm170, %v3785, 0
        %3953 = vmatprep.subr.bf16.mxu0 0
        %3954 = vmatpush1.bf16.msra.mxu0 0
        %3955 = vmatprep.subr.bf16.mxu0 0
        %3956 = vmatpush1.bf16.msra.mxu0 0
        %3957 = vmatprep.subr.bf16.mxu0 0
        %3958 = vmatpush1.bf16.msra.mxu0 0
        %3959 = vmatprep.subr.bf16.mxu0 0
        %3960 = vmatpush1.bf16.msra.mxu0 0
        %3961 = vmatprep.subr.bf16.mxu0 0
        %3962 = vmatpush1.bf16.msra.mxu0 %v3936
        %3963 = vmatprep.subr.bf16.mxu0 0
        %3964 = vmatpush1.bf16.msra.mxu0 %v3935
        %3965 = vmatprep.subr.bf16.mxu0 0
        %3966 = vmatpush1.bf16.msra.mxu0 %v3934
        %3967 = vmatprep.subr.bf16.mxu0 0
        %3968 = vmatpush1.bf16.msra.mxu0 %v3933
        %3969 = vmatprep.subr.bf16.mxu0 0
        %3970 = vmatpush2.bf16.msra.mxu0 0
        %3971 = vmatprep.subr.bf16.mxu0 0
        %3972 = vmatpush2.bf16.msra.mxu0 0
        %3973 = vmatprep.subr.bf16.mxu0 0
        %3974 = vmatpush2.bf16.msra.mxu0 0
        %3975 = vmatprep.subr.bf16.mxu0 0
        %3976 = vmatpush2.bf16.msra.mxu0 0
        %3977 = vmatprep.subr.bf16.mxu0 0
        %3978 = vmatpush2.bf16.msra.mxu0 0
        %3979 = vmatprep.subr.bf16.mxu0 0
        %3980 = vmatpush2.bf16.msra.mxu0 0
        %3981 = vmatprep.subr.bf16.mxu0 0
        %3982 = vmatpush2.bf16.msra.mxu0 0
        %3983 = vmatprep.subr.bf16.mxu0 0
        %3984 = vmatpush2.bf16.msra.mxu0 0
        %3985 = vmatprep.mubr.bf16.mxu0 0
        %3986 = vmatmul.mubr.bf16.gmra.mxu0 %v3942
        %v3987 = vpop.f32.mrf.mxu0
        %v3988 = vadd.f32 %v3887, %v3987
        %v3989 = vpop.f32.mrf.mxu0
        %v3990 = vpop.f32.mrf.mxu0
        %v3991 = vadd.f32 %v3890, %v3990
        %v3992 = vpop.f32.mrf.mxu0
        %3993 = vmatprep.mubr.bf16.mxu0 0
        %3994 = vmatmul.mubr.bf16.gmra.mxu0 %v3945
        %v3995 = vpop.f32.mrf.mxu0
        %v3996 = vadd.f32 %v3895, %v3995
        %v3997 = vpop.f32.mrf.mxu0
        %v3998 = vpop.f32.mrf.mxu0
        %v3999 = vadd.f32 %v3898, %v3998
        %v4000 = vpop.f32.mrf.mxu0
        %4001 = vmatprep.mubr.bf16.mxu0 0
        %4002 = vmatmul.mubr.bf16.gmra.mxu0 %v3948
        %v4003 = vpop.f32.mrf.mxu0
        %v4004 = vadd.f32 %v3903, %v4003
        %v4005 = vpop.f32.mrf.mxu0
        %v4006 = vpop.f32.mrf.mxu0
        %v4007 = vadd.f32 %v3906, %v4006
        %v4008 = vpop.f32.mrf.mxu0
        %4009 = vmatprep.mubr.bf16.mxu0 0
        %4010 = vmatmul.mubr.bf16.gmra.mxu0 %v3951
        %v4011 = vpop.f32.mrf.mxu0
        %v4012 = vadd.f32 %v3911, %v4011
        %v4013 = vpop.f32.mrf.mxu0
        %v4014 = vpop.f32.mrf.mxu0
        %v4015 = vadd.f32 %v3914, %v4014
        %v4016 = vpop.f32.mrf.mxu0
        %4017 = vdwg.mxu0
        %v4018 = vld [vmem:[#allocation2 + $0x2] sm:$0xff]
        %v4019 = vld [vmem:[#allocation2 + $0x12] sm:$0xff]
        %v4020 = vld [vmem:[#allocation2 + $0x22] sm:$0xff]
        %v4021 = vld [vmem:[#allocation2 + $0x32] sm:$0xff]
        %v4022 = vld [vmem:[#allocation2 + $0x42] sm:$0xff]
        %v4023 = vld [vmem:[#allocation2 + $0x52] sm:$0xff]
        %v4024 = vld [vmem:[#allocation2 + $0x62] sm:$0xff]
        %v4025 = vld [vmem:[#allocation2 + $0x72] sm:$0xff]
        %v4026 = vpack.c.bf16 %v4019, %v4018
        %v4027 = vpack.c.bf16 %v4021, %v4020
        %v4028 = vpack.c.bf16 %v4023, %v4022
        %v4029 = vpack.c.bf16 %v4025, %v4024
        %s4030 = scalar_lea.vmem %s1, 928
        %v4031 = vld [vmem:[%s4030] sm:$0xf]
        %v4032 = vld [vmem:[%s4030 + $0x4] sm:$0xf]
        %v4033 = vld [vmem:[%s4030 + $0x8] sm:$0xf]
        %v4034 = vld [vmem:[%s4030 + $0xc] sm:$0xf]
        %v4035 = vld [vmem:[%s4030 + $0x10] sm:$0xf]
        %v4036 = vld [vmem:[%s4030 + $0x14] sm:$0xf]
        %v4037 = vld [vmem:[%s4030 + $0x18] sm:$0xf]
        %v4038 = vld [vmem:[%s4030 + $0x1c] sm:$0xf]
        %v4047 = vunpack.c.l.b16 %v4031
        %v4048 = vunpack.c.l.b16 %v4032
        %v4049 = vunpack.c.l.b16 %v4033
        %v4050 = vunpack.c.l.b16 %v4034
        %v4051 = vunpack.c.l.b16 %v4035
        %v4052 = vunpack.c.l.b16 %v4036
        %v4053 = vunpack.c.l.b16 %v4037
        %v4054 = vunpack.c.l.b16 %v4038
        %v4055 = vpack.c.b16 %v4048, %v4047
        %v4056 = vpack.c.b16 %v4050, %v4049
        %v4057 = vpack.c.b16 %v4052, %v4051
        %v4058 = vpack.c.b16 %v4054, %v4053
        %v4064 = vsel %vm170, %v4026, 0
        %v4067 = vsel %vm170, %v4027, 0
        %v4070 = vsel %vm170, %v4028, 0
        %v4073 = vsel %vm170, %v4029, 0
        %4075 = vmatprep.subr.bf16.mxu0 0
        %4076 = vmatpush1.bf16.msra.mxu0 0
        %4077 = vmatprep.subr.bf16.mxu0 0
        %4078 = vmatpush1.bf16.msra.mxu0 0
        %4079 = vmatprep.subr.bf16.mxu0 0
        %4080 = vmatpush1.bf16.msra.mxu0 0
        %4081 = vmatprep.subr.bf16.mxu0 0
        %4082 = vmatpush1.bf16.msra.mxu0 0
        %4083 = vmatprep.subr.bf16.mxu0 0
        %4084 = vmatpush1.bf16.msra.mxu0 %v4058
        %4085 = vmatprep.subr.bf16.mxu0 0
        %4086 = vmatpush1.bf16.msra.mxu0 %v4057
        %4087 = vmatprep.subr.bf16.mxu0 0
        %4088 = vmatpush1.bf16.msra.mxu0 %v4056
        %4089 = vmatprep.subr.bf16.mxu0 0
        %4090 = vmatpush1.bf16.msra.mxu0 %v4055
        %4091 = vmatprep.subr.bf16.mxu0 0
        %4092 = vmatpush2.bf16.msra.mxu0 0
        %4093 = vmatprep.subr.bf16.mxu0 0
        %4094 = vmatpush2.bf16.msra.mxu0 0
        %4095 = vmatprep.subr.bf16.mxu0 0
        %4096 = vmatpush2.bf16.msra.mxu0 0
        %4097 = vmatprep.subr.bf16.mxu0 0
        %4098 = vmatpush2.bf16.msra.mxu0 0
        %4099 = vmatprep.subr.bf16.mxu0 0
        %4100 = vmatpush2.bf16.msra.mxu0 0
        %4101 = vmatprep.subr.bf16.mxu0 0
        %4102 = vmatpush2.bf16.msra.mxu0 0
        %4103 = vmatprep.subr.bf16.mxu0 0
        %4104 = vmatpush2.bf16.msra.mxu0 0
        %4105 = vmatprep.subr.bf16.mxu0 0
        %4106 = vmatpush2.bf16.msra.mxu0 0
        %4107 = vmatprep.mubr.bf16.mxu0 0
        %4108 = vmatmul.mubr.bf16.gmra.mxu0 %v4064
        %v4109 = vpop.f32.mrf.mxu0
        %v4110 = vadd.f32 0.0, %v4109
        %v4111 = vpop.f32.mrf.mxu0
        %v4112 = vpop.f32.mrf.mxu0
        %v4113 = vadd.f32 0.0, %v4112
        %v4114 = vpop.f32.mrf.mxu0
        %4115 = vmatprep.mubr.bf16.mxu0 0
        %4116 = vmatmul.mubr.bf16.gmra.mxu0 %v4067
        %v4117 = vpop.f32.mrf.mxu0
        %v4118 = vadd.f32 0.0, %v4117
        %v4119 = vpop.f32.mrf.mxu0
        %v4120 = vpop.f32.mrf.mxu0
        %v4121 = vadd.f32 0.0, %v4120
        %v4122 = vpop.f32.mrf.mxu0
        %4123 = vmatprep.mubr.bf16.mxu0 0
        %4124 = vmatmul.mubr.bf16.gmra.mxu0 %v4070
        %v4125 = vpop.f32.mrf.mxu0
        %v4126 = vadd.f32 0.0, %v4125
        %v4127 = vpop.f32.mrf.mxu0
        %v4128 = vpop.f32.mrf.mxu0
        %v4129 = vadd.f32 0.0, %v4128
        %v4130 = vpop.f32.mrf.mxu0
        %4131 = vmatprep.mubr.bf16.mxu0 0
        %4132 = vmatmul.mubr.bf16.gmra.mxu0 %v4073
        %v4133 = vpop.f32.mrf.mxu0
        %v4134 = vadd.f32 0.0, %v4133
        %v4135 = vpop.f32.mrf.mxu0
        %v4136 = vpop.f32.mrf.mxu0
        %v4137 = vadd.f32 0.0, %v4136
        %v4138 = vpop.f32.mrf.mxu0
        %4139 = vdwg.mxu0
        %v4140 = vadd.f32 %v3988, %v4110
        %v4141 = vadd.f32 %v3991, %v4113
        %v4142 = vadd.f32 %v3996, %v4118
        %v4143 = vadd.f32 %v3999, %v4121
        %v4144 = vadd.f32 %v4004, %v4126
        %v4145 = vadd.f32 %v4007, %v4129
        %v4146 = vadd.f32 %v4012, %v4134
        %v4147 = vadd.f32 %v4015, %v4137
        %v4148 = vld [vmem:[%s200] sm:$0xff]
        %v4149 = vld [vmem:[%s200 + $0x10] sm:$0xff]
        %v4150 = vld [vmem:[%s200 + $0x20] sm:$0xff]
        %v4151 = vld [vmem:[%s200 + $0x30] sm:$0xff]
        %v4152 = vld [vmem:[%s200 + $0x40] sm:$0xff]
        %v4153 = vld [vmem:[%s200 + $0x50] sm:$0xff]
        %v4154 = vld [vmem:[%s200 + $0x60] sm:$0xff]
        %v4155 = vld [vmem:[%s200 + $0x70] sm:$0xff]
        %v4156 = vpack.c.bf16 %v4149, %v4148
        %v4157 = vpack.c.bf16 %v4151, %v4150
        %v4158 = vpack.c.bf16 %v4153, %v4152
        %v4159 = vpack.c.bf16 %v4155, %v4154
        %s4160 = scalar_lea.vmem %s1, 960
        %v4161 = vld [vmem:[%s4160] sm:$0xf]
        %v4162 = vld [vmem:[%s4160 + $0x4] sm:$0xf]
        %v4163 = vld [vmem:[%s4160 + $0x8] sm:$0xf]
        %v4164 = vld [vmem:[%s4160 + $0xc] sm:$0xf]
        %v4165 = vld [vmem:[%s4160 + $0x10] sm:$0xf]
        %v4166 = vld [vmem:[%s4160 + $0x14] sm:$0xf]
        %v4167 = vld [vmem:[%s4160 + $0x18] sm:$0xf]
        %v4168 = vld [vmem:[%s4160 + $0x1c] sm:$0xf]
        %v4177 = vunpack.c.l.b16 %v4161
        %v4178 = vunpack.c.l.b16 %v4162
        %v4179 = vunpack.c.l.b16 %v4163
        %v4180 = vunpack.c.l.b16 %v4164
        %v4181 = vunpack.c.l.b16 %v4165
        %v4182 = vunpack.c.l.b16 %v4166
        %v4183 = vunpack.c.l.b16 %v4167
        %v4184 = vunpack.c.l.b16 %v4168
        %v4185 = vpack.c.b16 %v4178, %v4177
        %v4186 = vpack.c.b16 %v4180, %v4179
        %v4187 = vpack.c.b16 %v4182, %v4181
        %v4188 = vpack.c.b16 %v4184, %v4183
        %v4194 = vsel %vm170, %v4156, 0
        %v4197 = vsel %vm170, %v4157, 0
        %v4200 = vsel %vm170, %v4158, 0
        %v4203 = vsel %vm170, %v4159, 0
        %4205 = vmatprep.subr.bf16.mxu0 0
        %4206 = vmatpush1.bf16.msra.mxu0 0
        %4207 = vmatprep.subr.bf16.mxu0 0
        %4208 = vmatpush1.bf16.msra.mxu0 0
        %4209 = vmatprep.subr.bf16.mxu0 0
        %4210 = vmatpush1.bf16.msra.mxu0 0
        %4211 = vmatprep.subr.bf16.mxu0 0
        %4212 = vmatpush1.bf16.msra.mxu0 0
        %4213 = vmatprep.subr.bf16.mxu0 0
        %4214 = vmatpush1.bf16.msra.mxu0 %v4188
        %4215 = vmatprep.subr.bf16.mxu0 0
        %4216 = vmatpush1.bf16.msra.mxu0 %v4187
        %4217 = vmatprep.subr.bf16.mxu0 0
        %4218 = vmatpush1.bf16.msra.mxu0 %v4186
        %4219 = vmatprep.subr.bf16.mxu0 0
        %4220 = vmatpush1.bf16.msra.mxu0 %v4185
        %4221 = vmatprep.subr.bf16.mxu0 0
        %4222 = vmatpush2.bf16.msra.mxu0 0
        %4223 = vmatprep.subr.bf16.mxu0 0
        %4224 = vmatpush2.bf16.msra.mxu0 0
        %4225 = vmatprep.subr.bf16.mxu0 0
        %4226 = vmatpush2.bf16.msra.mxu0 0
        %4227 = vmatprep.subr.bf16.mxu0 0
        %4228 = vmatpush2.bf16.msra.mxu0 0
        %4229 = vmatprep.subr.bf16.mxu0 0
        %4230 = vmatpush2.bf16.msra.mxu0 0
        %4231 = vmatprep.subr.bf16.mxu0 0
        %4232 = vmatpush2.bf16.msra.mxu0 0
        %4233 = vmatprep.subr.bf16.mxu0 0
        %4234 = vmatpush2.bf16.msra.mxu0 0
        %4235 = vmatprep.subr.bf16.mxu0 0
        %4236 = vmatpush2.bf16.msra.mxu0 0
        %4237 = vmatprep.mubr.bf16.mxu0 0
        %4238 = vmatmul.mubr.bf16.gmra.mxu0 %v4194
        %v4239 = vpop.f32.mrf.mxu0
        %v4240 = vadd.f32 0.0, %v4239
        %v4241 = vpop.f32.mrf.mxu0
        %v4242 = vpop.f32.mrf.mxu0
        %v4243 = vadd.f32 0.0, %v4242
        %v4244 = vpop.f32.mrf.mxu0
        %4245 = vmatprep.mubr.bf16.mxu0 0
        %4246 = vmatmul.mubr.bf16.gmra.mxu0 %v4197
        %v4247 = vpop.f32.mrf.mxu0
        %v4248 = vadd.f32 0.0, %v4247
        %v4249 = vpop.f32.mrf.mxu0
        %v4250 = vpop.f32.mrf.mxu0
        %v4251 = vadd.f32 0.0, %v4250
        %v4252 = vpop.f32.mrf.mxu0
        %4253 = vmatprep.mubr.bf16.mxu0 0
        %4254 = vmatmul.mubr.bf16.gmra.mxu0 %v4200
        %v4255 = vpop.f32.mrf.mxu0
        %v4256 = vadd.f32 0.0, %v4255
        %v4257 = vpop.f32.mrf.mxu0
        %v4258 = vpop.f32.mrf.mxu0
        %v4259 = vadd.f32 0.0, %v4258
        %v4260 = vpop.f32.mrf.mxu0
        %4261 = vmatprep.mubr.bf16.mxu0 0
        %4262 = vmatmul.mubr.bf16.gmra.mxu0 %v4203
        %v4263 = vpop.f32.mrf.mxu0
        %v4264 = vadd.f32 0.0, %v4263
        %v4265 = vpop.f32.mrf.mxu0
        %v4266 = vpop.f32.mrf.mxu0
        %v4267 = vadd.f32 0.0, %v4266
        %v4268 = vpop.f32.mrf.mxu0
        %4269 = vdwg.mxu0
        %v4270 = vadd.f32 %v4140, %v4240
        %v4271 = vadd.f32 %v4141, %v4243
        %v4272 = vadd.f32 %v4142, %v4248
        %v4273 = vadd.f32 %v4143, %v4251
        %v4274 = vadd.f32 %v4144, %v4256
        %v4275 = vadd.f32 %v4145, %v4259
        %v4276 = vadd.f32 %v4146, %v4264
        %v4277 = vadd.f32 %v4147, %v4267
        %v4278 = vld [vmem:[%s200 + $0x1] sm:$0xff]
        %v4279 = vld [vmem:[%s200 + $0x11] sm:$0xff]
        %v4280 = vld [vmem:[%s200 + $0x21] sm:$0xff]
        %v4281 = vld [vmem:[%s200 + $0x31] sm:$0xff]
        %v4282 = vld [vmem:[%s200 + $0x41] sm:$0xff]
        %v4283 = vld [vmem:[%s200 + $0x51] sm:$0xff]
        %v4284 = vld [vmem:[%s200 + $0x61] sm:$0xff]
        %v4285 = vld [vmem:[%s200 + $0x71] sm:$0xff]
        %v4286 = vpack.c.bf16 %v4279, %v4278
        %v4287 = vpack.c.bf16 %v4281, %v4280
        %v4288 = vpack.c.bf16 %v4283, %v4282
        %v4289 = vpack.c.bf16 %v4285, %v4284
        %s4290 = scalar_lea.vmem %s1, 992
        %v4291 = vld [vmem:[%s4290] sm:$0xf]
        %v4292 = vld [vmem:[%s4290 + $0x4] sm:$0xf]
        %v4293 = vld [vmem:[%s4290 + $0x8] sm:$0xf]
        %v4294 = vld [vmem:[%s4290 + $0xc] sm:$0xf]
        %v4295 = vld [vmem:[%s4290 + $0x10] sm:$0xf]
        %v4296 = vld [vmem:[%s4290 + $0x14] sm:$0xf]
        %v4297 = vld [vmem:[%s4290 + $0x18] sm:$0xf]
        %v4298 = vld [vmem:[%s4290 + $0x1c] sm:$0xf]
        %v4307 = vunpack.c.l.b16 %v4291
        %v4308 = vunpack.c.l.b16 %v4292
        %v4309 = vunpack.c.l.b16 %v4293
        %v4310 = vunpack.c.l.b16 %v4294
        %v4311 = vunpack.c.l.b16 %v4295
        %v4312 = vunpack.c.l.b16 %v4296
        %v4313 = vunpack.c.l.b16 %v4297
        %v4314 = vunpack.c.l.b16 %v4298
        %v4315 = vpack.c.b16 %v4308, %v4307
        %v4316 = vpack.c.b16 %v4310, %v4309
        %v4317 = vpack.c.b16 %v4312, %v4311
        %v4318 = vpack.c.b16 %v4314, %v4313
        %v4324 = vsel %vm170, %v4286, 0
        %v4327 = vsel %vm170, %v4287, 0
        %v4330 = vsel %vm170, %v4288, 0
        %v4333 = vsel %vm170, %v4289, 0
        %4335 = vmatprep.subr.bf16.mxu0 0
        %4336 = vmatpush1.bf16.msra.mxu0 0
        %4337 = vmatprep.subr.bf16.mxu0 0
        %4338 = vmatpush1.bf16.msra.mxu0 0
        %4339 = vmatprep.subr.bf16.mxu0 0
        %4340 = vmatpush1.bf16.msra.mxu0 0
        %4341 = vmatprep.subr.bf16.mxu0 0
        %4342 = vmatpush1.bf16.msra.mxu0 0
        %4343 = vmatprep.subr.bf16.mxu0 0
        %4344 = vmatpush1.bf16.msra.mxu0 %v4318
        %4345 = vmatprep.subr.bf16.mxu0 0
        %4346 = vmatpush1.bf16.msra.mxu0 %v4317
        %4347 = vmatprep.subr.bf16.mxu0 0
        %4348 = vmatpush1.bf16.msra.mxu0 %v4316
        %4349 = vmatprep.subr.bf16.mxu0 0
        %4350 = vmatpush1.bf16.msra.mxu0 %v4315
        %4351 = vmatprep.subr.bf16.mxu0 0
        %4352 = vmatpush2.bf16.msra.mxu0 0
        %4353 = vmatprep.subr.bf16.mxu0 0
        %4354 = vmatpush2.bf16.msra.mxu0 0
        %4355 = vmatprep.subr.bf16.mxu0 0
        %4356 = vmatpush2.bf16.msra.mxu0 0
        %4357 = vmatprep.subr.bf16.mxu0 0
        %4358 = vmatpush2.bf16.msra.mxu0 0
        %4359 = vmatprep.subr.bf16.mxu0 0
        %4360 = vmatpush2.bf16.msra.mxu0 0
        %4361 = vmatprep.subr.bf16.mxu0 0
        %4362 = vmatpush2.bf16.msra.mxu0 0
        %4363 = vmatprep.subr.bf16.mxu0 0
        %4364 = vmatpush2.bf16.msra.mxu0 0
        %4365 = vmatprep.subr.bf16.mxu0 0
        %4366 = vmatpush2.bf16.msra.mxu0 0
        %4367 = vmatprep.mubr.bf16.mxu0 0
        %4368 = vmatmul.mubr.bf16.gmra.mxu0 %v4324
        %v4369 = vpop.f32.mrf.mxu0
        %v4370 = vadd.f32 0.0, %v4369
        %v4371 = vpop.f32.mrf.mxu0
        %v4372 = vpop.f32.mrf.mxu0
        %v4373 = vadd.f32 0.0, %v4372
        %v4374 = vpop.f32.mrf.mxu0
        %4375 = vmatprep.mubr.bf16.mxu0 0
        %4376 = vmatmul.mubr.bf16.gmra.mxu0 %v4327
        %v4377 = vpop.f32.mrf.mxu0
        %v4378 = vadd.f32 0.0, %v4377
        %v4379 = vpop.f32.mrf.mxu0
        %v4380 = vpop.f32.mrf.mxu0
        %v4381 = vadd.f32 0.0, %v4380
        %v4382 = vpop.f32.mrf.mxu0
        %4383 = vmatprep.mubr.bf16.mxu0 0
        %4384 = vmatmul.mubr.bf16.gmra.mxu0 %v4330
        %v4385 = vpop.f32.mrf.mxu0
        %v4386 = vadd.f32 0.0, %v4385
        %v4387 = vpop.f32.mrf.mxu0
        %v4388 = vpop.f32.mrf.mxu0
        %v4389 = vadd.f32 0.0, %v4388
        %v4390 = vpop.f32.mrf.mxu0
        %4391 = vmatprep.mubr.bf16.mxu0 0
        %4392 = vmatmul.mubr.bf16.gmra.mxu0 %v4333
        %v4393 = vpop.f32.mrf.mxu0
        %v4394 = vadd.f32 0.0, %v4393
        %v4395 = vpop.f32.mrf.mxu0
        %v4396 = vpop.f32.mrf.mxu0
        %v4397 = vadd.f32 0.0, %v4396
        %v4398 = vpop.f32.mrf.mxu0
        %4399 = vdwg.mxu0
        %v4400 = vadd.f32 %v4270, %v4370
        %v4401 = vadd.f32 %v4271, %v4373
        %v4402 = vadd.f32 %v4272, %v4378
        %v4403 = vadd.f32 %v4273, %v4381
        %v4404 = vadd.f32 %v4274, %v4386
        %v4405 = vadd.f32 %v4275, %v4389
        %v4406 = vadd.f32 %v4276, %v4394
        %v4407 = vadd.f32 %v4277, %v4397
        %v4408 = vld [vmem:[%s200 + $0x2] sm:$0xff]
        %v4409 = vld [vmem:[%s200 + $0x12] sm:$0xff]
        %v4410 = vld [vmem:[%s200 + $0x22] sm:$0xff]
        %v4411 = vld [vmem:[%s200 + $0x32] sm:$0xff]
        %v4412 = vld [vmem:[%s200 + $0x42] sm:$0xff]
        %v4413 = vld [vmem:[%s200 + $0x52] sm:$0xff]
        %v4414 = vld [vmem:[%s200 + $0x62] sm:$0xff]
        %v4415 = vld [vmem:[%s200 + $0x72] sm:$0xff]
        %v4416 = vpack.c.bf16 %v4409, %v4408
        %v4417 = vpack.c.bf16 %v4411, %v4410
        %v4418 = vpack.c.bf16 %v4413, %v4412
        %v4419 = vpack.c.bf16 %v4415, %v4414
        %s4420 = scalar_lea.vmem %s1, 1024
        %v4421 = vld [vmem:[%s4420] sm:$0xf]
        %v4422 = vld [vmem:[%s4420 + $0x4] sm:$0xf]
        %v4423 = vld [vmem:[%s4420 + $0x8] sm:$0xf]
        %v4424 = vld [vmem:[%s4420 + $0xc] sm:$0xf]
        %v4425 = vld [vmem:[%s4420 + $0x10] sm:$0xf]
        %v4426 = vld [vmem:[%s4420 + $0x14] sm:$0xf]
        %v4427 = vld [vmem:[%s4420 + $0x18] sm:$0xf]
        %v4428 = vld [vmem:[%s4420 + $0x1c] sm:$0xf]
        %v4437 = vunpack.c.l.b16 %v4421
        %v4438 = vunpack.c.l.b16 %v4422
        %v4439 = vunpack.c.l.b16 %v4423
        %v4440 = vunpack.c.l.b16 %v4424
        %v4441 = vunpack.c.l.b16 %v4425
        %v4442 = vunpack.c.l.b16 %v4426
        %v4443 = vunpack.c.l.b16 %v4427
        %v4444 = vunpack.c.l.b16 %v4428
        %v4445 = vpack.c.b16 %v4438, %v4437
        %v4446 = vpack.c.b16 %v4440, %v4439
        %v4447 = vpack.c.b16 %v4442, %v4441
        %v4448 = vpack.c.b16 %v4444, %v4443
        %v4454 = vsel %vm170, %v4416, 0
        %v4457 = vsel %vm170, %v4417, 0
        %v4460 = vsel %vm170, %v4418, 0
        %v4463 = vsel %vm170, %v4419, 0
        %4465 = vmatprep.subr.bf16.mxu0 0
        %4466 = vmatpush1.bf16.msra.mxu0 0
        %4467 = vmatprep.subr.bf16.mxu0 0
        %4468 = vmatpush1.bf16.msra.mxu0 0
        %4469 = vmatprep.subr.bf16.mxu0 0
        %4470 = vmatpush1.bf16.msra.mxu0 0
        %4471 = vmatprep.subr.bf16.mxu0 0
        %4472 = vmatpush1.bf16.msra.mxu0 0
        %4473 = vmatprep.subr.bf16.mxu0 0
        %4474 = vmatpush1.bf16.msra.mxu0 %v4448
        %4475 = vmatprep.subr.bf16.mxu0 0
        %4476 = vmatpush1.bf16.msra.mxu0 %v4447
        %4477 = vmatprep.subr.bf16.mxu0 0
        %4478 = vmatpush1.bf16.msra.mxu0 %v4446
        %4479 = vmatprep.subr.bf16.mxu0 0
        %4480 = vmatpush1.bf16.msra.mxu0 %v4445
        %4481 = vmatprep.subr.bf16.mxu0 0
        %4482 = vmatpush2.bf16.msra.mxu0 0
        %4483 = vmatprep.subr.bf16.mxu0 0
        %4484 = vmatpush2.bf16.msra.mxu0 0
        %4485 = vmatprep.subr.bf16.mxu0 0
        %4486 = vmatpush2.bf16.msra.mxu0 0
        %4487 = vmatprep.subr.bf16.mxu0 0
        %4488 = vmatpush2.bf16.msra.mxu0 0
        %4489 = vmatprep.subr.bf16.mxu0 0
        %4490 = vmatpush2.bf16.msra.mxu0 0
        %4491 = vmatprep.subr.bf16.mxu0 0
        %4492 = vmatpush2.bf16.msra.mxu0 0
        %4493 = vmatprep.subr.bf16.mxu0 0
        %4494 = vmatpush2.bf16.msra.mxu0 0
        %4495 = vmatprep.subr.bf16.mxu0 0
        %4496 = vmatpush2.bf16.msra.mxu0 0
        %4497 = vmatprep.mubr.bf16.mxu0 0
        %4498 = vmatmul.mubr.bf16.gmra.mxu0 %v4454
        %v4499 = vpop.f32.mrf.mxu0
        %v4500 = vadd.f32 0.0, %v4499
        %v4501 = vpop.f32.mrf.mxu0
        %v4502 = vpop.f32.mrf.mxu0
        %v4503 = vadd.f32 0.0, %v4502
        %v4504 = vpop.f32.mrf.mxu0
        %4505 = vmatprep.mubr.bf16.mxu0 0
        %4506 = vmatmul.mubr.bf16.gmra.mxu0 %v4457
        %v4507 = vpop.f32.mrf.mxu0
        %v4508 = vadd.f32 0.0, %v4507
        %v4509 = vpop.f32.mrf.mxu0
        %v4510 = vpop.f32.mrf.mxu0
        %v4511 = vadd.f32 0.0, %v4510
        %v4512 = vpop.f32.mrf.mxu0
        %4513 = vmatprep.mubr.bf16.mxu0 0
        %4514 = vmatmul.mubr.bf16.gmra.mxu0 %v4460
        %v4515 = vpop.f32.mrf.mxu0
        %v4516 = vadd.f32 0.0, %v4515
        %v4517 = vpop.f32.mrf.mxu0
        %v4518 = vpop.f32.mrf.mxu0
        %v4519 = vadd.f32 0.0, %v4518
        %v4520 = vpop.f32.mrf.mxu0
        %4521 = vmatprep.mubr.bf16.mxu0 0
        %4522 = vmatmul.mubr.bf16.gmra.mxu0 %v4463
        %v4523 = vpop.f32.mrf.mxu0
        %v4524 = vadd.f32 0.0, %v4523
        %v4525 = vpop.f32.mrf.mxu0
        %v4526 = vpop.f32.mrf.mxu0
        %v4527 = vadd.f32 0.0, %v4526
        %v4528 = vpop.f32.mrf.mxu0
        %4529 = vdwg.mxu0
        %v4530 = vadd.f32 %v4400, %v4500
        %v4531 = vadd.f32 %v4401, %v4503
        %v4532 = vadd.f32 %v4402, %v4508
        %v4533 = vadd.f32 %v4403, %v4511
        %v4534 = vadd.f32 %v4404, %v4516
        %v4535 = vadd.f32 %v4405, %v4519
        %v4536 = vadd.f32 %v4406, %v4524
        %v4537 = vadd.f32 %v4407, %v4527
        %v4538 = vld [vmem:[%s972] sm:$0xff]
        %v4539 = vld [vmem:[%s972 + $0x10] sm:$0xff]
        %v4540 = vld [vmem:[%s972 + $0x20] sm:$0xff]
        %v4541 = vld [vmem:[%s972 + $0x30] sm:$0xff]
        %v4542 = vld [vmem:[%s972 + $0x40] sm:$0xff]
        %v4543 = vld [vmem:[%s972 + $0x50] sm:$0xff]
        %v4544 = vld [vmem:[%s972 + $0x60] sm:$0xff]
        %v4545 = vld [vmem:[%s972 + $0x70] sm:$0xff]
        %v4546 = vpack.c.bf16 %v4539, %v4538
        %v4547 = vpack.c.bf16 %v4541, %v4540
        %v4548 = vpack.c.bf16 %v4543, %v4542
        %v4549 = vpack.c.bf16 %v4545, %v4544
        %s4550 = scalar_lea.vmem %s1, 1056
        %v4551 = vld [vmem:[%s4550] sm:$0xf]
        %v4552 = vld [vmem:[%s4550 + $0x4] sm:$0xf]
        %v4553 = vld [vmem:[%s4550 + $0x8] sm:$0xf]
        %v4554 = vld [vmem:[%s4550 + $0xc] sm:$0xf]
        %v4555 = vld [vmem:[%s4550 + $0x10] sm:$0xf]
        %v4556 = vld [vmem:[%s4550 + $0x14] sm:$0xf]
        %v4557 = vld [vmem:[%s4550 + $0x18] sm:$0xf]
        %v4558 = vld [vmem:[%s4550 + $0x1c] sm:$0xf]
        %v4567 = vunpack.c.l.b16 %v4551
        %v4568 = vunpack.c.l.b16 %v4552
        %v4569 = vunpack.c.l.b16 %v4553
        %v4570 = vunpack.c.l.b16 %v4554
        %v4571 = vunpack.c.l.b16 %v4555
        %v4572 = vunpack.c.l.b16 %v4556
        %v4573 = vunpack.c.l.b16 %v4557
        %v4574 = vunpack.c.l.b16 %v4558
        %v4575 = vpack.c.b16 %v4568, %v4567
        %v4576 = vpack.c.b16 %v4570, %v4569
        %v4577 = vpack.c.b16 %v4572, %v4571
        %v4578 = vpack.c.b16 %v4574, %v4573
        %v4584 = vsel %vm170, %v4546, 0
        %v4587 = vsel %vm170, %v4547, 0
        %v4590 = vsel %vm170, %v4548, 0
        %v4593 = vsel %vm170, %v4549, 0
        %4595 = vmatprep.subr.bf16.mxu0 0
        %4596 = vmatpush1.bf16.msra.mxu0 0
        %4597 = vmatprep.subr.bf16.mxu0 0
        %4598 = vmatpush1.bf16.msra.mxu0 0
        %4599 = vmatprep.subr.bf16.mxu0 0
        %4600 = vmatpush1.bf16.msra.mxu0 0
        %4601 = vmatprep.subr.bf16.mxu0 0
        %4602 = vmatpush1.bf16.msra.mxu0 0
        %4603 = vmatprep.subr.bf16.mxu0 0
        %4604 = vmatpush1.bf16.msra.mxu0 %v4578
        %4605 = vmatprep.subr.bf16.mxu0 0
        %4606 = vmatpush1.bf16.msra.mxu0 %v4577
        %4607 = vmatprep.subr.bf16.mxu0 0
        %4608 = vmatpush1.bf16.msra.mxu0 %v4576
        %4609 = vmatprep.subr.bf16.mxu0 0
        %4610 = vmatpush1.bf16.msra.mxu0 %v4575
        %4611 = vmatprep.subr.bf16.mxu0 0
        %4612 = vmatpush2.bf16.msra.mxu0 0
        %4613 = vmatprep.subr.bf16.mxu0 0
        %4614 = vmatpush2.bf16.msra.mxu0 0
        %4615 = vmatprep.subr.bf16.mxu0 0
        %4616 = vmatpush2.bf16.msra.mxu0 0
        %4617 = vmatprep.subr.bf16.mxu0 0
        %4618 = vmatpush2.bf16.msra.mxu0 0
        %4619 = vmatprep.subr.bf16.mxu0 0
        %4620 = vmatpush2.bf16.msra.mxu0 0
        %4621 = vmatprep.subr.bf16.mxu0 0
        %4622 = vmatpush2.bf16.msra.mxu0 0
        %4623 = vmatprep.subr.bf16.mxu0 0
        %4624 = vmatpush2.bf16.msra.mxu0 0
        %4625 = vmatprep.subr.bf16.mxu0 0
        %4626 = vmatpush2.bf16.msra.mxu0 0
        %4627 = vmatprep.mubr.bf16.mxu0 0
        %4628 = vmatmul.mubr.bf16.gmra.mxu0 %v4584
        %v4629 = vpop.f32.mrf.mxu0
        %v4630 = vadd.f32 0.0, %v4629
        %v4631 = vpop.f32.mrf.mxu0
        %v4632 = vpop.f32.mrf.mxu0
        %v4633 = vadd.f32 0.0, %v4632
        %v4634 = vpop.f32.mrf.mxu0
        %4635 = vmatprep.mubr.bf16.mxu0 0
        %4636 = vmatmul.mubr.bf16.gmra.mxu0 %v4587
        %v4637 = vpop.f32.mrf.mxu0
        %v4638 = vadd.f32 0.0, %v4637
        %v4639 = vpop.f32.mrf.mxu0
        %v4640 = vpop.f32.mrf.mxu0
        %v4641 = vadd.f32 0.0, %v4640
        %v4642 = vpop.f32.mrf.mxu0
        %4643 = vmatprep.mubr.bf16.mxu0 0
        %4644 = vmatmul.mubr.bf16.gmra.mxu0 %v4590
        %v4645 = vpop.f32.mrf.mxu0
        %v4646 = vadd.f32 0.0, %v4645
        %v4647 = vpop.f32.mrf.mxu0
        %v4648 = vpop.f32.mrf.mxu0
        %v4649 = vadd.f32 0.0, %v4648
        %v4650 = vpop.f32.mrf.mxu0
        %4651 = vmatprep.mubr.bf16.mxu0 0
        %4652 = vmatmul.mubr.bf16.gmra.mxu0 %v4593
        %v4653 = vpop.f32.mrf.mxu0
        %v4654 = vadd.f32 0.0, %v4653
        %v4655 = vpop.f32.mrf.mxu0
        %v4656 = vpop.f32.mrf.mxu0
        %v4657 = vadd.f32 0.0, %v4656
        %v4658 = vpop.f32.mrf.mxu0
        %4659 = vdwg.mxu0
        %v4660 = vadd.f32 %v4530, %v4630
        %v4661 = vadd.f32 %v4531, %v4633
        %v4662 = vadd.f32 %v4532, %v4638
        %v4663 = vadd.f32 %v4533, %v4641
        %v4664 = vadd.f32 %v4534, %v4646
        %v4665 = vadd.f32 %v4535, %v4649
        %v4666 = vadd.f32 %v4536, %v4654
        %v4667 = vadd.f32 %v4537, %v4657
        %v4668 = vld [vmem:[%s972 + $0x1] sm:$0xff]
        %v4669 = vld [vmem:[%s972 + $0x11] sm:$0xff]
        %v4670 = vld [vmem:[%s972 + $0x21] sm:$0xff]
        %v4671 = vld [vmem:[%s972 + $0x31] sm:$0xff]
        %v4672 = vld [vmem:[%s972 + $0x41] sm:$0xff]
        %v4673 = vld [vmem:[%s972 + $0x51] sm:$0xff]
        %v4674 = vld [vmem:[%s972 + $0x61] sm:$0xff]
        %v4675 = vld [vmem:[%s972 + $0x71] sm:$0xff]
        %v4676 = vpack.c.bf16 %v4669, %v4668
        %v4677 = vpack.c.bf16 %v4671, %v4670
        %v4678 = vpack.c.bf16 %v4673, %v4672
        %v4679 = vpack.c.bf16 %v4675, %v4674
        %s4680 = scalar_lea.vmem %s1, 1088
        %v4681 = vld [vmem:[%s4680] sm:$0xf]
        %v4682 = vld [vmem:[%s4680 + $0x4] sm:$0xf]
        %v4683 = vld [vmem:[%s4680 + $0x8] sm:$0xf]
        %v4684 = vld [vmem:[%s4680 + $0xc] sm:$0xf]
        %v4685 = vld [vmem:[%s4680 + $0x10] sm:$0xf]
        %v4686 = vld [vmem:[%s4680 + $0x14] sm:$0xf]
        %v4687 = vld [vmem:[%s4680 + $0x18] sm:$0xf]
        %v4688 = vld [vmem:[%s4680 + $0x1c] sm:$0xf]
        %v4697 = vunpack.c.l.b16 %v4681
        %v4698 = vunpack.c.l.b16 %v4682
        %v4699 = vunpack.c.l.b16 %v4683
        %v4700 = vunpack.c.l.b16 %v4684
        %v4701 = vunpack.c.l.b16 %v4685
        %v4702 = vunpack.c.l.b16 %v4686
        %v4703 = vunpack.c.l.b16 %v4687
        %v4704 = vunpack.c.l.b16 %v4688
        %v4705 = vpack.c.b16 %v4698, %v4697
        %v4706 = vpack.c.b16 %v4700, %v4699
        %v4707 = vpack.c.b16 %v4702, %v4701
        %v4708 = vpack.c.b16 %v4704, %v4703
        %v4714 = vsel %vm170, %v4676, 0
        %v4717 = vsel %vm170, %v4677, 0
        %v4720 = vsel %vm170, %v4678, 0
        %v4723 = vsel %vm170, %v4679, 0
        %4725 = vmatprep.subr.bf16.mxu0 0
        %4726 = vmatpush1.bf16.msra.mxu0 0
        %4727 = vmatprep.subr.bf16.mxu0 0
        %4728 = vmatpush1.bf16.msra.mxu0 0
        %4729 = vmatprep.subr.bf16.mxu0 0
        %4730 = vmatpush1.bf16.msra.mxu0 0
        %4731 = vmatprep.subr.bf16.mxu0 0
        %4732 = vmatpush1.bf16.msra.mxu0 0
        %4733 = vmatprep.subr.bf16.mxu0 0
        %4734 = vmatpush1.bf16.msra.mxu0 %v4708
        %4735 = vmatprep.subr.bf16.mxu0 0
        %4736 = vmatpush1.bf16.msra.mxu0 %v4707
        %4737 = vmatprep.subr.bf16.mxu0 0
        %4738 = vmatpush1.bf16.msra.mxu0 %v4706
        %4739 = vmatprep.subr.bf16.mxu0 0
        %4740 = vmatpush1.bf16.msra.mxu0 %v4705
        %4741 = vmatprep.subr.bf16.mxu0 0
        %4742 = vmatpush2.bf16.msra.mxu0 0
        %4743 = vmatprep.subr.bf16.mxu0 0
        %4744 = vmatpush2.bf16.msra.mxu0 0
        %4745 = vmatprep.subr.bf16.mxu0 0
        %4746 = vmatpush2.bf16.msra.mxu0 0
        %4747 = vmatprep.subr.bf16.mxu0 0
        %4748 = vmatpush2.bf16.msra.mxu0 0
        %4749 = vmatprep.subr.bf16.mxu0 0
        %4750 = vmatpush2.bf16.msra.mxu0 0
        %4751 = vmatprep.subr.bf16.mxu0 0
        %4752 = vmatpush2.bf16.msra.mxu0 0
        %4753 = vmatprep.subr.bf16.mxu0 0
        %4754 = vmatpush2.bf16.msra.mxu0 0
        %4755 = vmatprep.subr.bf16.mxu0 0
        %4756 = vmatpush2.bf16.msra.mxu0 0
        %4757 = vmatprep.mubr.bf16.mxu0 0
        %4758 = vmatmul.mubr.bf16.gmra.mxu0 %v4714
        %v4759 = vpop.f32.mrf.mxu0
        %v4760 = vadd.f32 0.0, %v4759
        %v4761 = vpop.f32.mrf.mxu0
        %v4762 = vpop.f32.mrf.mxu0
        %v4763 = vadd.f32 0.0, %v4762
        %v4764 = vpop.f32.mrf.mxu0
        %4765 = vmatprep.mubr.bf16.mxu0 0
        %4766 = vmatmul.mubr.bf16.gmra.mxu0 %v4717
        %v4767 = vpop.f32.mrf.mxu0
        %v4768 = vadd.f32 0.0, %v4767
        %v4769 = vpop.f32.mrf.mxu0
        %v4770 = vpop.f32.mrf.mxu0
        %v4771 = vadd.f32 0.0, %v4770
        %v4772 = vpop.f32.mrf.mxu0
        %4773 = vmatprep.mubr.bf16.mxu0 0
        %4774 = vmatmul.mubr.bf16.gmra.mxu0 %v4720
        %v4775 = vpop.f32.mrf.mxu0
        %v4776 = vadd.f32 0.0, %v4775
        %v4777 = vpop.f32.mrf.mxu0
        %v4778 = vpop.f32.mrf.mxu0
        %v4779 = vadd.f32 0.0, %v4778
        %v4780 = vpop.f32.mrf.mxu0
        %4781 = vmatprep.mubr.bf16.mxu0 0
        %4782 = vmatmul.mubr.bf16.gmra.mxu0 %v4723
        %v4783 = vpop.f32.mrf.mxu0
        %v4784 = vadd.f32 0.0, %v4783
        %v4785 = vpop.f32.mrf.mxu0
        %v4786 = vpop.f32.mrf.mxu0
        %v4787 = vadd.f32 0.0, %v4786
        %v4788 = vpop.f32.mrf.mxu0
        %4789 = vdwg.mxu0
        %v4790 = vadd.f32 %v4660, %v4760
        %v4791 = vadd.f32 %v4661, %v4763
        %v4792 = vadd.f32 %v4662, %v4768
        %v4793 = vadd.f32 %v4663, %v4771
        %v4794 = vadd.f32 %v4664, %v4776
        %v4795 = vadd.f32 %v4665, %v4779
        %v4796 = vadd.f32 %v4666, %v4784
        %v4797 = vadd.f32 %v4667, %v4787
        %v4798 = vld [vmem:[%s972 + $0x2] sm:$0xff]
        %v4799 = vld [vmem:[%s972 + $0x12] sm:$0xff]
        %v4800 = vld [vmem:[%s972 + $0x22] sm:$0xff]
        %v4801 = vld [vmem:[%s972 + $0x32] sm:$0xff]
        %v4802 = vld [vmem:[%s972 + $0x42] sm:$0xff]
        %v4803 = vld [vmem:[%s972 + $0x52] sm:$0xff]
        %v4804 = vld [vmem:[%s972 + $0x62] sm:$0xff]
        %v4805 = vld [vmem:[%s972 + $0x72] sm:$0xff]
        %v4806 = vpack.c.bf16 %v4799, %v4798
        %v4807 = vpack.c.bf16 %v4801, %v4800
        %v4808 = vpack.c.bf16 %v4803, %v4802
        %v4809 = vpack.c.bf16 %v4805, %v4804
        %s4810 = scalar_lea.vmem %s1, 1120
        %v4811 = vld [vmem:[%s4810] sm:$0xf]
        %v4812 = vld [vmem:[%s4810 + $0x4] sm:$0xf]
        %v4813 = vld [vmem:[%s4810 + $0x8] sm:$0xf]
        %v4814 = vld [vmem:[%s4810 + $0xc] sm:$0xf]
        %v4815 = vld [vmem:[%s4810 + $0x10] sm:$0xf]
        %v4816 = vld [vmem:[%s4810 + $0x14] sm:$0xf]
        %v4817 = vld [vmem:[%s4810 + $0x18] sm:$0xf]
        %v4818 = vld [vmem:[%s4810 + $0x1c] sm:$0xf]
        %v4827 = vunpack.c.l.b16 %v4811
        %v4828 = vunpack.c.l.b16 %v4812
        %v4829 = vunpack.c.l.b16 %v4813
        %v4830 = vunpack.c.l.b16 %v4814
        %v4831 = vunpack.c.l.b16 %v4815
        %v4832 = vunpack.c.l.b16 %v4816
        %v4833 = vunpack.c.l.b16 %v4817
        %v4834 = vunpack.c.l.b16 %v4818
        %v4835 = vpack.c.b16 %v4828, %v4827
        %v4836 = vpack.c.b16 %v4830, %v4829
        %v4837 = vpack.c.b16 %v4832, %v4831
        %v4838 = vpack.c.b16 %v4834, %v4833
        %v4844 = vsel %vm170, %v4806, 0
        %v4847 = vsel %vm170, %v4807, 0
        %v4850 = vsel %vm170, %v4808, 0
        %v4853 = vsel %vm170, %v4809, 0
        %4855 = vmatprep.subr.bf16.mxu0 0
        %4856 = vmatpush1.bf16.msra.mxu0 0
        %4857 = vmatprep.subr.bf16.mxu0 0
        %4858 = vmatpush1.bf16.msra.mxu0 0
        %4859 = vmatprep.subr.bf16.mxu0 0
        %4860 = vmatpush1.bf16.msra.mxu0 0
        %4861 = vmatprep.subr.bf16.mxu0 0
        %4862 = vmatpush1.bf16.msra.mxu0 0
        %4863 = vmatprep.subr.bf16.mxu0 0
        %4864 = vmatpush1.bf16.msra.mxu0 %v4838
        %4865 = vmatprep.subr.bf16.mxu0 0
        %4866 = vmatpush1.bf16.msra.mxu0 %v4837
        %4867 = vmatprep.subr.bf16.mxu0 0
        %4868 = vmatpush1.bf16.msra.mxu0 %v4836
        %4869 = vmatprep.subr.bf16.mxu0 0
        %4870 = vmatpush1.bf16.msra.mxu0 %v4835
        %4871 = vmatprep.subr.bf16.mxu0 0
        %4872 = vmatpush2.bf16.msra.mxu0 0
        %4873 = vmatprep.subr.bf16.mxu0 0
        %4874 = vmatpush2.bf16.msra.mxu0 0
        %4875 = vmatprep.subr.bf16.mxu0 0
        %4876 = vmatpush2.bf16.msra.mxu0 0
        %4877 = vmatprep.subr.bf16.mxu0 0
        %4878 = vmatpush2.bf16.msra.mxu0 0
        %4879 = vmatprep.subr.bf16.mxu0 0
        %4880 = vmatpush2.bf16.msra.mxu0 0
        %4881 = vmatprep.subr.bf16.mxu0 0
        %4882 = vmatpush2.bf16.msra.mxu0 0
        %4883 = vmatprep.subr.bf16.mxu0 0
        %4884 = vmatpush2.bf16.msra.mxu0 0
        %4885 = vmatprep.subr.bf16.mxu0 0
        %4886 = vmatpush2.bf16.msra.mxu0 0
        %4887 = vmatprep.mubr.bf16.mxu0 0
        %4888 = vmatmul.mubr.bf16.gmra.mxu0 %v4844
        %v4889 = vpop.f32.mrf.mxu0
        %v4890 = vadd.f32 0.0, %v4889
        %v4891 = vpop.f32.mrf.mxu0
        %v4892 = vpop.f32.mrf.mxu0
        %v4893 = vadd.f32 0.0, %v4892
        %v4894 = vpop.f32.mrf.mxu0
        %4895 = vmatprep.mubr.bf16.mxu0 0
        %4896 = vmatmul.mubr.bf16.gmra.mxu0 %v4847
        %v4897 = vpop.f32.mrf.mxu0
        %v4898 = vadd.f32 0.0, %v4897
        %v4899 = vpop.f32.mrf.mxu0
        %v4900 = vpop.f32.mrf.mxu0
        %v4901 = vadd.f32 0.0, %v4900
        %v4902 = vpop.f32.mrf.mxu0
        %4903 = vmatprep.mubr.bf16.mxu0 0
        %4904 = vmatmul.mubr.bf16.gmra.mxu0 %v4850
        %v4905 = vpop.f32.mrf.mxu0
        %v4906 = vadd.f32 0.0, %v4905
        %v4907 = vpop.f32.mrf.mxu0
        %v4908 = vpop.f32.mrf.mxu0
        %v4909 = vadd.f32 0.0, %v4908
        %v4910 = vpop.f32.mrf.mxu0
        %4911 = vmatprep.mubr.bf16.mxu0 0
        %4912 = vmatmul.mubr.bf16.gmra.mxu0 %v4853
        %v4913 = vpop.f32.mrf.mxu0
        %v4914 = vadd.f32 0.0, %v4913
        %v4915 = vpop.f32.mrf.mxu0
        %v4916 = vpop.f32.mrf.mxu0
        %v4917 = vadd.f32 0.0, %v4916
        %v4918 = vpop.f32.mrf.mxu0
        %4919 = vdwg.mxu0
        %v4920 = vadd.f32 %v4790, %v4890
        %v4921 = vadd.f32 %v4791, %v4893
        %v4922 = vadd.f32 %v4792, %v4898
        %v4923 = vadd.f32 %v4793, %v4901
        %v4924 = vadd.f32 %v4794, %v4906
        %v4925 = vadd.f32 %v4795, %v4909
        %v4926 = vadd.f32 %v4796, %v4914
        %v4927 = vadd.f32 %v4797, %v4917
        %s4928 = scalar_lea.vmem %s2, 3
        %v4929 = vld [vmem:[%s4928] sm:$0x1]
        %v4931 = vlaneseq
        %v4932 = vshrl.u32 %v4931, 7
        %v4933 = vsub.s32 0, %v4932
        %v4934 = vrot.slane %v4929, %v4933
        %v4936 = vadd.f32 %v4920, %v4934
        %v4937 = vadd.f32 %v4921, %v4934
        %v4938 = vadd.f32 %v4922, %v4934
        %v4939 = vadd.f32 %v4923, %v4934
        %v4940 = vadd.f32 %v4924, %v4934
        %v4941 = vadd.f32 %v4925, %v4934
        %v4942 = vadd.f32 %v4926, %v4934
        %v4943 = vadd.f32 %v4927, %v4934
        %v4944 = vadd.f32 %v4936, %v2572
        %v4945 = vadd.f32 %v4937, %v2573
        %v4946 = vadd.f32 %v4938, %v2574
        %v4947 = vadd.f32 %v4939, %v2575
        %v4948 = vadd.f32 %v4940, %v2576
        %v4949 = vadd.f32 %v4941, %v2577
        %v4950 = vadd.f32 %v4942, %v2578
        %v4951 = vadd.f32 %v4943, %v2579
        %v4952 = vmax.f32 %v4944, 0.0
        %v4953 = vmax.f32 %v4945, 0.0
        %v4954 = vmax.f32 %v4946, 0.0
        %v4955 = vmax.f32 %v4947, 0.0
        %v4956 = vmax.f32 %v4948, 0.0
        %v4957 = vmax.f32 %v4949, 0.0
        %v4958 = vmax.f32 %v4950, 0.0
        %v4959 = vmax.f32 %v4951, 0.0
        %4960 = vst.msk [vmem:[%s163] sm:$0xff] %vm170, %v4952
        %4961 = vst.msk [vmem:[%s163 + $0x8] sm:$0xff] %vm170, %v4953
        %4962 = vst.msk [vmem:[%s163 + $0x10] sm:$0xff] %vm170, %v4954
        %4963 = vst.msk [vmem:[%s163 + $0x18] sm:$0xff] %vm170, %v4955
        %4964 = vst.msk [vmem:[%s163 + $0x20] sm:$0xff] %vm170, %v4956
        %4965 = vst.msk [vmem:[%s163 + $0x28] sm:$0xff] %vm170, %v4957
        %4966 = vst.msk [vmem:[%s163 + $0x30] sm:$0xff] %vm170, %v4958
        %4967 = vst.msk [vmem:[%s163 + $0x38] sm:$0xff] %vm170, %v4959
        %s4968 = sand.u32 %s93, 1
        %s4969 = scalar_lea.sflag [#allocation4], %s4968
        %s4970 = sand.u32 %s93, 1
        %s4971 = smul.addr %s4970, 64
        %s4972 = scalar_lea.vmem [#allocation3], %s4971
        // Predicated region
        $region33: #{client_model_forward.3} parent=31 // pred_check
          %p4973 = pneg %p103
        $region34: #{client_model_forward.3} parent=31 // pred_check_branch
          %4975 = sbr.rel (%p4973) target = $region36
        $region35: #{client_model_forward.3} parent=31 // pred_region
          %s4977 = ssub.s32 1024, 1024
          %4978 = vsyncadd %s4969, %s4977
          %s4979 = smul.addr %s17, 8
          %s4980 = smul.addr %s4979, 128
          %s4981 = scalar_lea.hbm %s3, %s4980
          %s4982 = sshll.u32 %s4972, 4
          %s4983 = int_to_ptr.vmem [resolvable:$true] %s4982
          %4988 = dma.vmem_to_hbm [thread:$0]  %s4983, 1024, %s4981, %s4969, 128, 128, 8
        $region36: #{client_model_forward.3} parent=31 // pred_fallthru
          _
      $region32: #{client_model_forward.3} parent=5 // pred_fallthru
        _
      %p4989 = scmp.le.s32.totalorder 2, %s12
      // Predicated region
      $region37: #{client_model_forward.3} parent=5 // pred_check
        %p4990 = pneg %p4989
      $region38: #{client_model_forward.3} parent=5 // pred_check_branch
        %4992 = sbr.rel (%p4990) target = $region40
      $region39: #{client_model_forward.3} parent=5 // pred_region
        %s4993 = ssub.s32 %s12, 2
        // Predicated region
        $region41: #{client_model_forward.3} parent=39 // pred_check
          %p4994 = pneg %p109
        $region42: #{client_model_forward.3} parent=39 // pred_check_branch
          %4996 = sbr.rel (%p4994) target = $region44
        $region43: #{client_model_forward.3} parent=39 // pred_region
          %s4997 = sand.u32 %s94, 1
          %s4998 = scalar_lea.sflag [#allocation4], %s4997
          %s4999 = sand.u32 %s94, 1
          %s5000 = smul.addr %s4999, 64
          %s5001 = scalar_lea.vmem [#allocation3], %s5000
          %5002 = dma.done %s4998, 1024
        $region44: #{client_model_forward.3} parent=39 // pred_fallthru
          _
      $region40: #{client_model_forward.3} parent=5 // pred_fallthru
        _
    $region6: #{client_model_forward.3} parent=1 // loop_footer
      %s16 = sadd.s32 1, %s12
    $region7: #{client_model_forward.3} parent=1 // loop_footer_branch
      %11 = sbr.rel target = $region3
    $region8: #{client_model_forward.3} parent=1 // loop_exit
      _
    %5003 = vsyncpa [#allocation4], 1
    %s5004 = scalar_lea.sflag [#allocation4], 1
    %5005 = vsyncpa %s5004, 1

</llo_original>
